<compile_context>
chip_gen: v6e
topology: v6e:2x2x1
jax: 0.10.0
libtpu: 0.0.40
codegen_flags: <defaults>
</compile_context>

<pallas_src>
import jax
import jax.numpy as jnp
from jax.experimental import pallas as pl
from jax.experimental.pallas import tpu as pltpu

IN_FEATS = 119 * 50        # 5950
H1, H2, H3 = 512, 128, 32
N_CLASS = 2
OUT_PAD = 128              # lane-dense output slab width

TK = 3072                  # K tile for streaming w1 (multiple of 128; 2 steps)


def _round_up(x, m):
    return (x + m - 1) // m * m


K_PAD = _round_up(IN_FEATS, TK)   # 5950 -> 6144


def _mlp_kernel(x_ref, w1_ref, w_tail_ref, b_eff_ref, o_ref, acc_ref):
    k = pl.program_id(1)

    @pl.when(k == 0)
    def _():
        acc_ref[...] = jnp.zeros_like(acc_ref)

    # fc1: stream over K.  bf16 x bf16 on the MXU, f32 accumulation.
    acc_ref[...] += jnp.dot(x_ref[...], w1_ref[...],
                            preferred_element_type=jnp.float32)

    @pl.when(k == pl.num_programs(1) - 1)
    def _():
        # fc2/fc3/fc4 (activation-free) precomposed into one f32 matmul.
        o = jnp.dot(acc_ref[...], w_tail_ref[...],
                    preferred_element_type=jnp.float32) + b_eff_ref[...]
        o_ref[...] = o.astype(o_ref.dtype)


def prepare_params(params):
    """One-time parameter preparation (do NOT call per forward pass).

    Input: dict with w1..w4 in [in, out] layout, b1..b4 in [1, out], float32.
    Output: dict with
      * w1_p   : (K_PAD, 512) bfloat16, zero-padded along K,
      * w_tail : (512, 128)  float32   = w2 @ w3 @ w4, zero-padded to 128 cols,
      * b_eff  : (1, 128)    float32   = b1@w2@w3@w4 + b2@w3@w4 + b3@w4 + b4.
    """
    w1_p = jnp.zeros((K_PAD, H1), jnp.bfloat16)
    w1_p = w1_p.at[:IN_FEATS, :].set(params["w1"].astype(jnp.bfloat16))

    # Fold the activation-free tail (fc2, fc3, fc4) into one affine map.
    w234 = params["w2"] @ params["w3"] @ params["w4"]          # (512, 2)
    b_tail = (params["b2"] @ params["w3"] @ params["w4"]
              + params["b3"] @ params["w4"]
              + params["b4"])                                   # (1, 2)
    b_eff_narrow = params["b1"] @ w234 + b_tail                 # (1, 2)

    w_tail = jnp.zeros((H1, OUT_PAD), jnp.float32).at[:, :N_CLASS].set(w234)
    b_eff = jnp.zeros((1, OUT_PAD), jnp.float32).at[:, :N_CLASS].set(b_eff_narrow)

    return {"w1_p": w1_p, "w_tail": w_tail, "b_eff": b_eff}


def _pick_tb(b_pad):
    if b_pad <= 256:
        return b_pad
    # Choose the tile size that minimizes dead padded rows; prefer larger tiles.
    best_tb, best_pad = 256, _round_up(b_pad, 256) - b_pad
    for tb in (128, 64):
        pad = _round_up(b_pad, tb) - b_pad
        if pad < best_pad:
            best_tb, best_pad = tb, pad
    return best_tb


def mlp_forward(x, prepped):
    """x: [B, 119, 50] float32; prepped: output of prepare_params()."""
    B = x.shape[0]
    B_pad = _round_up(B, 8)
    TB = _pick_tb(B_pad)
    B_pad = _round_up(B_pad, TB)

    # Fused reshape + pad + bf16 cast for x (one XLA op, no extra pass).
    x2d = x.reshape(B, IN_FEATS)
    x_p = jnp.zeros((B_pad, K_PAD), jnp.bfloat16)
    x_p = x_p.at[:B, :IN_FEATS].set(x2d.astype(jnp.bfloat16))

    grid = (B_pad // TB, K_PAD // TK)

    out_padded = pl.pallas_call(
        _mlp_kernel,
        out_shape=jax.ShapeDtypeStruct((B_pad, OUT_PAD), jnp.float32),
        grid=grid,
        in_specs=[
            pl.BlockSpec((TB, TK), lambda bi, ki: (bi, ki)),        # x tile (bf16)
            pl.BlockSpec((TK, H1), lambda bi, ki: (ki, 0)),         # w1 tile (bf16)
            pl.BlockSpec((H1, OUT_PAD), lambda bi, ki: (0, 0)),     # folded tail W
            pl.BlockSpec((1, OUT_PAD),  lambda bi, ki: (0, 0)),     # folded bias
        ],
        out_specs=pl.BlockSpec((TB, OUT_PAD), lambda bi, ki: (bi, 0)),
        scratch_shapes=[pltpu.VMEM((TB, H1), jnp.float32)],         # fc1 accumulator
        compiler_params=pltpu.CompilerParams(
            dimension_semantics=("parallel", "arbitrary"),
            vmem_limit_bytes=32 << 20,
        ),
    )(x_p, prepped["w1_p"], prepped["w_tail"], prepped["b_eff"])

    return out_padded[:B, :N_CLASS]


def init_params(key):
    """nn.Linear-style init (uniform +-1/sqrt(fan_in)).
    Weights stored transposed to [in, out]; biases shaped [1, out]."""
    dims = [(IN_FEATS, H1), (H1, H2), (H2, H3), (H3, N_CLASS)]
    params = {}
    for idx, (fan_in, fan_out) in enumerate(dims, start=1):
        key, kw, kb = jax.random.split(key, 3)
        bound = 1.0 / jnp.sqrt(jnp.float32(fan_in))
        params[f"w{idx}"] = jax.random.uniform(
            kw, (fan_in, fan_out), jnp.float32, -bound, bound)
        params[f"b{idx}"] = jax.random.uniform(
            kb, (1, fan_out), jnp.float32, -bound, bound)
    return params


if __name__ == "__main__":
    key = jax.random.PRNGKey(0)
    kp, kx = jax.random.split(key)
    params = init_params(kp)
    prepped = prepare_params(params)        # one-time weight prep, off hot path

    batch_size = 8
    x = jax.random.normal(kx, (batch_size, 119, 50), jnp.float32)

    out = mlp_forward(x, prepped)
    out = jax.block_until_ready(out)

    # Reference in plain JAX (same precision path: bf16 fc1 with f32 accum,
    # f32 for fc2..fc4).  The original module has NO activations, so the
    # forward pass is a pure chain of four Linear layers.
    x2d = x.reshape(batch_size, IN_FEATS)
    ref = jnp.dot(x2d.astype(jnp.bfloat16), params["w1"].astype(jnp.bfloat16),
                  preferred_element_type=jnp.float32) + params["b1"]
    for i in (2, 3, 4):
        ref = jnp.dot(ref, params[f"w{i}"],
                      preferred_element_type=jnp.float32) + params[f"b{i}"]

    assert out.shape == (batch_size, N_CLASS)
    assert jnp.allclose(out, ref, atol=2e-2, rtol=2e-2)

    print("KERNEL_OK")
</pallas_src>

<mosaic_0001>
module attributes {stable_mosaic.version = 11 : i64} {
  func.func @_mlp_kernel(%arg0: i32, %arg1: i32, %arg2: memref<8x3072xbf16, #tpu.memory_space<vmem>>, %arg3: memref<3072x512xbf16, #tpu.memory_space<vmem>>, %arg4: memref<512x128xf32, #tpu.memory_space<vmem>>, %arg5: memref<1x128xf32, #tpu.memory_space<vmem>>, %arg6: memref<8x128xf32, #tpu.memory_space<vmem>>, %arg7: memref<8x512xf32, #tpu.memory_space<vmem>>) attributes {dimension_semantics = [#tpu.dimension_semantics<parallel>, #tpu.dimension_semantics<arbitrary>], iteration_bounds = array<i64: 1, 2>, scalar_prefetch = 0 : i64, scratch_operands = 1 : i64, tpu.core_type = #tpu.core_type<tc>, window_params = [{transform_indices = @transform_0, window_bounds = array<i64: 8, 3072>}, {transform_indices = @transform_1, window_bounds = array<i64: 3072, 512>}, {pipeline_mode = #tpu.pipeline_mode<synchronous>, transform_indices = @transform_2, window_bounds = array<i64: 512, 128>}, {pipeline_mode = #tpu.pipeline_mode<synchronous>, transform_indices = @transform_3, window_bounds = array<i64: 1, 128>}, {transform_indices = @transform_4, window_bounds = array<i64: 8, 128>}]} {
    %c0_i32 = arith.constant 0 : i32
    %0 = arith.cmpi eq, %arg1, %c0_i32 : i32
    %1 = arith.extui %0 : i1 to i32
    %c0_i32_0 = arith.constant 0 : i32
    %2 = arith.cmpi ne, %1, %c0_i32_0 : i32
    scf.if %2 {
      %cst_9 = arith.constant 0.000000e+00 : f32
      %12 = vector.broadcast %cst_9 : f32 to vector<8x512xf32>
      %c0_10 = arith.constant 0 : index
      %c0_11 = arith.constant 0 : index
      %13 = vector.load %arg7[%c0_10, %c0_11] : memref<8x512xf32, #tpu.memory_space<vmem>>, vector<8x512xf32>
      tpu.vector_store %arg7[%c0_10, %c0_11], %12 {strides = array<i32>} : memref<8x512xf32, #tpu.memory_space<vmem>>, vector<8x512xf32>,
    } else {
    }
    %c0 = arith.constant 0 : index
    %c0_1 = arith.constant 0 : index
    %3 = vector.load %arg7[%c0, %c0_1] : memref<8x512xf32, #tpu.memory_space<vmem>>, vector<8x512xf32>
    %c0_2 = arith.constant 0 : index
    %c0_3 = arith.constant 0 : index
    %4 = vector.load %arg2[%c0_2, %c0_3] : memref<8x3072xbf16, #tpu.memory_space<vmem>>, vector<8x3072xbf16>
    %c0_4 = arith.constant 0 : index
    %c0_5 = arith.constant 0 : index
    %5 = vector.load %arg3[%c0_4, %c0_5] : memref<3072x512xbf16, #tpu.memory_space<vmem>>, vector<3072x512xbf16>
    %cst = arith.constant dense<0.000000e+00> : vector<8x512xf32>
    %6 = tpu.matmul %4, %5, %cst {dimension_numbers = #tpu.dot_dimension_numbers<[1], [0], [0], [1], [0, 0, 1, 1], [], []>} : vector<8x3072xbf16>, vector<3072x512xbf16>, vector<8x512xf32> -> vector<8x512xf32>
    %7 = arith.addf %3, %6 : vector<8x512xf32>
    %c0_6 = arith.constant 0 : index
    %c0_7 = arith.constant 0 : index
    %8 = vector.load %arg7[%c0_6, %c0_7] : memref<8x512xf32, #tpu.memory_space<vmem>>, vector<8x512xf32>
    tpu.vector_store %arg7[%c0_6, %c0_7], %7 {strides = array<i32>} : memref<8x512xf32, #tpu.memory_space<vmem>>, vector<8x512xf32>,
    %c1_i32 = arith.constant 1 : i32
    %9 = arith.cmpi eq, %arg1, %c1_i32 : i32
    %10 = arith.extui %9 : i1 to i32
    %c0_i32_8 = arith.constant 0 : i32
    %11 = arith.cmpi ne, %10, %c0_i32_8 : i32
    scf.if %11 {
      %c0_9 = arith.constant 0 : index
      %c0_10 = arith.constant 0 : index
      %12 = vector.load %arg7[%c0_9, %c0_10] : memref<8x512xf32, #tpu.memory_space<vmem>>, vector<8x512xf32>
      %c0_11 = arith.constant 0 : index
      %c0_12 = arith.constant 0 : index
      %13 = vector.load %arg4[%c0_11, %c0_12] : memref<512x128xf32, #tpu.memory_space<vmem>>, vector<512x128xf32>
      %cst_13 = arith.constant dense<0.000000e+00> : vector<8x128xf32>
      %14 = tpu.matmul %12, %13, %cst_13 {dimension_numbers = #tpu.dot_dimension_numbers<[1], [0], [0], [1], [0, 0, 1, 1], [], []>} : vector<8x512xf32>, vector<512x128xf32>, vector<8x128xf32> -> vector<8x128xf32>
      %c0_14 = arith.constant 0 : index
      %c0_15 = arith.constant 0 : index
      %15 = vector.load %arg5[%c0_14, %c0_15] : memref<1x128xf32, #tpu.memory_space<vmem>>, vector<1x128xf32>
      %16 = vector.broadcast %15 : vector<1x128xf32> to vector<8x128xf32>
      %17 = arith.addf %14, %16 : vector<8x128xf32>
      %c0_16 = arith.constant 0 : index
      %c0_17 = arith.constant 0 : index
      %18 = vector.load %arg6[%c0_16, %c0_17] : memref<8x128xf32, #tpu.memory_space<vmem>>, vector<8x128xf32>
      tpu.vector_store %arg6[%c0_16, %c0_17], %17 {strides = array<i32>} : memref<8x128xf32, #tpu.memory_space<vmem>>, vector<8x128xf32>,
    } else {
    }
    return
  }
  func.func @transform_0(%arg0: i32, %arg1: i32) -> (i32, i32) {
    %c0_i32 = arith.constant 0 : i32
    return %arg0, %arg1 : i32, i32
  }
  func.func @transform_1(%arg0: i32, %arg1: i32) -> (i32, i32) {
    %c0_i32 = arith.constant 0 : i32
    %c0_i32_0 = arith.constant 0 : i32
    return %arg1, %c0_i32 : i32, i32
  }
  func.func @transform_2(%arg0: i32, %arg1: i32) -> (i32, i32) {
    %c0_i32 = arith.constant 0 : i32
    %c0_i32_0 = arith.constant 0 : i32
    %c0_i32_1 = arith.constant 0 : i32
    return %c0_i32, %c0_i32_0 : i32, i32
  }
  func.func @transform_3(%arg0: i32, %arg1: i32) -> (i32, i32) {
    %c0_i32 = arith.constant 0 : i32
    %c0_i32_0 = arith.constant 0 : i32
    %c0_i32_1 = arith.constant 0 : i32
    return %c0_i32, %c0_i32_0 : i32, i32
  }
  func.func @transform_4(%arg0: i32, %arg1: i32) -> (i32, i32) {
    %c0_i32 = arith.constant 0 : i32
    %c0_i32_0 = arith.constant 0 : i32
    return %arg0, %c0_i32 : i32, i32
  }
}

</mosaic_0001>

<llo_original>
// kernel: tpu_custom_call.1
$region0: #{tpu_custom_call.1}
  #allocation0 [shape = 'u32[]', space=smem, size = 0x4, offset = 0x4, fixed_abs, tag = 'smem constant byte address 0x4 - core index']
  #allocation1 [shape = 'u32[144,128]{1,0:T(1,128)}', space=vmem, size = 0x12000, scoped, tag = 'internal scratch']
  #allocation2 [shape = 'f32[8,512]{1,0:T(8,128)}', space=vmem, size = 0x4000, scoped, tag = 'scratch operand']
  %s0 = inlined_call_operand.hbm [shape: bf16[8,6144], index: 0, kind: input, shape index: {}]
  %s1 = inlined_call_operand.hbm [shape: bf16[6144,512], index: 1, kind: input, shape index: {}]
  %s2 = inlined_call_operand.hbm [shape: f32[512,128], index: 2, kind: input, shape index: {}]
  %s3 = inlined_call_operand.hbm [shape: f32[1,128], index: 3, kind: input, shape index: {}]
  %s4 = inlined_call_operand.hbm [shape: f32[8,128], index: 4, kind: output, shape index: {}]
  %s5 = sld [smem:[#allocation0]]
  $region73: #{tpu_custom_call.1} parent=0
    _
  %s7 = ssub.s32 1, %s5
  %s8 = scalar_select 0, %s7, %s5
  $region1: #{tpu_custom_call.1} parent=0
    #allocation3 [shape = 'u8[98304]{0}', space=vmem, size = 0x18000, scoped, tag = 'input window, operand 0']
    #allocation4 [shape = 's32[2]{0}', space=sflag, size = 0x8, scoped, tag = 'scoped memory for tpu_custom_call.1']
    #allocation5 [shape = 's32[2]{0}', space=sflag, size = 0x8, scoped, tag = 'scoped memory for tpu_custom_call.1']
    #allocation6 [shape = 'u8[6291456]{0}', space=vmem, size = 0x600000, scoped, tag = 'input window, operand 1']
    #allocation7 [shape = 's32[2]{0}', space=sflag, size = 0x8, scoped, tag = 'scoped memory for tpu_custom_call.1']
    #allocation8 [shape = 'u8[262144]{0}', space=vmem, size = 0x40000, scoped, tag = 'input window, operand 2, single buffered']
    #allocation9 [shape = 'u8[512]{0}', space=vmem, size = 0x400, scoped, tag = 'input window, operand 3, single buffered']
    #allocation10 [shape = 's32[1]{0}', space=sflag, size = 0x4, scoped, tag = 'scoped memory for tpu_custom_call.1']
    #allocation11 [shape = 'u8[4096]{0}', space=vmem, size = 0x1000, scoped, tag = 'output window, operand 0, single buffered']
    %9 = vsyncpa [#allocation4], 0
    %s10 = scalar_lea.sflag [#allocation4], 1
    %11 = vsyncpa %s10, 0
    %12 = vsyncpa [#allocation7], 0
    %s13 = scalar_lea.sflag [#allocation7], 1
    %14 = vsyncpa %s13, 0
    %15 = vsyncpa [#allocation10], 0
    %16 = vsyncpa [#allocation5], 0
    loop: start=0, step=1, limit=4
    $region2: #{tpu_custom_call.1} parent=1 // loop_pre_header
      _
    $region3: #{tpu_custom_call.1} parent=1 // loop_header
      %s18 = sphi 0, %s22
      %p19 = scmp.ge.s32.totalorder %s18, 4
      %s25 = sphi 0, %s37
      %s26 = sphi 0, %s33
      %s27 = sphi 0, %s25
      %s28 = sphi 0, %s26
      %s29 = sphi 0, %s27
      %s30 = sphi 0, %s28
      %s42 = sphi 0, %s44
      %s45 = sphi 0, %s42
      %s46 = sphi 0, %s45
      %s62 = sphi 0, %s46
      %s68 = sphi 0, %s70
      %s71 = sphi 0, %s68
      %s72 = sphi 0, %s71
      %s88 = sphi 0, %s72
      %s92 = sphi 0, %s92
      %s94 = sphi 0, %s92
      %s95 = sphi 0, %s94
      %s109 = sphi 0, %s95
      %s113 = sphi 0, %s113
      %s115 = sphi 0, %s113
      %s116 = sphi 0, %s115
      %s130 = sphi 0, %s116
      %s136 = sphi 0, %s138
      %s139 = sphi 0, %s136
      %s140 = sphi 0, %s139
      %s156 = sphi 0, %s140
    $region4: #{tpu_custom_call.1} parent=1 // loop_header_branch
      %21 = sbr.rel (%p19) target = $region8
    $region5: #{tpu_custom_call.1} parent=1 // loop_body
      %s23 = ssub.s32 %s18, 1
      %s24 = ssub.s32 %s18, 2
      %s31 = sadd.s32 1, %s26
      %p32 = scmp.ge.s32.totalorder %s31, 2
      %s33 = scalar_select %p32, 0, %s31
      %s34 = sadd.s32 1, %s25
      %s35 = scalar_select %p32, %s34, %s25
      %p36 = scmp.ge.s32.totalorder %s35, 1
      %s37 = scalar_select %p36, 0, %s35
      %s38 = ssub.s32 %s25, %s37
      %s39 = ssub.s32 %s26, %s33
      %s40 = sor.u32 %s38, %s39
      %p41 = scmp.eq.s32.totalorder %s40, 0
      %s43 = sadd.s32 %s42, 1
      %s44 = scalar_select %p41, %s42, %s43
      %p47 = pneg %p41
      %p48 = scmp.eq.s32.totalorder %s18, 1
      %p49 = por %p47, %p48
      %p50 = scmp.ne.s32.totalorder %s42, %s45
      %p51 = scmp.eq.s32.totalorder %s18, 0
      %p52 = por %p50, %p51
      %p53 = scmp.ne.s32.totalorder %s42, %s45
      %p54 = scmp.eq.s32.totalorder %s23, 1
      %p55 = por %p53, %p54
      %p56 = scmp.ne.s32.totalorder %s45, %s46
      %p57 = scmp.eq.s32.totalorder %s23, 0
      %p58 = por %p56, %p57
      %p59 = scmp.ne.s32.totalorder %s45, %s46
      %p60 = scmp.eq.s32.totalorder %s24, 1
      %p61 = por %p59, %p60
      %p63 = scmp.ne.s32.totalorder %s46, %s62
      %p64 = scmp.eq.s32.totalorder %s24, 0
      %p65 = por %p63, %p64
      %s66 = ssub.s32 %s26, %s33
      %p67 = scmp.eq.s32.totalorder %s66, 0
      %s69 = sadd.s32 %s68, 1
      %s70 = scalar_select %p67, %s68, %s69
      %p73 = pneg %p67
      %p74 = scmp.eq.s32.totalorder %s18, 1
      %p75 = por %p73, %p74
      %p76 = scmp.ne.s32.totalorder %s68, %s71
      %p77 = scmp.eq.s32.totalorder %s18, 0
      %p78 = por %p76, %p77
      %p79 = scmp.ne.s32.totalorder %s68, %s71
      %p80 = scmp.eq.s32.totalorder %s23, 1
      %p81 = por %p79, %p80
      %p82 = scmp.ne.s32.totalorder %s71, %s72
      %p83 = scmp.eq.s32.totalorder %s23, 0
      %p84 = por %p82, %p83
      %p85 = scmp.ne.s32.totalorder %s71, %s72
      %p86 = scmp.eq.s32.totalorder %s24, 1
      %p87 = por %p85, %p86
      %p89 = scmp.ne.s32.totalorder %s72, %s88
      %p90 = scmp.eq.s32.totalorder %s24, 0
      %p91 = por %p89, %p90
      %s93 = sadd.s32 %s92, 1
      %p96 = scmp.eq.s32.totalorder %s18, 1
      %p97 = scmp.ne.s32.totalorder %s92, %s94
      %p98 = scmp.eq.s32.totalorder %s18, 0
      %p99 = por %p97, %p98
      %p100 = scmp.ne.s32.totalorder %s92, %s94
      %p101 = scmp.eq.s32.totalorder %s23, 1
      %p102 = por %p100, %p101
      %p103 = scmp.ne.s32.totalorder %s94, %s95
      %p104 = scmp.eq.s32.totalorder %s23, 0
      %p105 = por %p103, %p104
      %p106 = scmp.ne.s32.totalorder %s94, %s95
      %p107 = scmp.eq.s32.totalorder %s24, 1
      %p108 = por %p106, %p107
      %p110 = scmp.ne.s32.totalorder %s95, %s109
      %p111 = scmp.eq.s32.totalorder %s24, 0
      %p112 = por %p110, %p111
      %s114 = sadd.s32 %s113, 1
      %p117 = scmp.eq.s32.totalorder %s18, 1
      %p118 = scmp.ne.s32.totalorder %s113, %s115
      %p119 = scmp.eq.s32.totalorder %s18, 0
      %p120 = por %p118, %p119
      %p121 = scmp.ne.s32.totalorder %s113, %s115
      %p122 = scmp.eq.s32.totalorder %s23, 1
      %p123 = por %p121, %p122
      %p124 = scmp.ne.s32.totalorder %s115, %s116
      %p125 = scmp.eq.s32.totalorder %s23, 0
      %p126 = por %p124, %p125
      %p127 = scmp.ne.s32.totalorder %s115, %s116
      %p128 = scmp.eq.s32.totalorder %s24, 1
      %p129 = por %p127, %p128
      %p131 = scmp.ne.s32.totalorder %s116, %s130
      %p132 = scmp.eq.s32.totalorder %s24, 0
      %p133 = por %p131, %p132
      %s134 = ssub.s32 %s25, %s37
      %p135 = scmp.eq.s32.totalorder %s134, 0
      %s137 = sadd.s32 %s136, 1
      %s138 = scalar_select %p135, %s136, %s137
      %p141 = pneg %p135
      %p142 = scmp.eq.s32.totalorder %s18, 1
      %p143 = por %p141, %p142
      %p144 = scmp.ne.s32.totalorder %s136, %s139
      %p145 = scmp.eq.s32.totalorder %s18, 0
      %p146 = por %p144, %p145
      %p147 = scmp.ne.s32.totalorder %s136, %s139
      %p148 = scmp.eq.s32.totalorder %s23, 1
      %p149 = por %p147, %p148
      %p150 = scmp.ne.s32.totalorder %s139, %s140
      %p151 = scmp.eq.s32.totalorder %s23, 0
      %p152 = por %p150, %p151
      %p153 = scmp.ne.s32.totalorder %s139, %s140
      %p154 = scmp.eq.s32.totalorder %s24, 1
      %p155 = por %p153, %p154
      %p157 = scmp.ne.s32.totalorder %s140, %s156
      %p158 = scmp.eq.s32.totalorder %s24, 0
      %p159 = por %p157, %p158
      %p160 = scmp.le.s32.totalorder 1, %s18
      %p161 = scmp.lt.s32.totalorder %s18, 3
      %p162 = pnand %p160, %p161
      %p163 = pneg %p162
      // Predicated region
      $region9: #{tpu_custom_call.1} parent=5 // pred_check
        _
      $region10: #{tpu_custom_call.1} parent=5 // pred_check_branch
        %165 = sbr.rel (%p162) target = $region12
      $region11: #{tpu_custom_call.1} parent=5 // pred_region
        %s166 = ssub.s32 %s18, 1
        // Predicated region
        $region13: #{tpu_custom_call.1} parent=11 // pred_check
          %p167 = pneg %p105
        $region14: #{tpu_custom_call.1} parent=11 // pred_check_branch
          %169 = sbr.rel (%p167) target = $region16
        $region15: #{tpu_custom_call.1} parent=11 // pred_region
          %s171 = ssub.s32 8192, 8192
          %172 = vsyncadd [#allocation7], %s171
          %s173 = sshll.u32 [#allocation8], 4
          %s174 = int_to_ptr.vmem [resolvable:$true] %s173
          %179 = dma.hbm_to_vmem [thread:$0]  %s2, 8192, %s174, [#allocation7], 128, 128, 8
        $region16: #{tpu_custom_call.1} parent=11 // pred_fallthru
          _
        // Predicated region
        $region17: #{tpu_custom_call.1} parent=11 // pred_check
          %p180 = pneg %p126
        $region18: #{tpu_custom_call.1} parent=11 // pred_check_branch
          %182 = sbr.rel (%p180) target = $region20
        $region19: #{tpu_custom_call.1} parent=11 // pred_region
          %s184 = ssub.s32 16, 16
          %185 = vsyncadd [#allocation10], %s184
          %s187 = sshll.u32 [#allocation9], 4
          %s188 = int_to_ptr.vmem [resolvable:$true] %s187
          %190 = dma.hbm_to_vmem [thread:$0]  %s3, 16, %s188, [#allocation10]
        $region20: #{tpu_custom_call.1} parent=11 // pred_fallthru
          _
      $region12: #{tpu_custom_call.1} parent=5 // pred_fallthru
        _
      %p191 = scmp.lt.s32.totalorder %s18, 2
      // Predicated region
      $region21: #{tpu_custom_call.1} parent=5 // pred_check
        %p192 = pneg %p191
      $region22: #{tpu_custom_call.1} parent=5 // pred_check_branch
        %194 = sbr.rel (%p192) target = $region24
      $region23: #{tpu_custom_call.1} parent=5 // pred_region
        // Predicated region
        $region25: #{tpu_custom_call.1} parent=23 // pred_check
          %p195 = pneg %p52
        $region26: #{tpu_custom_call.1} parent=23 // pred_check_branch
          %197 = sbr.rel (%p195) target = $region28
        $region27: #{tpu_custom_call.1} parent=23 // pred_region
          %s198 = sand.u32 %s42, 1
          %s199 = scalar_lea.sflag [#allocation4], %s198
          %s200 = sand.u32 %s42, 1
          %s201 = smul.addr %s200, 96
          %s202 = scalar_lea.vmem [#allocation3], %s201
          %s203 = smul.u32 24, %s26
          %s205 = ssub.s32 1536, 1536
          %206 = vsyncadd %s199, %s205
          %s207 = smul.addr %s25, 48
          %s208 = sadd.s32 %s203, %s207
          %s209 = smul.addr %s208, 64
          %s210 = scalar_lea.hbm %s0, %s209
          %s212 = sshll.u32 %s202, 4
          %s213 = int_to_ptr.vmem [resolvable:$true] %s212
          %215 = dma.hbm_to_vmem [thread:$0]  %s210, 1536, %s213, %s199
        $region28: #{tpu_custom_call.1} parent=23 // pred_fallthru
          _
        // Predicated region
        $region29: #{tpu_custom_call.1} parent=23 // pred_check
          %p216 = pneg %p78
        $region30: #{tpu_custom_call.1} parent=23 // pred_check_branch
          %218 = sbr.rel (%p216) target = $region32
        $region31: #{tpu_custom_call.1} parent=23 // pred_region
          %s219 = sand.u32 %s18, 1
          %s220 = scalar_lea.sflag [#allocation7], %s219
          %s221 = sand.u32 %s68, 1
          %s222 = smul.addr %s221, 6144
          %s223 = scalar_lea.vmem [#allocation6], %s222
          %s224 = smul.u32 384, %s26
          %s226 = ssub.s32 98304, 98304
          %227 = vsyncadd %s220, %s226
          %s228 = smul.addr %s224, 4
          %s229 = smul.addr %s228, 64
          %s230 = scalar_lea.hbm %s1, %s229
          %s231 = sshll.u32 %s223, 4
          %s232 = int_to_ptr.vmem [resolvable:$true] %s231
          %237 = dma.hbm_to_vmem [thread:$0]  %s230, 98304, %s232, %s220, 256, 256, 16
        $region32: #{tpu_custom_call.1} parent=23 // pred_fallthru
          _
      $region24: #{tpu_custom_call.1} parent=5 // pred_fallthru
        _
      %p238 = scmp.le.s32.totalorder 1, %s18
      %p239 = scmp.lt.s32.totalorder %s18, 3
      %p240 = pnand %p238, %p239
      %p241 = pneg %p240
      // Predicated region
      $region33: #{tpu_custom_call.1} parent=5 // pred_check
        _
      $region34: #{tpu_custom_call.1} parent=5 // pred_check_branch
        %243 = sbr.rel (%p240) target = $region36
      $region35: #{tpu_custom_call.1} parent=5 // pred_region
        %s244 = ssub.s32 %s18, 1
        %s245 = sand.u32 %s45, 1
        %s246 = scalar_lea.sflag [#allocation4], %s245
        %s247 = sand.u32 %s45, 1
        %s248 = smul.addr %s247, 96
        %s249 = scalar_lea.vmem [#allocation3], %s248
        // Predicated region
        $region37: #{tpu_custom_call.1} parent=35 // pred_check
          %p250 = pneg %p58
        $region38: #{tpu_custom_call.1} parent=35 // pred_check_branch
          %252 = sbr.rel (%p250) target = $region40
        $region39: #{tpu_custom_call.1} parent=35 // pred_region
          %253 = dma.done %s246, 1536
        $region40: #{tpu_custom_call.1} parent=35 // pred_fallthru
          _
        %s254 = sand.u32 %s23, 1
        %s255 = scalar_lea.sflag [#allocation7], %s254
        %s256 = sand.u32 %s71, 1
        %s257 = smul.addr %s256, 6144
        %s258 = scalar_lea.vmem [#allocation6], %s257
        // Predicated region
        $region41: #{tpu_custom_call.1} parent=35 // pred_check
          %p259 = pneg %p84
        $region42: #{tpu_custom_call.1} parent=35 // pred_check_branch
          %261 = sbr.rel (%p259) target = $region44
        $region43: #{tpu_custom_call.1} parent=35 // pred_region
          %262 = dma.done %s255, 98304
        $region44: #{tpu_custom_call.1} parent=35 // pred_fallthru
          _
        // Predicated region
        $region45: #{tpu_custom_call.1} parent=35 // pred_check
          %p263 = pneg %p105
        $region46: #{tpu_custom_call.1} parent=35 // pred_check_branch
          %265 = sbr.rel (%p263) target = $region48
        $region47: #{tpu_custom_call.1} parent=35 // pred_region
          %266 = dma.done [#allocation7], 8192
        $region48: #{tpu_custom_call.1} parent=35 // pred_fallthru
          _
        // Predicated region
        $region49: #{tpu_custom_call.1} parent=35 // pred_check
          %p267 = pneg %p126
        $region50: #{tpu_custom_call.1} parent=35 // pred_check_branch
          %269 = sbr.rel (%p267) target = $region52
        $region51: #{tpu_custom_call.1} parent=35 // pred_region
          %270 = dma.done [#allocation10], 16
        $region52: #{tpu_custom_call.1} parent=35 // pred_fallthru
          _
        %s271 = sand.u32 %s45, 1
        %s272 = scalar_lea.sflag [#allocation4], %s271
        %s273 = sand.u32 %s45, 1
        %s274 = smul.addr %s273, 96
        %s275 = scalar_lea.vmem [#allocation3], %s274
        %p276 = pneg %p58
        %p277 = pneg %p55
        %s278 = sand.u32 %s23, 1
        %s279 = scalar_lea.sflag [#allocation7], %s278
        %s280 = sand.u32 %s71, 1
        %s281 = smul.addr %s280, 6144
        %s282 = scalar_lea.vmem [#allocation6], %s281
        %p283 = pneg %p84
        %p284 = pneg %p81
        %p285 = pneg %p105
        %p286 = pneg %p102
        %p287 = pneg %p126
        %p288 = pneg %p123
        %p289 = pneg %p152
        %p290 = pneg %p149
        %s291 = smul.u32 24, %s28
        %s292 = smul.u32 384, %s28
        %p293 = scmp.eq.s32.totalorder %s28, 0
        // Predicated region
        $region53: #{tpu_custom_call.1} parent=35 // pred_check
          %p294 = pneg %p293
        $region54: #{tpu_custom_call.1} parent=35 // pred_check_branch
          %296 = sbr.rel (%p294) target = $region56
        $region55: #{tpu_custom_call.1} parent=35 // pred_region
          %297 = vst [vmem:[#allocation2] sm:$0xff] 0.0
          %298 = vst [vmem:[#allocation2 + $0x8] sm:$0xff] 0.0
          %299 = vst [vmem:[#allocation2 + $0x10] sm:$0xff] 0.0
          %300 = vst [vmem:[#allocation2 + $0x18] sm:$0xff] 0.0
        $region56: #{tpu_custom_call.1} parent=35 // pred_fallthru
          _
        %v301 = vld [vmem:[#allocation2] sm:$0xff]
        %v302 = vld [vmem:[#allocation2 + $0x8] sm:$0xff]
        %v303 = vld [vmem:[#allocation2 + $0x10] sm:$0xff]
        %v304 = vld [vmem:[#allocation2 + $0x18] sm:$0xff]
        %v305 = vld [vmem:[%s249] sm:$0xff]
        %v306 = vld [vmem:[%s249 + $0x8] sm:$0xff]
        %v307 = vld [vmem:[%s249 + $0x10] sm:$0xff]
        %v308 = vld [vmem:[%s249 + $0x18] sm:$0xff]
        %v309 = vld [vmem:[%s249 + $0x20] sm:$0xff]
        %v310 = vld [vmem:[%s249 + $0x28] sm:$0xff]
        %v311 = vld [vmem:[%s249 + $0x30] sm:$0xff]
        %v312 = vld [vmem:[%s249 + $0x38] sm:$0xff]
        %v313 = vld [vmem:[%s249 + $0x40] sm:$0xff]
        %v314 = vld [vmem:[%s249 + $0x48] sm:$0xff]
        %v315 = vld [vmem:[%s249 + $0x50] sm:$0xff]
        %v316 = vld [vmem:[%s249 + $0x58] sm:$0xff]
        %v317 = vld [vmem:[%s258] sm:$0xff]
        %v318 = vld [vmem:[%s258 + $0x8] sm:$0xff]
        %v319 = vld [vmem:[%s258 + $0x10] sm:$0xff]
        %v320 = vld [vmem:[%s258 + $0x18] sm:$0xff]
        %v321 = vld [vmem:[%s258 + $0x20] sm:$0xff]
        %v322 = vld [vmem:[%s258 + $0x28] sm:$0xff]
        %v323 = vld [vmem:[%s258 + $0x30] sm:$0xff]
        %v324 = vld [vmem:[%s258 + $0x38] sm:$0xff]
        %v325 = vld [vmem:[%s258 + $0x40] sm:$0xff]
        %v326 = vld [vmem:[%s258 + $0x48] sm:$0xff]
        %v327 = vld [vmem:[%s258 + $0x50] sm:$0xff]
        %v328 = vld [vmem:[%s258 + $0x58] sm:$0xff]
        %v329 = vld [vmem:[%s258 + $0x60] sm:$0xff]
        %v330 = vld [vmem:[%s258 + $0x68] sm:$0xff]
        %v331 = vld [vmem:[%s258 + $0x70] sm:$0xff]
        %v332 = vld [vmem:[%s258 + $0x78] sm:$0xff]
        %v333 = vld [vmem:[%s258 + $0x80] sm:$0xff]
        %v334 = vld [vmem:[%s258 + $0x88] sm:$0xff]
        %v335 = vld [vmem:[%s258 + $0x90] sm:$0xff]
        %v336 = vld [vmem:[%s258 + $0x98] sm:$0xff]
        %v337 = vld [vmem:[%s258 + $0xa0] sm:$0xff]
        %v338 = vld [vmem:[%s258 + $0xa8] sm:$0xff]
        %v339 = vld [vmem:[%s258 + $0xb0] sm:$0xff]
        %v340 = vld [vmem:[%s258 + $0xb8] sm:$0xff]
        %v341 = vld [vmem:[%s258 + $0xc0] sm:$0xff]
        %v342 = vld [vmem:[%s258 + $0xc8] sm:$0xff]
        %v343 = vld [vmem:[%s258 + $0xd0] sm:$0xff]
        %v344 = vld [vmem:[%s258 + $0xd8] sm:$0xff]
        %v345 = vld [vmem:[%s258 + $0xe0] sm:$0xff]
        %v346 = vld [vmem:[%s258 + $0xe8] sm:$0xff]
        %v347 = vld [vmem:[%s258 + $0xf0] sm:$0xff]
        %v348 = vld [vmem:[%s258 + $0xf8] sm:$0xff]
        %v349 = vld [vmem:[%s258 + $0x100] sm:$0xff]
        %v350 = vld [vmem:[%s258 + $0x108] sm:$0xff]
        %v351 = vld [vmem:[%s258 + $0x110] sm:$0xff]
        %v352 = vld [vmem:[%s258 + $0x118] sm:$0xff]
        %v353 = vld [vmem:[%s258 + $0x120] sm:$0xff]
        %v354 = vld [vmem:[%s258 + $0x128] sm:$0xff]
        %v355 = vld [vmem:[%s258 + $0x130] sm:$0xff]
        %v356 = vld [vmem:[%s258 + $0x138] sm:$0xff]
        %v357 = vld [vmem:[%s258 + $0x140] sm:$0xff]
        %v358 = vld [vmem:[%s258 + $0x148] sm:$0xff]
        %v359 = vld [vmem:[%s258 + $0x150] sm:$0xff]
        %v360 = vld [vmem:[%s258 + $0x158] sm:$0xff]
        %v361 = vld [vmem:[%s258 + $0x160] sm:$0xff]
        %v362 = vld [vmem:[%s258 + $0x168] sm:$0xff]
        %v363 = vld [vmem:[%s258 + $0x170] sm:$0xff]
        %v364 = vld [vmem:[%s258 + $0x178] sm:$0xff]
        %v365 = vld [vmem:[%s258 + $0x180] sm:$0xff]
        %v366 = vld [vmem:[%s258 + $0x188] sm:$0xff]
        %v367 = vld [vmem:[%s258 + $0x190] sm:$0xff]
        %v368 = vld [vmem:[%s258 + $0x198] sm:$0xff]
        %v369 = vld [vmem:[%s258 + $0x1a0] sm:$0xff]
        %v370 = vld [vmem:[%s258 + $0x1a8] sm:$0xff]
        %v371 = vld [vmem:[%s258 + $0x1b0] sm:$0xff]
        %v372 = vld [vmem:[%s258 + $0x1b8] sm:$0xff]
        %v373 = vld [vmem:[%s258 + $0x1c0] sm:$0xff]
        %v374 = vld [vmem:[%s258 + $0x1c8] sm:$0xff]
        %v375 = vld [vmem:[%s258 + $0x1d0] sm:$0xff]
        %v376 = vld [vmem:[%s258 + $0x1d8] sm:$0xff]
        %v377 = vld [vmem:[%s258 + $0x1e0] sm:$0xff]
        %v378 = vld [vmem:[%s258 + $0x1e8] sm:$0xff]
        %v379 = vld [vmem:[%s258 + $0x1f0] sm:$0xff]
        %v380 = vld [vmem:[%s258 + $0x1f8] sm:$0xff]
        %v381 = vld [vmem:[%s258 + $0x200] sm:$0xff]
        %v382 = vld [vmem:[%s258 + $0x208] sm:$0xff]
        %v383 = vld [vmem:[%s258 + $0x210] sm:$0xff]
        %v384 = vld [vmem:[%s258 + $0x218] sm:$0xff]
        %v385 = vld [vmem:[%s258 + $0x220] sm:$0xff]
        %v386 = vld [vmem:[%s258 + $0x228] sm:$0xff]
        %v387 = vld [vmem:[%s258 + $0x230] sm:$0xff]
        %v388 = vld [vmem:[%s258 + $0x238] sm:$0xff]
        %v389 = vld [vmem:[%s258 + $0x240] sm:$0xff]
        %v390 = vld [vmem:[%s258 + $0x248] sm:$0xff]
        %v391 = vld [vmem:[%s258 + $0x250] sm:$0xff]
        %v392 = vld [vmem:[%s258 + $0x258] sm:$0xff]
        %v393 = vld [vmem:[%s258 + $0x260] sm:$0xff]
        %v394 = vld [vmem:[%s258 + $0x268] sm:$0xff]
        %v395 = vld [vmem:[%s258 + $0x270] sm:$0xff]
        %v396 = vld [vmem:[%s258 + $0x278] sm:$0xff]
        %v397 = vld [vmem:[%s258 + $0x280] sm:$0xff]
        %v398 = vld [vmem:[%s258 + $0x288] sm:$0xff]
        %v399 = vld [vmem:[%s258 + $0x290] sm:$0xff]
        %v400 = vld [vmem:[%s258 + $0x298] sm:$0xff]
        %v401 = vld [vmem:[%s258 + $0x2a0] sm:$0xff]
        %v402 = vld [vmem:[%s258 + $0x2a8] sm:$0xff]
        %v403 = vld [vmem:[%s258 + $0x2b0] sm:$0xff]
        %v404 = vld [vmem:[%s258 + $0x2b8] sm:$0xff]
        %v405 = vld [vmem:[%s258 + $0x2c0] sm:$0xff]
        %v406 = vld [vmem:[%s258 + $0x2c8] sm:$0xff]
        %v407 = vld [vmem:[%s258 + $0x2d0] sm:$0xff]
        %v408 = vld [vmem:[%s258 + $0x2d8] sm:$0xff]
        %v409 = vld [vmem:[%s258 + $0x2e0] sm:$0xff]
        %v410 = vld [vmem:[%s258 + $0x2e8] sm:$0xff]
        %v411 = vld [vmem:[%s258 + $0x2f0] sm:$0xff]
        %v412 = vld [vmem:[%s258 + $0x2f8] sm:$0xff]
        %v413 = vld [vmem:[%s258 + $0x300] sm:$0xff]
        %v414 = vld [vmem:[%s258 + $0x308] sm:$0xff]
        %v415 = vld [vmem:[%s258 + $0x310] sm:$0xff]
        %v416 = vld [vmem:[%s258 + $0x318] sm:$0xff]
        %v417 = vld [vmem:[%s258 + $0x320] sm:$0xff]
        %v418 = vld [vmem:[%s258 + $0x328] sm:$0xff]
        %v419 = vld [vmem:[%s258 + $0x330] sm:$0xff]
        %v420 = vld [vmem:[%s258 + $0x338] sm:$0xff]
        %v421 = vld [vmem:[%s258 + $0x340] sm:$0xff]
        %v422 = vld [vmem:[%s258 + $0x348] sm:$0xff]
        %v423 = vld [vmem:[%s258 + $0x350] sm:$0xff]
        %v424 = vld [vmem:[%s258 + $0x358] sm:$0xff]
        %v425 = vld [vmem:[%s258 + $0x360] sm:$0xff]
        %v426 = vld [vmem:[%s258 + $0x368] sm:$0xff]
        %v427 = vld [vmem:[%s258 + $0x370] sm:$0xff]
        %v428 = vld [vmem:[%s258 + $0x378] sm:$0xff]
        %v429 = vld [vmem:[%s258 + $0x380] sm:$0xff]
        %v430 = vld [vmem:[%s258 + $0x388] sm:$0xff]
        %v431 = vld [vmem:[%s258 + $0x390] sm:$0xff]
        %v432 = vld [vmem:[%s258 + $0x398] sm:$0xff]
        %v433 = vld [vmem:[%s258 + $0x3a0] sm:$0xff]
        %v434 = vld [vmem:[%s258 + $0x3a8] sm:$0xff]
        %v435 = vld [vmem:[%s258 + $0x3b0] sm:$0xff]
        %v436 = vld [vmem:[%s258 + $0x3b8] sm:$0xff]
        %v437 = vld [vmem:[%s258 + $0x3c0] sm:$0xff]
        %v438 = vld [vmem:[%s258 + $0x3c8] sm:$0xff]
        %v439 = vld [vmem:[%s258 + $0x3d0] sm:$0xff]
        %v440 = vld [vmem:[%s258 + $0x3d8] sm:$0xff]
        %v441 = vld [vmem:[%s258 + $0x3e0] sm:$0xff]
        %v442 = vld [vmem:[%s258 + $0x3e8] sm:$0xff]
        %v443 = vld [vmem:[%s258 + $0x3f0] sm:$0xff]
        %v444 = vld [vmem:[%s258 + $0x3f8] sm:$0xff]
        %v445 = vld [vmem:[%s258 + $0x400] sm:$0xff]
        %v446 = vld [vmem:[%s258 + $0x408] sm:$0xff]
        %v447 = vld [vmem:[%s258 + $0x410] sm:$0xff]
        %v448 = vld [vmem:[%s258 + $0x418] sm:$0xff]
        %v449 = vld [vmem:[%s258 + $0x420] sm:$0xff]
        %v450 = vld [vmem:[%s258 + $0x428] sm:$0xff]
        %v451 = vld [vmem:[%s258 + $0x430] sm:$0xff]
        %v452 = vld [vmem:[%s258 + $0x438] sm:$0xff]
        %v453 = vld [vmem:[%s258 + $0x440] sm:$0xff]
        %v454 = vld [vmem:[%s258 + $0x448] sm:$0xff]
        %v455 = vld [vmem:[%s258 + $0x450] sm:$0xff]
        %v456 = vld [vmem:[%s258 + $0x458] sm:$0xff]
        %v457 = vld [vmem:[%s258 + $0x460] sm:$0xff]
        %v458 = vld [vmem:[%s258 + $0x468] sm:$0xff]
        %v459 = vld [vmem:[%s258 + $0x470] sm:$0xff]
        %v460 = vld [vmem:[%s258 + $0x478] sm:$0xff]
        %v461 = vld [vmem:[%s258 + $0x480] sm:$0xff]
        %v462 = vld [vmem:[%s258 + $0x488] sm:$0xff]
        %v463 = vld [vmem:[%s258 + $0x490] sm:$0xff]
        %v464 = vld [vmem:[%s258 + $0x498] sm:$0xff]
        %v465 = vld [vmem:[%s258 + $0x4a0] sm:$0xff]
        %v466 = vld [vmem:[%s258 + $0x4a8] sm:$0xff]
        %v467 = vld [vmem:[%s258 + $0x4b0] sm:$0xff]
        %v468 = vld [vmem:[%s258 + $0x4b8] sm:$0xff]
        %v469 = vld [vmem:[%s258 + $0x4c0] sm:$0xff]
        %v470 = vld [vmem:[%s258 + $0x4c8] sm:$0xff]
        %v471 = vld [vmem:[%s258 + $0x4d0] sm:$0xff]
        %v472 = vld [vmem:[%s258 + $0x4d8] sm:$0xff]
        %v473 = vld [vmem:[%s258 + $0x4e0] sm:$0xff]
        %v474 = vld [vmem:[%s258 + $0x4e8] sm:$0xff]
        %v475 = vld [vmem:[%s258 + $0x4f0] sm:$0xff]
        %v476 = vld [vmem:[%s258 + $0x4f8] sm:$0xff]
        %v477 = vld [vmem:[%s258 + $0x500] sm:$0xff]
        %v478 = vld [vmem:[%s258 + $0x508] sm:$0xff]
        %v479 = vld [vmem:[%s258 + $0x510] sm:$0xff]
        %v480 = vld [vmem:[%s258 + $0x518] sm:$0xff]
        %v481 = vld [vmem:[%s258 + $0x520] sm:$0xff]
        %v482 = vld [vmem:[%s258 + $0x528] sm:$0xff]
        %v483 = vld [vmem:[%s258 + $0x530] sm:$0xff]
        %v484 = vld [vmem:[%s258 + $0x538] sm:$0xff]
        %v485 = vld [vmem:[%s258 + $0x540] sm:$0xff]
        %v486 = vld [vmem:[%s258 + $0x548] sm:$0xff]
        %v487 = vld [vmem:[%s258 + $0x550] sm:$0xff]
        %v488 = vld [vmem:[%s258 + $0x558] sm:$0xff]
        %v489 = vld [vmem:[%s258 + $0x560] sm:$0xff]
        %v490 = vld [vmem:[%s258 + $0x568] sm:$0xff]
        %v491 = vld [vmem:[%s258 + $0x570] sm:$0xff]
        %v492 = vld [vmem:[%s258 + $0x578] sm:$0xff]
        %v493 = vld [vmem:[%s258 + $0x580] sm:$0xff]
        %v494 = vld [vmem:[%s258 + $0x588] sm:$0xff]
        %v495 = vld [vmem:[%s258 + $0x590] sm:$0xff]
        %v496 = vld [vmem:[%s258 + $0x598] sm:$0xff]
        %v497 = vld [vmem:[%s258 + $0x5a0] sm:$0xff]
        %v498 = vld [vmem:[%s258 + $0x5a8] sm:$0xff]
        %v499 = vld [vmem:[%s258 + $0x5b0] sm:$0xff]
        %v500 = vld [vmem:[%s258 + $0x5b8] sm:$0xff]
        %v501 = vld [vmem:[%s258 + $0x5c0] sm:$0xff]
        %v502 = vld [vmem:[%s258 + $0x5c8] sm:$0xff]
        %v503 = vld [vmem:[%s258 + $0x5d0] sm:$0xff]
        %v504 = vld [vmem:[%s258 + $0x5d8] sm:$0xff]
        %v505 = vld [vmem:[%s258 + $0x5e0] sm:$0xff]
        %v506 = vld [vmem:[%s258 + $0x5e8] sm:$0xff]
        %v507 = vld [vmem:[%s258 + $0x5f0] sm:$0xff]
        %v508 = vld [vmem:[%s258 + $0x5f8] sm:$0xff]
        %v509 = vld [vmem:[%s258 + $0x600] sm:$0xff]
        %v510 = vld [vmem:[%s258 + $0x608] sm:$0xff]
        %v511 = vld [vmem:[%s258 + $0x610] sm:$0xff]
        %v512 = vld [vmem:[%s258 + $0x618] sm:$0xff]
        %v513 = vld [vmem:[%s258 + $0x620] sm:$0xff]
        %v514 = vld [vmem:[%s258 + $0x628] sm:$0xff]
        %v515 = vld [vmem:[%s258 + $0x630] sm:$0xff]
        %v516 = vld [vmem:[%s258 + $0x638] sm:$0xff]
        %v517 = vld [vmem:[%s258 + $0x640] sm:$0xff]
        %v518 = vld [vmem:[%s258 + $0x648] sm:$0xff]
        %v519 = vld [vmem:[%s258 + $0x650] sm:$0xff]
        %v520 = vld [vmem:[%s258 + $0x658] sm:$0xff]
        %v521 = vld [vmem:[%s258 + $0x660] sm:$0xff]
        %v522 = vld [vmem:[%s258 + $0x668] sm:$0xff]
        %v523 = vld [vmem:[%s258 + $0x670] sm:$0xff]
        %v524 = vld [vmem:[%s258 + $0x678] sm:$0xff]
        %v525 = vld [vmem:[%s258 + $0x680] sm:$0xff]
        %v526 = vld [vmem:[%s258 + $0x688] sm:$0xff]
        %v527 = vld [vmem:[%s258 + $0x690] sm:$0xff]
        %v528 = vld [vmem:[%s258 + $0x698] sm:$0xff]
        %v529 = vld [vmem:[%s258 + $0x6a0] sm:$0xff]
        %v530 = vld [vmem:[%s258 + $0x6a8] sm:$0xff]
        %v531 = vld [vmem:[%s258 + $0x6b0] sm:$0xff]
        %v532 = vld [vmem:[%s258 + $0x6b8] sm:$0xff]
        %v533 = vld [vmem:[%s258 + $0x6c0] sm:$0xff]
        %v534 = vld [vmem:[%s258 + $0x6c8] sm:$0xff]
        %v535 = vld [vmem:[%s258 + $0x6d0] sm:$0xff]
        %v536 = vld [vmem:[%s258 + $0x6d8] sm:$0xff]
        %v537 = vld [vmem:[%s258 + $0x6e0] sm:$0xff]
        %v538 = vld [vmem:[%s258 + $0x6e8] sm:$0xff]
        %v539 = vld [vmem:[%s258 + $0x6f0] sm:$0xff]
        %v540 = vld [vmem:[%s258 + $0x6f8] sm:$0xff]
        %v541 = vld [vmem:[%s258 + $0x700] sm:$0xff]
        %v542 = vld [vmem:[%s258 + $0x708] sm:$0xff]
        %v543 = vld [vmem:[%s258 + $0x710] sm:$0xff]
        %v544 = vld [vmem:[%s258 + $0x718] sm:$0xff]
        %v545 = vld [vmem:[%s258 + $0x720] sm:$0xff]
        %v546 = vld [vmem:[%s258 + $0x728] sm:$0xff]
        %v547 = vld [vmem:[%s258 + $0x730] sm:$0xff]
        %v548 = vld [vmem:[%s258 + $0x738] sm:$0xff]
        %v549 = vld [vmem:[%s258 + $0x740] sm:$0xff]
        %v550 = vld [vmem:[%s258 + $0x748] sm:$0xff]
        %v551 = vld [vmem:[%s258 + $0x750] sm:$0xff]
        %v552 = vld [vmem:[%s258 + $0x758] sm:$0xff]
        %v553 = vld [vmem:[%s258 + $0x760] sm:$0xff]
        %v554 = vld [vmem:[%s258 + $0x768] sm:$0xff]
        %v555 = vld [vmem:[%s258 + $0x770] sm:$0xff]
        %v556 = vld [vmem:[%s258 + $0x778] sm:$0xff]
        %v557 = vld [vmem:[%s258 + $0x780] sm:$0xff]
        %v558 = vld [vmem:[%s258 + $0x788] sm:$0xff]
        %v559 = vld [vmem:[%s258 + $0x790] sm:$0xff]
        %v560 = vld [vmem:[%s258 + $0x798] sm:$0xff]
        %v561 = vld [vmem:[%s258 + $0x7a0] sm:$0xff]
        %v562 = vld [vmem:[%s258 + $0x7a8] sm:$0xff]
        %v563 = vld [vmem:[%s258 + $0x7b0] sm:$0xff]
        %v564 = vld [vmem:[%s258 + $0x7b8] sm:$0xff]
        %v565 = vld [vmem:[%s258 + $0x7c0] sm:$0xff]
        %v566 = vld [vmem:[%s258 + $0x7c8] sm:$0xff]
        %v567 = vld [vmem:[%s258 + $0x7d0] sm:$0xff]
        %v568 = vld [vmem:[%s258 + $0x7d8] sm:$0xff]
        %v569 = vld [vmem:[%s258 + $0x7e0] sm:$0xff]
        %v570 = vld [vmem:[%s258 + $0x7e8] sm:$0xff]
        %v571 = vld [vmem:[%s258 + $0x7f0] sm:$0xff]
        %v572 = vld [vmem:[%s258 + $0x7f8] sm:$0xff]
        %v573 = vld [vmem:[%s258 + $0x800] sm:$0xff]
        %v574 = vld [vmem:[%s258 + $0x808] sm:$0xff]
        %v575 = vld [vmem:[%s258 + $0x810] sm:$0xff]
        %v576 = vld [vmem:[%s258 + $0x818] sm:$0xff]
        %v577 = vld [vmem:[%s258 + $0x820] sm:$0xff]
        %v578 = vld [vmem:[%s258 + $0x828] sm:$0xff]
        %v579 = vld [vmem:[%s258 + $0x830] sm:$0xff]
        %v580 = vld [vmem:[%s258 + $0x838] sm:$0xff]
        %v581 = vld [vmem:[%s258 + $0x840] sm:$0xff]
        %v582 = vld [vmem:[%s258 + $0x848] sm:$0xff]
        %v583 = vld [vmem:[%s258 + $0x850] sm:$0xff]
        %v584 = vld [vmem:[%s258 + $0x858] sm:$0xff]
        %v585 = vld [vmem:[%s258 + $0x860] sm:$0xff]
        %v586 = vld [vmem:[%s258 + $0x868] sm:$0xff]
        %v587 = vld [vmem:[%s258 + $0x870] sm:$0xff]
        %v588 = vld [vmem:[%s258 + $0x878] sm:$0xff]
        %v589 = vld [vmem:[%s258 + $0x880] sm:$0xff]
        %v590 = vld [vmem:[%s258 + $0x888] sm:$0xff]
        %v591 = vld [vmem:[%s258 + $0x890] sm:$0xff]
        %v592 = vld [vmem:[%s258 + $0x898] sm:$0xff]
        %v593 = vld [vmem:[%s258 + $0x8a0] sm:$0xff]
        %v594 = vld [vmem:[%s258 + $0x8a8] sm:$0xff]
        %v595 = vld [vmem:[%s258 + $0x8b0] sm:$0xff]
        %v596 = vld [vmem:[%s258 + $0x8b8] sm:$0xff]
        %v597 = vld [vmem:[%s258 + $0x8c0] sm:$0xff]
        %v598 = vld [vmem:[%s258 + $0x8c8] sm:$0xff]
        %v599 = vld [vmem:[%s258 + $0x8d0] sm:$0xff]
        %v600 = vld [vmem:[%s258 + $0x8d8] sm:$0xff]
        %v601 = vld [vmem:[%s258 + $0x8e0] sm:$0xff]
        %v602 = vld [vmem:[%s258 + $0x8e8] sm:$0xff]
        %v603 = vld [vmem:[%s258 + $0x8f0] sm:$0xff]
        %v604 = vld [vmem:[%s258 + $0x8f8] sm:$0xff]
        %v605 = vld [vmem:[%s258 + $0x900] sm:$0xff]
        %v606 = vld [vmem:[%s258 + $0x908] sm:$0xff]
        %v607 = vld [vmem:[%s258 + $0x910] sm:$0xff]
        %v608 = vld [vmem:[%s258 + $0x918] sm:$0xff]
        %v609 = vld [vmem:[%s258 + $0x920] sm:$0xff]
        %v610 = vld [vmem:[%s258 + $0x928] sm:$0xff]
        %v611 = vld [vmem:[%s258 + $0x930] sm:$0xff]
        %v612 = vld [vmem:[%s258 + $0x938] sm:$0xff]
        %v613 = vld [vmem:[%s258 + $0x940] sm:$0xff]
        %v614 = vld [vmem:[%s258 + $0x948] sm:$0xff]
        %v615 = vld [vmem:[%s258 + $0x950] sm:$0xff]
        %v616 = vld [vmem:[%s258 + $0x958] sm:$0xff]
        %v617 = vld [vmem:[%s258 + $0x960] sm:$0xff]
        %v618 = vld [vmem:[%s258 + $0x968] sm:$0xff]
        %v619 = vld [vmem:[%s258 + $0x970] sm:$0xff]
        %v620 = vld [vmem:[%s258 + $0x978] sm:$0xff]
        %v621 = vld [vmem:[%s258 + $0x980] sm:$0xff]
        %v622 = vld [vmem:[%s258 + $0x988] sm:$0xff]
        %v623 = vld [vmem:[%s258 + $0x990] sm:$0xff]
        %v624 = vld [vmem:[%s258 + $0x998] sm:$0xff]
        %v625 = vld [vmem:[%s258 + $0x9a0] sm:$0xff]
        %v626 = vld [vmem:[%s258 + $0x9a8] sm:$0xff]
        %v627 = vld [vmem:[%s258 + $0x9b0] sm:$0xff]
        %v628 = vld [vmem:[%s258 + $0x9b8] sm:$0xff]
        %v629 = vld [vmem:[%s258 + $0x9c0] sm:$0xff]
        %v630 = vld [vmem:[%s258 + $0x9c8] sm:$0xff]
        %v631 = vld [vmem:[%s258 + $0x9d0] sm:$0xff]
        %v632 = vld [vmem:[%s258 + $0x9d8] sm:$0xff]
        %v633 = vld [vmem:[%s258 + $0x9e0] sm:$0xff]
        %v634 = vld [vmem:[%s258 + $0x9e8] sm:$0xff]
        %v635 = vld [vmem:[%s258 + $0x9f0] sm:$0xff]
        %v636 = vld [vmem:[%s258 + $0x9f8] sm:$0xff]
        %v637 = vld [vmem:[%s258 + $0xa00] sm:$0xff]
        %v638 = vld [vmem:[%s258 + $0xa08] sm:$0xff]
        %v639 = vld [vmem:[%s258 + $0xa10] sm:$0xff]
        %v640 = vld [vmem:[%s258 + $0xa18] sm:$0xff]
        %v641 = vld [vmem:[%s258 + $0xa20] sm:$0xff]
        %v642 = vld [vmem:[%s258 + $0xa28] sm:$0xff]
        %v643 = vld [vmem:[%s258 + $0xa30] sm:$0xff]
        %v644 = vld [vmem:[%s258 + $0xa38] sm:$0xff]
        %v645 = vld [vmem:[%s258 + $0xa40] sm:$0xff]
        %v646 = vld [vmem:[%s258 + $0xa48] sm:$0xff]
        %v647 = vld [vmem:[%s258 + $0xa50] sm:$0xff]
        %v648 = vld [vmem:[%s258 + $0xa58] sm:$0xff]
        %v649 = vld [vmem:[%s258 + $0xa60] sm:$0xff]
        %v650 = vld [vmem:[%s258 + $0xa68] sm:$0xff]
        %v651 = vld [vmem:[%s258 + $0xa70] sm:$0xff]
        %v652 = vld [vmem:[%s258 + $0xa78] sm:$0xff]
        %v653 = vld [vmem:[%s258 + $0xa80] sm:$0xff]
        %v654 = vld [vmem:[%s258 + $0xa88] sm:$0xff]
        %v655 = vld [vmem:[%s258 + $0xa90] sm:$0xff]
        %v656 = vld [vmem:[%s258 + $0xa98] sm:$0xff]
        %v657 = vld [vmem:[%s258 + $0xaa0] sm:$0xff]
        %v658 = vld [vmem:[%s258 + $0xaa8] sm:$0xff]
        %v659 = vld [vmem:[%s258 + $0xab0] sm:$0xff]
        %v660 = vld [vmem:[%s258 + $0xab8] sm:$0xff]
        %v661 = vld [vmem:[%s258 + $0xac0] sm:$0xff]
        %v662 = vld [vmem:[%s258 + $0xac8] sm:$0xff]
        %v663 = vld [vmem:[%s258 + $0xad0] sm:$0xff]
        %v664 = vld [vmem:[%s258 + $0xad8] sm:$0xff]
        %v665 = vld [vmem:[%s258 + $0xae0] sm:$0xff]
        %v666 = vld [vmem:[%s258 + $0xae8] sm:$0xff]
        %v667 = vld [vmem:[%s258 + $0xaf0] sm:$0xff]
        %v668 = vld [vmem:[%s258 + $0xaf8] sm:$0xff]
        %v669 = vld [vmem:[%s258 + $0xb00] sm:$0xff]
        %v670 = vld [vmem:[%s258 + $0xb08] sm:$0xff]
        %v671 = vld [vmem:[%s258 + $0xb10] sm:$0xff]
        %v672 = vld [vmem:[%s258 + $0xb18] sm:$0xff]
        %v673 = vld [vmem:[%s258 + $0xb20] sm:$0xff]
        %v674 = vld [vmem:[%s258 + $0xb28] sm:$0xff]
        %v675 = vld [vmem:[%s258 + $0xb30] sm:$0xff]
        %v676 = vld [vmem:[%s258 + $0xb38] sm:$0xff]
        %v677 = vld [vmem:[%s258 + $0xb40] sm:$0xff]
        %v678 = vld [vmem:[%s258 + $0xb48] sm:$0xff]
        %v679 = vld [vmem:[%s258 + $0xb50] sm:$0xff]
        %v680 = vld [vmem:[%s258 + $0xb58] sm:$0xff]
        %v681 = vld [vmem:[%s258 + $0xb60] sm:$0xff]
        %v682 = vld [vmem:[%s258 + $0xb68] sm:$0xff]
        %v683 = vld [vmem:[%s258 + $0xb70] sm:$0xff]
        %v684 = vld [vmem:[%s258 + $0xb78] sm:$0xff]
        %v685 = vld [vmem:[%s258 + $0xb80] sm:$0xff]
        %v686 = vld [vmem:[%s258 + $0xb88] sm:$0xff]
        %v687 = vld [vmem:[%s258 + $0xb90] sm:$0xff]
        %v688 = vld [vmem:[%s258 + $0xb98] sm:$0xff]
        %v689 = vld [vmem:[%s258 + $0xba0] sm:$0xff]
        %v690 = vld [vmem:[%s258 + $0xba8] sm:$0xff]
        %v691 = vld [vmem:[%s258 + $0xbb0] sm:$0xff]
        %v692 = vld [vmem:[%s258 + $0xbb8] sm:$0xff]
        %v693 = vld [vmem:[%s258 + $0xbc0] sm:$0xff]
        %v694 = vld [vmem:[%s258 + $0xbc8] sm:$0xff]
        %v695 = vld [vmem:[%s258 + $0xbd0] sm:$0xff]
        %v696 = vld [vmem:[%s258 + $0xbd8] sm:$0xff]
        %v697 = vld [vmem:[%s258 + $0xbe0] sm:$0xff]
        %v698 = vld [vmem:[%s258 + $0xbe8] sm:$0xff]
        %v699 = vld [vmem:[%s258 + $0xbf0] sm:$0xff]
        %v700 = vld [vmem:[%s258 + $0xbf8] sm:$0xff]
        %v701 = vld [vmem:[%s258 + $0xc00] sm:$0xff]
        %v702 = vld [vmem:[%s258 + $0xc08] sm:$0xff]
        %v703 = vld [vmem:[%s258 + $0xc10] sm:$0xff]
        %v704 = vld [vmem:[%s258 + $0xc18] sm:$0xff]
        %v705 = vld [vmem:[%s258 + $0xc20] sm:$0xff]
        %v706 = vld [vmem:[%s258 + $0xc28] sm:$0xff]
        %v707 = vld [vmem:[%s258 + $0xc30] sm:$0xff]
        %v708 = vld [vmem:[%s258 + $0xc38] sm:$0xff]
        %v709 = vld [vmem:[%s258 + $0xc40] sm:$0xff]
        %v710 = vld [vmem:[%s258 + $0xc48] sm:$0xff]
        %v711 = vld [vmem:[%s258 + $0xc50] sm:$0xff]
        %v712 = vld [vmem:[%s258 + $0xc58] sm:$0xff]
        %v713 = vld [vmem:[%s258 + $0xc60] sm:$0xff]
        %v714 = vld [vmem:[%s258 + $0xc68] sm:$0xff]
        %v715 = vld [vmem:[%s258 + $0xc70] sm:$0xff]
        %v716 = vld [vmem:[%s258 + $0xc78] sm:$0xff]
        %v717 = vld [vmem:[%s258 + $0xc80] sm:$0xff]
        %v718 = vld [vmem:[%s258 + $0xc88] sm:$0xff]
        %v719 = vld [vmem:[%s258 + $0xc90] sm:$0xff]
        %v720 = vld [vmem:[%s258 + $0xc98] sm:$0xff]
        %v721 = vld [vmem:[%s258 + $0xca0] sm:$0xff]
        %v722 = vld [vmem:[%s258 + $0xca8] sm:$0xff]
        %v723 = vld [vmem:[%s258 + $0xcb0] sm:$0xff]
        %v724 = vld [vmem:[%s258 + $0xcb8] sm:$0xff]
        %v725 = vld [vmem:[%s258 + $0xcc0] sm:$0xff]
        %v726 = vld [vmem:[%s258 + $0xcc8] sm:$0xff]
        %v727 = vld [vmem:[%s258 + $0xcd0] sm:$0xff]
        %v728 = vld [vmem:[%s258 + $0xcd8] sm:$0xff]
        %v729 = vld [vmem:[%s258 + $0xce0] sm:$0xff]
        %v730 = vld [vmem:[%s258 + $0xce8] sm:$0xff]
        %v731 = vld [vmem:[%s258 + $0xcf0] sm:$0xff]
        %v732 = vld [vmem:[%s258 + $0xcf8] sm:$0xff]
        %v733 = vld [vmem:[%s258 + $0xd00] sm:$0xff]
        %v734 = vld [vmem:[%s258 + $0xd08] sm:$0xff]
        %v735 = vld [vmem:[%s258 + $0xd10] sm:$0xff]
        %v736 = vld [vmem:[%s258 + $0xd18] sm:$0xff]
        %v737 = vld [vmem:[%s258 + $0xd20] sm:$0xff]
        %v738 = vld [vmem:[%s258 + $0xd28] sm:$0xff]
        %v739 = vld [vmem:[%s258 + $0xd30] sm:$0xff]
        %v740 = vld [vmem:[%s258 + $0xd38] sm:$0xff]
        %v741 = vld [vmem:[%s258 + $0xd40] sm:$0xff]
        %v742 = vld [vmem:[%s258 + $0xd48] sm:$0xff]
        %v743 = vld [vmem:[%s258 + $0xd50] sm:$0xff]
        %v744 = vld [vmem:[%s258 + $0xd58] sm:$0xff]
        %v745 = vld [vmem:[%s258 + $0xd60] sm:$0xff]
        %v746 = vld [vmem:[%s258 + $0xd68] sm:$0xff]
        %v747 = vld [vmem:[%s258 + $0xd70] sm:$0xff]
        %v748 = vld [vmem:[%s258 + $0xd78] sm:$0xff]
        %v749 = vld [vmem:[%s258 + $0xd80] sm:$0xff]
        %v750 = vld [vmem:[%s258 + $0xd88] sm:$0xff]
        %v751 = vld [vmem:[%s258 + $0xd90] sm:$0xff]
        %v752 = vld [vmem:[%s258 + $0xd98] sm:$0xff]
        %v753 = vld [vmem:[%s258 + $0xda0] sm:$0xff]
        %v754 = vld [vmem:[%s258 + $0xda8] sm:$0xff]
        %v755 = vld [vmem:[%s258 + $0xdb0] sm:$0xff]
        %v756 = vld [vmem:[%s258 + $0xdb8] sm:$0xff]
        %v757 = vld [vmem:[%s258 + $0xdc0] sm:$0xff]
        %v758 = vld [vmem:[%s258 + $0xdc8] sm:$0xff]
        %v759 = vld [vmem:[%s258 + $0xdd0] sm:$0xff]
        %v760 = vld [vmem:[%s258 + $0xdd8] sm:$0xff]
        %v761 = vld [vmem:[%s258 + $0xde0] sm:$0xff]
        %v762 = vld [vmem:[%s258 + $0xde8] sm:$0xff]
        %v763 = vld [vmem:[%s258 + $0xdf0] sm:$0xff]
        %v764 = vld [vmem:[%s258 + $0xdf8] sm:$0xff]
        %v765 = vld [vmem:[%s258 + $0xe00] sm:$0xff]
        %v766 = vld [vmem:[%s258 + $0xe08] sm:$0xff]
        %v767 = vld [vmem:[%s258 + $0xe10] sm:$0xff]
        %v768 = vld [vmem:[%s258 + $0xe18] sm:$0xff]
        %v769 = vld [vmem:[%s258 + $0xe20] sm:$0xff]
        %v770 = vld [vmem:[%s258 + $0xe28] sm:$0xff]
        %v771 = vld [vmem:[%s258 + $0xe30] sm:$0xff]
        %v772 = vld [vmem:[%s258 + $0xe38] sm:$0xff]
        %v773 = vld [vmem:[%s258 + $0xe40] sm:$0xff]
        %v774 = vld [vmem:[%s258 + $0xe48] sm:$0xff]
        %v775 = vld [vmem:[%s258 + $0xe50] sm:$0xff]
        %v776 = vld [vmem:[%s258 + $0xe58] sm:$0xff]
        %v777 = vld [vmem:[%s258 + $0xe60] sm:$0xff]
        %v778 = vld [vmem:[%s258 + $0xe68] sm:$0xff]
        %v779 = vld [vmem:[%s258 + $0xe70] sm:$0xff]
        %v780 = vld [vmem:[%s258 + $0xe78] sm:$0xff]
        %v781 = vld [vmem:[%s258 + $0xe80] sm:$0xff]
        %v782 = vld [vmem:[%s258 + $0xe88] sm:$0xff]
        %v783 = vld [vmem:[%s258 + $0xe90] sm:$0xff]
        %v784 = vld [vmem:[%s258 + $0xe98] sm:$0xff]
        %v785 = vld [vmem:[%s258 + $0xea0] sm:$0xff]
        %v786 = vld [vmem:[%s258 + $0xea8] sm:$0xff]
        %v787 = vld [vmem:[%s258 + $0xeb0] sm:$0xff]
        %v788 = vld [vmem:[%s258 + $0xeb8] sm:$0xff]
        %v789 = vld [vmem:[%s258 + $0xec0] sm:$0xff]
        %v790 = vld [vmem:[%s258 + $0xec8] sm:$0xff]
        %v791 = vld [vmem:[%s258 + $0xed0] sm:$0xff]
        %v792 = vld [vmem:[%s258 + $0xed8] sm:$0xff]
        %v793 = vld [vmem:[%s258 + $0xee0] sm:$0xff]
        %v794 = vld [vmem:[%s258 + $0xee8] sm:$0xff]
        %v795 = vld [vmem:[%s258 + $0xef0] sm:$0xff]
        %v796 = vld [vmem:[%s258 + $0xef8] sm:$0xff]
        %v797 = vld [vmem:[%s258 + $0xf00] sm:$0xff]
        %v798 = vld [vmem:[%s258 + $0xf08] sm:$0xff]
        %v799 = vld [vmem:[%s258 + $0xf10] sm:$0xff]
        %v800 = vld [vmem:[%s258 + $0xf18] sm:$0xff]
        %v801 = vld [vmem:[%s258 + $0xf20] sm:$0xff]
        %v802 = vld [vmem:[%s258 + $0xf28] sm:$0xff]
        %v803 = vld [vmem:[%s258 + $0xf30] sm:$0xff]
        %v804 = vld [vmem:[%s258 + $0xf38] sm:$0xff]
        %v805 = vld [vmem:[%s258 + $0xf40] sm:$0xff]
        %v806 = vld [vmem:[%s258 + $0xf48] sm:$0xff]
        %v807 = vld [vmem:[%s258 + $0xf50] sm:$0xff]
        %v808 = vld [vmem:[%s258 + $0xf58] sm:$0xff]
        %v809 = vld [vmem:[%s258 + $0xf60] sm:$0xff]
        %v810 = vld [vmem:[%s258 + $0xf68] sm:$0xff]
        %v811 = vld [vmem:[%s258 + $0xf70] sm:$0xff]
        %v812 = vld [vmem:[%s258 + $0xf78] sm:$0xff]
        %v813 = vld [vmem:[%s258 + $0xf80] sm:$0xff]
        %v814 = vld [vmem:[%s258 + $0xf88] sm:$0xff]
        %v815 = vld [vmem:[%s258 + $0xf90] sm:$0xff]
        %v816 = vld [vmem:[%s258 + $0xf98] sm:$0xff]
        %v817 = vld [vmem:[%s258 + $0xfa0] sm:$0xff]
        %v818 = vld [vmem:[%s258 + $0xfa8] sm:$0xff]
        %v819 = vld [vmem:[%s258 + $0xfb0] sm:$0xff]
        %v820 = vld [vmem:[%s258 + $0xfb8] sm:$0xff]
        %v821 = vld [vmem:[%s258 + $0xfc0] sm:$0xff]
        %v822 = vld [vmem:[%s258 + $0xfc8] sm:$0xff]
        %v823 = vld [vmem:[%s258 + $0xfd0] sm:$0xff]
        %v824 = vld [vmem:[%s258 + $0xfd8] sm:$0xff]
        %v825 = vld [vmem:[%s258 + $0xfe0] sm:$0xff]
        %v826 = vld [vmem:[%s258 + $0xfe8] sm:$0xff]
        %v827 = vld [vmem:[%s258 + $0xff0] sm:$0xff]
        %v828 = vld [vmem:[%s258 + $0xff8] sm:$0xff]
        %v829 = vld [vmem:[%s258 + $0x1000] sm:$0xff]
        %v830 = vld [vmem:[%s258 + $0x1008] sm:$0xff]
        %v831 = vld [vmem:[%s258 + $0x1010] sm:$0xff]
        %v832 = vld [vmem:[%s258 + $0x1018] sm:$0xff]
        %v833 = vld [vmem:[%s258 + $0x1020] sm:$0xff]
        %v834 = vld [vmem:[%s258 + $0x1028] sm:$0xff]
        %v835 = vld [vmem:[%s258 + $0x1030] sm:$0xff]
        %v836 = vld [vmem:[%s258 + $0x1038] sm:$0xff]
        %v837 = vld [vmem:[%s258 + $0x1040] sm:$0xff]
        %v838 = vld [vmem:[%s258 + $0x1048] sm:$0xff]
        %v839 = vld [vmem:[%s258 + $0x1050] sm:$0xff]
        %v840 = vld [vmem:[%s258 + $0x1058] sm:$0xff]
        %v841 = vld [vmem:[%s258 + $0x1060] sm:$0xff]
        %v842 = vld [vmem:[%s258 + $0x1068] sm:$0xff]
        %v843 = vld [vmem:[%s258 + $0x1070] sm:$0xff]
        %v844 = vld [vmem:[%s258 + $0x1078] sm:$0xff]
        %v845 = vld [vmem:[%s258 + $0x1080] sm:$0xff]
        %v846 = vld [vmem:[%s258 + $0x1088] sm:$0xff]
        %v847 = vld [vmem:[%s258 + $0x1090] sm:$0xff]
        %v848 = vld [vmem:[%s258 + $0x1098] sm:$0xff]
        %v849 = vld [vmem:[%s258 + $0x10a0] sm:$0xff]
        %v850 = vld [vmem:[%s258 + $0x10a8] sm:$0xff]
        %v851 = vld [vmem:[%s258 + $0x10b0] sm:$0xff]
        %v852 = vld [vmem:[%s258 + $0x10b8] sm:$0xff]
        %v853 = vld [vmem:[%s258 + $0x10c0] sm:$0xff]
        %v854 = vld [vmem:[%s258 + $0x10c8] sm:$0xff]
        %v855 = vld [vmem:[%s258 + $0x10d0] sm:$0xff]
        %v856 = vld [vmem:[%s258 + $0x10d8] sm:$0xff]
        %v857 = vld [vmem:[%s258 + $0x10e0] sm:$0xff]
        %v858 = vld [vmem:[%s258 + $0x10e8] sm:$0xff]
        %v859 = vld [vmem:[%s258 + $0x10f0] sm:$0xff]
        %v860 = vld [vmem:[%s258 + $0x10f8] sm:$0xff]
        %v861 = vld [vmem:[%s258 + $0x1100] sm:$0xff]
        %v862 = vld [vmem:[%s258 + $0x1108] sm:$0xff]
        %v863 = vld [vmem:[%s258 + $0x1110] sm:$0xff]
        %v864 = vld [vmem:[%s258 + $0x1118] sm:$0xff]
        %v865 = vld [vmem:[%s258 + $0x1120] sm:$0xff]
        %v866 = vld [vmem:[%s258 + $0x1128] sm:$0xff]
        %v867 = vld [vmem:[%s258 + $0x1130] sm:$0xff]
        %v868 = vld [vmem:[%s258 + $0x1138] sm:$0xff]
        %v869 = vld [vmem:[%s258 + $0x1140] sm:$0xff]
        %v870 = vld [vmem:[%s258 + $0x1148] sm:$0xff]
        %v871 = vld [vmem:[%s258 + $0x1150] sm:$0xff]
        %v872 = vld [vmem:[%s258 + $0x1158] sm:$0xff]
        %v873 = vld [vmem:[%s258 + $0x1160] sm:$0xff]
        %v874 = vld [vmem:[%s258 + $0x1168] sm:$0xff]
        %v875 = vld [vmem:[%s258 + $0x1170] sm:$0xff]
        %v876 = vld [vmem:[%s258 + $0x1178] sm:$0xff]
        %v877 = vld [vmem:[%s258 + $0x1180] sm:$0xff]
        %v878 = vld [vmem:[%s258 + $0x1188] sm:$0xff]
        %v879 = vld [vmem:[%s258 + $0x1190] sm:$0xff]
        %v880 = vld [vmem:[%s258 + $0x1198] sm:$0xff]
        %v881 = vld [vmem:[%s258 + $0x11a0] sm:$0xff]
        %v882 = vld [vmem:[%s258 + $0x11a8] sm:$0xff]
        %v883 = vld [vmem:[%s258 + $0x11b0] sm:$0xff]
        %v884 = vld [vmem:[%s258 + $0x11b8] sm:$0xff]
        %v885 = vld [vmem:[%s258 + $0x11c0] sm:$0xff]
        %v886 = vld [vmem:[%s258 + $0x11c8] sm:$0xff]
        %v887 = vld [vmem:[%s258 + $0x11d0] sm:$0xff]
        %v888 = vld [vmem:[%s258 + $0x11d8] sm:$0xff]
        %v889 = vld [vmem:[%s258 + $0x11e0] sm:$0xff]
        %v890 = vld [vmem:[%s258 + $0x11e8] sm:$0xff]
        %v891 = vld [vmem:[%s258 + $0x11f0] sm:$0xff]
        %v892 = vld [vmem:[%s258 + $0x11f8] sm:$0xff]
        %v893 = vld [vmem:[%s258 + $0x1200] sm:$0xff]
        %v894 = vld [vmem:[%s258 + $0x1208] sm:$0xff]
        %v895 = vld [vmem:[%s258 + $0x1210] sm:$0xff]
        %v896 = vld [vmem:[%s258 + $0x1218] sm:$0xff]
        %v897 = vld [vmem:[%s258 + $0x1220] sm:$0xff]
        %v898 = vld [vmem:[%s258 + $0x1228] sm:$0xff]
        %v899 = vld [vmem:[%s258 + $0x1230] sm:$0xff]
        %v900 = vld [vmem:[%s258 + $0x1238] sm:$0xff]
        %v901 = vld [vmem:[%s258 + $0x1240] sm:$0xff]
        %v902 = vld [vmem:[%s258 + $0x1248] sm:$0xff]
        %v903 = vld [vmem:[%s258 + $0x1250] sm:$0xff]
        %v904 = vld [vmem:[%s258 + $0x1258] sm:$0xff]
        %v905 = vld [vmem:[%s258 + $0x1260] sm:$0xff]
        %v906 = vld [vmem:[%s258 + $0x1268] sm:$0xff]
        %v907 = vld [vmem:[%s258 + $0x1270] sm:$0xff]
        %v908 = vld [vmem:[%s258 + $0x1278] sm:$0xff]
        %v909 = vld [vmem:[%s258 + $0x1280] sm:$0xff]
        %v910 = vld [vmem:[%s258 + $0x1288] sm:$0xff]
        %v911 = vld [vmem:[%s258 + $0x1290] sm:$0xff]
        %v912 = vld [vmem:[%s258 + $0x1298] sm:$0xff]
        %v913 = vld [vmem:[%s258 + $0x12a0] sm:$0xff]
        %v914 = vld [vmem:[%s258 + $0x12a8] sm:$0xff]
        %v915 = vld [vmem:[%s258 + $0x12b0] sm:$0xff]
        %v916 = vld [vmem:[%s258 + $0x12b8] sm:$0xff]
        %v917 = vld [vmem:[%s258 + $0x12c0] sm:$0xff]
        %v918 = vld [vmem:[%s258 + $0x12c8] sm:$0xff]
        %v919 = vld [vmem:[%s258 + $0x12d0] sm:$0xff]
        %v920 = vld [vmem:[%s258 + $0x12d8] sm:$0xff]
        %v921 = vld [vmem:[%s258 + $0x12e0] sm:$0xff]
        %v922 = vld [vmem:[%s258 + $0x12e8] sm:$0xff]
        %v923 = vld [vmem:[%s258 + $0x12f0] sm:$0xff]
        %v924 = vld [vmem:[%s258 + $0x12f8] sm:$0xff]
        %v925 = vld [vmem:[%s258 + $0x1300] sm:$0xff]
        %v926 = vld [vmem:[%s258 + $0x1308] sm:$0xff]
        %v927 = vld [vmem:[%s258 + $0x1310] sm:$0xff]
        %v928 = vld [vmem:[%s258 + $0x1318] sm:$0xff]
        %v929 = vld [vmem:[%s258 + $0x1320] sm:$0xff]
        %v930 = vld [vmem:[%s258 + $0x1328] sm:$0xff]
        %v931 = vld [vmem:[%s258 + $0x1330] sm:$0xff]
        %v932 = vld [vmem:[%s258 + $0x1338] sm:$0xff]
        %v933 = vld [vmem:[%s258 + $0x1340] sm:$0xff]
        %v934 = vld [vmem:[%s258 + $0x1348] sm:$0xff]
        %v935 = vld [vmem:[%s258 + $0x1350] sm:$0xff]
        %v936 = vld [vmem:[%s258 + $0x1358] sm:$0xff]
        %v937 = vld [vmem:[%s258 + $0x1360] sm:$0xff]
        %v938 = vld [vmem:[%s258 + $0x1368] sm:$0xff]
        %v939 = vld [vmem:[%s258 + $0x1370] sm:$0xff]
        %v940 = vld [vmem:[%s258 + $0x1378] sm:$0xff]
        %v941 = vld [vmem:[%s258 + $0x1380] sm:$0xff]
        %v942 = vld [vmem:[%s258 + $0x1388] sm:$0xff]
        %v943 = vld [vmem:[%s258 + $0x1390] sm:$0xff]
        %v944 = vld [vmem:[%s258 + $0x1398] sm:$0xff]
        %v945 = vld [vmem:[%s258 + $0x13a0] sm:$0xff]
        %v946 = vld [vmem:[%s258 + $0x13a8] sm:$0xff]
        %v947 = vld [vmem:[%s258 + $0x13b0] sm:$0xff]
        %v948 = vld [vmem:[%s258 + $0x13b8] sm:$0xff]
        %v949 = vld [vmem:[%s258 + $0x13c0] sm:$0xff]
        %v950 = vld [vmem:[%s258 + $0x13c8] sm:$0xff]
        %v951 = vld [vmem:[%s258 + $0x13d0] sm:$0xff]
        %v952 = vld [vmem:[%s258 + $0x13d8] sm:$0xff]
        %v953 = vld [vmem:[%s258 + $0x13e0] sm:$0xff]
        %v954 = vld [vmem:[%s258 + $0x13e8] sm:$0xff]
        %v955 = vld [vmem:[%s258 + $0x13f0] sm:$0xff]
        %v956 = vld [vmem:[%s258 + $0x13f8] sm:$0xff]
        %v957 = vld [vmem:[%s258 + $0x1400] sm:$0xff]
        %v958 = vld [vmem:[%s258 + $0x1408] sm:$0xff]
        %v959 = vld [vmem:[%s258 + $0x1410] sm:$0xff]
        %v960 = vld [vmem:[%s258 + $0x1418] sm:$0xff]
        %v961 = vld [vmem:[%s258 + $0x1420] sm:$0xff]
        %v962 = vld [vmem:[%s258 + $0x1428] sm:$0xff]
        %v963 = vld [vmem:[%s258 + $0x1430] sm:$0xff]
        %v964 = vld [vmem:[%s258 + $0x1438] sm:$0xff]
        %v965 = vld [vmem:[%s258 + $0x1440] sm:$0xff]
        %v966 = vld [vmem:[%s258 + $0x1448] sm:$0xff]
        %v967 = vld [vmem:[%s258 + $0x1450] sm:$0xff]
        %v968 = vld [vmem:[%s258 + $0x1458] sm:$0xff]
        %v969 = vld [vmem:[%s258 + $0x1460] sm:$0xff]
        %v970 = vld [vmem:[%s258 + $0x1468] sm:$0xff]
        %v971 = vld [vmem:[%s258 + $0x1470] sm:$0xff]
        %v972 = vld [vmem:[%s258 + $0x1478] sm:$0xff]
        %v973 = vld [vmem:[%s258 + $0x1480] sm:$0xff]
        %v974 = vld [vmem:[%s258 + $0x1488] sm:$0xff]
        %v975 = vld [vmem:[%s258 + $0x1490] sm:$0xff]
        %v976 = vld [vmem:[%s258 + $0x1498] sm:$0xff]
        %v977 = vld [vmem:[%s258 + $0x14a0] sm:$0xff]
        %v978 = vld [vmem:[%s258 + $0x14a8] sm:$0xff]
        %v979 = vld [vmem:[%s258 + $0x14b0] sm:$0xff]
        %v980 = vld [vmem:[%s258 + $0x14b8] sm:$0xff]
        %v981 = vld [vmem:[%s258 + $0x14c0] sm:$0xff]
        %v982 = vld [vmem:[%s258 + $0x14c8] sm:$0xff]
        %v983 = vld [vmem:[%s258 + $0x14d0] sm:$0xff]
        %v984 = vld [vmem:[%s258 + $0x14d8] sm:$0xff]
        %v985 = vld [vmem:[%s258 + $0x14e0] sm:$0xff]
        %v986 = vld [vmem:[%s258 + $0x14e8] sm:$0xff]
        %v987 = vld [vmem:[%s258 + $0x14f0] sm:$0xff]
        %v988 = vld [vmem:[%s258 + $0x14f8] sm:$0xff]
        %v989 = vld [vmem:[%s258 + $0x1500] sm:$0xff]
        %v990 = vld [vmem:[%s258 + $0x1508] sm:$0xff]
        %v991 = vld [vmem:[%s258 + $0x1510] sm:$0xff]
        %v992 = vld [vmem:[%s258 + $0x1518] sm:$0xff]
        %v993 = vld [vmem:[%s258 + $0x1520] sm:$0xff]
        %v994 = vld [vmem:[%s258 + $0x1528] sm:$0xff]
        %v995 = vld [vmem:[%s258 + $0x1530] sm:$0xff]
        %v996 = vld [vmem:[%s258 + $0x1538] sm:$0xff]
        %v997 = vld [vmem:[%s258 + $0x1540] sm:$0xff]
        %v998 = vld [vmem:[%s258 + $0x1548] sm:$0xff]
        %v999 = vld [vmem:[%s258 + $0x1550] sm:$0xff]
        %v1000 = vld [vmem:[%s258 + $0x1558] sm:$0xff]
        %v1001 = vld [vmem:[%s258 + $0x1560] sm:$0xff]
        %v1002 = vld [vmem:[%s258 + $0x1568] sm:$0xff]
        %v1003 = vld [vmem:[%s258 + $0x1570] sm:$0xff]
        %v1004 = vld [vmem:[%s258 + $0x1578] sm:$0xff]
        %v1005 = vld [vmem:[%s258 + $0x1580] sm:$0xff]
        %v1006 = vld [vmem:[%s258 + $0x1588] sm:$0xff]
        %v1007 = vld [vmem:[%s258 + $0x1590] sm:$0xff]
        %v1008 = vld [vmem:[%s258 + $0x1598] sm:$0xff]
        %v1009 = vld [vmem:[%s258 + $0x15a0] sm:$0xff]
        %v1010 = vld [vmem:[%s258 + $0x15a8] sm:$0xff]
        %v1011 = vld [vmem:[%s258 + $0x15b0] sm:$0xff]
        %v1012 = vld [vmem:[%s258 + $0x15b8] sm:$0xff]
        %v1013 = vld [vmem:[%s258 + $0x15c0] sm:$0xff]
        %v1014 = vld [vmem:[%s258 + $0x15c8] sm:$0xff]
        %v1015 = vld [vmem:[%s258 + $0x15d0] sm:$0xff]
        %v1016 = vld [vmem:[%s258 + $0x15d8] sm:$0xff]
        %v1017 = vld [vmem:[%s258 + $0x15e0] sm:$0xff]
        %v1018 = vld [vmem:[%s258 + $0x15e8] sm:$0xff]
        %v1019 = vld [vmem:[%s258 + $0x15f0] sm:$0xff]
        %v1020 = vld [vmem:[%s258 + $0x15f8] sm:$0xff]
        %v1021 = vld [vmem:[%s258 + $0x1600] sm:$0xff]
        %v1022 = vld [vmem:[%s258 + $0x1608] sm:$0xff]
        %v1023 = vld [vmem:[%s258 + $0x1610] sm:$0xff]
        %v1024 = vld [vmem:[%s258 + $0x1618] sm:$0xff]
        %v1025 = vld [vmem:[%s258 + $0x1620] sm:$0xff]
        %v1026 = vld [vmem:[%s258 + $0x1628] sm:$0xff]
        %v1027 = vld [vmem:[%s258 + $0x1630] sm:$0xff]
        %v1028 = vld [vmem:[%s258 + $0x1638] sm:$0xff]
        %v1029 = vld [vmem:[%s258 + $0x1640] sm:$0xff]
        %v1030 = vld [vmem:[%s258 + $0x1648] sm:$0xff]
        %v1031 = vld [vmem:[%s258 + $0x1650] sm:$0xff]
        %v1032 = vld [vmem:[%s258 + $0x1658] sm:$0xff]
        %v1033 = vld [vmem:[%s258 + $0x1660] sm:$0xff]
        %v1034 = vld [vmem:[%s258 + $0x1668] sm:$0xff]
        %v1035 = vld [vmem:[%s258 + $0x1670] sm:$0xff]
        %v1036 = vld [vmem:[%s258 + $0x1678] sm:$0xff]
        %v1037 = vld [vmem:[%s258 + $0x1680] sm:$0xff]
        %v1038 = vld [vmem:[%s258 + $0x1688] sm:$0xff]
        %v1039 = vld [vmem:[%s258 + $0x1690] sm:$0xff]
        %v1040 = vld [vmem:[%s258 + $0x1698] sm:$0xff]
        %v1041 = vld [vmem:[%s258 + $0x16a0] sm:$0xff]
        %v1042 = vld [vmem:[%s258 + $0x16a8] sm:$0xff]
        %v1043 = vld [vmem:[%s258 + $0x16b0] sm:$0xff]
        %v1044 = vld [vmem:[%s258 + $0x16b8] sm:$0xff]
        %v1045 = vld [vmem:[%s258 + $0x16c0] sm:$0xff]
        %v1046 = vld [vmem:[%s258 + $0x16c8] sm:$0xff]
        %v1047 = vld [vmem:[%s258 + $0x16d0] sm:$0xff]
        %v1048 = vld [vmem:[%s258 + $0x16d8] sm:$0xff]
        %v1049 = vld [vmem:[%s258 + $0x16e0] sm:$0xff]
        %v1050 = vld [vmem:[%s258 + $0x16e8] sm:$0xff]
        %v1051 = vld [vmem:[%s258 + $0x16f0] sm:$0xff]
        %v1052 = vld [vmem:[%s258 + $0x16f8] sm:$0xff]
        %v1053 = vld [vmem:[%s258 + $0x1700] sm:$0xff]
        %v1054 = vld [vmem:[%s258 + $0x1708] sm:$0xff]
        %v1055 = vld [vmem:[%s258 + $0x1710] sm:$0xff]
        %v1056 = vld [vmem:[%s258 + $0x1718] sm:$0xff]
        %v1057 = vld [vmem:[%s258 + $0x1720] sm:$0xff]
        %v1058 = vld [vmem:[%s258 + $0x1728] sm:$0xff]
        %v1059 = vld [vmem:[%s258 + $0x1730] sm:$0xff]
        %v1060 = vld [vmem:[%s258 + $0x1738] sm:$0xff]
        %v1061 = vld [vmem:[%s258 + $0x1740] sm:$0xff]
        %v1062 = vld [vmem:[%s258 + $0x1748] sm:$0xff]
        %v1063 = vld [vmem:[%s258 + $0x1750] sm:$0xff]
        %v1064 = vld [vmem:[%s258 + $0x1758] sm:$0xff]
        %v1065 = vld [vmem:[%s258 + $0x1760] sm:$0xff]
        %v1066 = vld [vmem:[%s258 + $0x1768] sm:$0xff]
        %v1067 = vld [vmem:[%s258 + $0x1770] sm:$0xff]
        %v1068 = vld [vmem:[%s258 + $0x1778] sm:$0xff]
        %v1069 = vld [vmem:[%s258 + $0x1780] sm:$0xff]
        %v1070 = vld [vmem:[%s258 + $0x1788] sm:$0xff]
        %v1071 = vld [vmem:[%s258 + $0x1790] sm:$0xff]
        %v1072 = vld [vmem:[%s258 + $0x1798] sm:$0xff]
        %v1073 = vld [vmem:[%s258 + $0x17a0] sm:$0xff]
        %v1074 = vld [vmem:[%s258 + $0x17a8] sm:$0xff]
        %v1075 = vld [vmem:[%s258 + $0x17b0] sm:$0xff]
        %v1076 = vld [vmem:[%s258 + $0x17b8] sm:$0xff]
        %v1077 = vld [vmem:[%s258 + $0x17c0] sm:$0xff]
        %v1078 = vld [vmem:[%s258 + $0x17c8] sm:$0xff]
        %v1079 = vld [vmem:[%s258 + $0x17d0] sm:$0xff]
        %v1080 = vld [vmem:[%s258 + $0x17d8] sm:$0xff]
        %v1081 = vld [vmem:[%s258 + $0x17e0] sm:$0xff]
        %v1082 = vld [vmem:[%s258 + $0x17e8] sm:$0xff]
        %v1083 = vld [vmem:[%s258 + $0x17f0] sm:$0xff]
        %v1084 = vld [vmem:[%s258 + $0x17f8] sm:$0xff]
        %v1097 = vunpack.c.l.b16 %v305
        %v1098 = vunpack.c.h.b16 %v305
        %v1099 = vunpack.c.l.b16 %v306
        %v1100 = vunpack.c.h.b16 %v306
        %v1101 = vunpack.c.l.b16 %v307
        %v1102 = vunpack.c.h.b16 %v307
        %v1103 = vunpack.c.l.b16 %v308
        %v1104 = vunpack.c.h.b16 %v308
        %v1105 = vunpack.c.l.b16 %v309
        %v1106 = vunpack.c.h.b16 %v309
        %v1107 = vunpack.c.l.b16 %v310
        %v1108 = vunpack.c.h.b16 %v310
        %v1109 = vunpack.c.l.b16 %v311
        %v1110 = vunpack.c.h.b16 %v311
        %v1111 = vunpack.c.l.b16 %v312
        %v1112 = vunpack.c.h.b16 %v312
        %v1113 = vunpack.c.l.b16 %v313
        %v1114 = vunpack.c.h.b16 %v313
        %v1115 = vunpack.c.l.b16 %v314
        %v1116 = vunpack.c.h.b16 %v314
        %v1117 = vunpack.c.l.b16 %v315
        %v1118 = vunpack.c.h.b16 %v315
        %v1119 = vunpack.c.l.b16 %v316
        %v1120 = vunpack.c.h.b16 %v316
        %v1121 = vpack.c.b16 %v1097, %v1097
        %v1122 = vpack.c.b16 %v1098, %v1098
        %v1123 = vpack.c.b16 %v1099, %v1099
        %v1124 = vpack.c.b16 %v1100, %v1100
        %v1125 = vpack.c.b16 %v1101, %v1101
        %v1126 = vpack.c.b16 %v1102, %v1102
        %v1127 = vpack.c.b16 %v1103, %v1103
        %v1128 = vpack.c.b16 %v1104, %v1104
        %v1129 = vpack.c.b16 %v1105, %v1105
        %v1130 = vpack.c.b16 %v1106, %v1106
        %v1131 = vpack.c.b16 %v1107, %v1107
        %v1132 = vpack.c.b16 %v1108, %v1108
        %v1133 = vpack.c.b16 %v1109, %v1109
        %v1134 = vpack.c.b16 %v1110, %v1110
        %v1135 = vpack.c.b16 %v1111, %v1111
        %v1136 = vpack.c.b16 %v1112, %v1112
        %v1137 = vpack.c.b16 %v1113, %v1113
        %v1138 = vpack.c.b16 %v1114, %v1114
        %v1139 = vpack.c.b16 %v1115, %v1115
        %v1140 = vpack.c.b16 %v1116, %v1116
        %v1141 = vpack.c.b16 %v1117, %v1117
        %v1142 = vpack.c.b16 %v1118, %v1118
        %v1143 = vpack.c.b16 %v1119, %v1119
        %v1144 = vpack.c.b16 %v1120, %v1120
        %v1937 = vunpack.c.l.b16 %v317
        %v1938 = vunpack.c.h.b16 %v317
        %v1939 = vunpack.c.l.b16 %v318
        %v1940 = vunpack.c.h.b16 %v318
        %v1941 = vunpack.c.l.b16 %v319
        %v1942 = vunpack.c.h.b16 %v319
        %v1943 = vunpack.c.l.b16 %v320
        %v1944 = vunpack.c.h.b16 %v320
        %v1945 = vunpack.c.l.b16 %v321
        %v1946 = vunpack.c.h.b16 %v321
        %v1947 = vunpack.c.l.b16 %v322
        %v1948 = vunpack.c.h.b16 %v322
        %v1949 = vunpack.c.l.b16 %v323
        %v1950 = vunpack.c.h.b16 %v323
        %v1951 = vunpack.c.l.b16 %v324
        %v1952 = vunpack.c.h.b16 %v324
        %v1953 = vunpack.c.l.b16 %v325
        %v1954 = vunpack.c.h.b16 %v325
        %v1955 = vunpack.c.l.b16 %v326
        %v1956 = vunpack.c.h.b16 %v326
        %v1957 = vunpack.c.l.b16 %v327
        %v1958 = vunpack.c.h.b16 %v327
        %v1959 = vunpack.c.l.b16 %v328
        %v1960 = vunpack.c.h.b16 %v328
        %v1961 = vunpack.c.l.b16 %v329
        %v1962 = vunpack.c.h.b16 %v329
        %v1963 = vunpack.c.l.b16 %v330
        %v1964 = vunpack.c.h.b16 %v330
        %v1965 = vunpack.c.l.b16 %v331
        %v1966 = vunpack.c.h.b16 %v331
        %v1967 = vunpack.c.l.b16 %v332
        %v1968 = vunpack.c.h.b16 %v332
        %v1969 = vunpack.c.l.b16 %v333
        %v1970 = vunpack.c.h.b16 %v333
        %v1971 = vunpack.c.l.b16 %v334
        %v1972 = vunpack.c.h.b16 %v334
        %v1973 = vunpack.c.l.b16 %v335
        %v1974 = vunpack.c.h.b16 %v335
        %v1975 = vunpack.c.l.b16 %v336
        %v1976 = vunpack.c.h.b16 %v336
        %v1977 = vunpack.c.l.b16 %v337
        %v1978 = vunpack.c.h.b16 %v337
        %v1979 = vunpack.c.l.b16 %v338
        %v1980 = vunpack.c.h.b16 %v338
        %v1981 = vunpack.c.l.b16 %v339
        %v1982 = vunpack.c.h.b16 %v339
        %v1983 = vunpack.c.l.b16 %v340
        %v1984 = vunpack.c.h.b16 %v340
        %v1985 = vunpack.c.l.b16 %v341
        %v1986 = vunpack.c.h.b16 %v341
        %v1987 = vunpack.c.l.b16 %v342
        %v1988 = vunpack.c.h.b16 %v342
        %v1989 = vunpack.c.l.b16 %v343
        %v1990 = vunpack.c.h.b16 %v343
        %v1991 = vunpack.c.l.b16 %v344
        %v1992 = vunpack.c.h.b16 %v344
        %v1993 = vunpack.c.l.b16 %v345
        %v1994 = vunpack.c.h.b16 %v345
        %v1995 = vunpack.c.l.b16 %v346
        %v1996 = vunpack.c.h.b16 %v346
        %v1997 = vunpack.c.l.b16 %v347
        %v1998 = vunpack.c.h.b16 %v347
        %v1999 = vunpack.c.l.b16 %v348
        %v2000 = vunpack.c.h.b16 %v348
        %v2001 = vunpack.c.l.b16 %v349
        %v2002 = vunpack.c.h.b16 %v349
        %v2003 = vunpack.c.l.b16 %v350
        %v2004 = vunpack.c.h.b16 %v350
        %v2005 = vunpack.c.l.b16 %v351
        %v2006 = vunpack.c.h.b16 %v351
        %v2007 = vunpack.c.l.b16 %v352
        %v2008 = vunpack.c.h.b16 %v352
        %v2009 = vunpack.c.l.b16 %v353
        %v2010 = vunpack.c.h.b16 %v353
        %v2011 = vunpack.c.l.b16 %v354
        %v2012 = vunpack.c.h.b16 %v354
        %v2013 = vunpack.c.l.b16 %v355
        %v2014 = vunpack.c.h.b16 %v355
        %v2015 = vunpack.c.l.b16 %v356
        %v2016 = vunpack.c.h.b16 %v356
        %v2017 = vunpack.c.l.b16 %v357
        %v2018 = vunpack.c.h.b16 %v357
        %v2019 = vunpack.c.l.b16 %v358
        %v2020 = vunpack.c.h.b16 %v358
        %v2021 = vunpack.c.l.b16 %v359
        %v2022 = vunpack.c.h.b16 %v359
        %v2023 = vunpack.c.l.b16 %v360
        %v2024 = vunpack.c.h.b16 %v360
        %v2025 = vunpack.c.l.b16 %v361
        %v2026 = vunpack.c.h.b16 %v361
        %v2027 = vunpack.c.l.b16 %v362
        %v2028 = vunpack.c.h.b16 %v362
        %v2029 = vunpack.c.l.b16 %v363
        %v2030 = vunpack.c.h.b16 %v363
        %v2031 = vunpack.c.l.b16 %v364
        %v2032 = vunpack.c.h.b16 %v364
        %v2033 = vunpack.c.l.b16 %v365
        %v2034 = vunpack.c.h.b16 %v365
        %v2035 = vunpack.c.l.b16 %v366
        %v2036 = vunpack.c.h.b16 %v366
        %v2037 = vunpack.c.l.b16 %v367
        %v2038 = vunpack.c.h.b16 %v367
        %v2039 = vunpack.c.l.b16 %v368
        %v2040 = vunpack.c.h.b16 %v368
        %v2041 = vunpack.c.l.b16 %v369
        %v2042 = vunpack.c.h.b16 %v369
        %v2043 = vunpack.c.l.b16 %v370
        %v2044 = vunpack.c.h.b16 %v370
        %v2045 = vunpack.c.l.b16 %v371
        %v2046 = vunpack.c.h.b16 %v371
        %v2047 = vunpack.c.l.b16 %v372
        %v2048 = vunpack.c.h.b16 %v372
        %v2049 = vunpack.c.l.b16 %v373
        %v2050 = vunpack.c.h.b16 %v373
        %v2051 = vunpack.c.l.b16 %v374
        %v2052 = vunpack.c.h.b16 %v374
        %v2053 = vunpack.c.l.b16 %v375
        %v2054 = vunpack.c.h.b16 %v375
        %v2055 = vunpack.c.l.b16 %v376
        %v2056 = vunpack.c.h.b16 %v376
        %v2057 = vunpack.c.l.b16 %v377
        %v2058 = vunpack.c.h.b16 %v377
        %v2059 = vunpack.c.l.b16 %v378
        %v2060 = vunpack.c.h.b16 %v378
        %v2061 = vunpack.c.l.b16 %v379
        %v2062 = vunpack.c.h.b16 %v379
        %v2063 = vunpack.c.l.b16 %v380
        %v2064 = vunpack.c.h.b16 %v380
        %v2065 = vunpack.c.l.b16 %v381
        %v2066 = vunpack.c.h.b16 %v381
        %v2067 = vunpack.c.l.b16 %v382
        %v2068 = vunpack.c.h.b16 %v382
        %v2069 = vunpack.c.l.b16 %v383
        %v2070 = vunpack.c.h.b16 %v383
        %v2071 = vunpack.c.l.b16 %v384
        %v2072 = vunpack.c.h.b16 %v384
        %v2073 = vunpack.c.l.b16 %v385
        %v2074 = vunpack.c.h.b16 %v385
        %v2075 = vunpack.c.l.b16 %v386
        %v2076 = vunpack.c.h.b16 %v386
        %v2077 = vunpack.c.l.b16 %v387
        %v2078 = vunpack.c.h.b16 %v387
        %v2079 = vunpack.c.l.b16 %v388
        %v2080 = vunpack.c.h.b16 %v388
        %v2081 = vunpack.c.l.b16 %v389
        %v2082 = vunpack.c.h.b16 %v389
        %v2083 = vunpack.c.l.b16 %v390
        %v2084 = vunpack.c.h.b16 %v390
        %v2085 = vunpack.c.l.b16 %v391
        %v2086 = vunpack.c.h.b16 %v391
        %v2087 = vunpack.c.l.b16 %v392
        %v2088 = vunpack.c.h.b16 %v392
        %v2089 = vunpack.c.l.b16 %v393
        %v2090 = vunpack.c.h.b16 %v393
        %v2091 = vunpack.c.l.b16 %v394
        %v2092 = vunpack.c.h.b16 %v394
        %v2093 = vunpack.c.l.b16 %v395
        %v2094 = vunpack.c.h.b16 %v395
        %v2095 = vunpack.c.l.b16 %v396
        %v2096 = vunpack.c.h.b16 %v396
        %v2097 = vunpack.c.l.b16 %v397
        %v2098 = vunpack.c.h.b16 %v397
        %v2099 = vunpack.c.l.b16 %v398
        %v2100 = vunpack.c.h.b16 %v398
        %v2101 = vunpack.c.l.b16 %v399
        %v2102 = vunpack.c.h.b16 %v399
        %v2103 = vunpack.c.l.b16 %v400
        %v2104 = vunpack.c.h.b16 %v400
        %v2105 = vunpack.c.l.b16 %v401
        %v2106 = vunpack.c.h.b16 %v401
        %v2107 = vunpack.c.l.b16 %v402
        %v2108 = vunpack.c.h.b16 %v402
        %v2109 = vunpack.c.l.b16 %v403
        %v2110 = vunpack.c.h.b16 %v403
        %v2111 = vunpack.c.l.b16 %v404
        %v2112 = vunpack.c.h.b16 %v404
        %v2113 = vunpack.c.l.b16 %v405
        %v2114 = vunpack.c.h.b16 %v405
        %v2115 = vunpack.c.l.b16 %v406
        %v2116 = vunpack.c.h.b16 %v406
        %v2117 = vunpack.c.l.b16 %v407
        %v2118 = vunpack.c.h.b16 %v407
        %v2119 = vunpack.c.l.b16 %v408
        %v2120 = vunpack.c.h.b16 %v408
        %v2121 = vunpack.c.l.b16 %v409
        %v2122 = vunpack.c.h.b16 %v409
        %v2123 = vunpack.c.l.b16 %v410
        %v2124 = vunpack.c.h.b16 %v410
        %v2125 = vunpack.c.l.b16 %v411
        %v2126 = vunpack.c.h.b16 %v411
        %v2127 = vunpack.c.l.b16 %v412
        %v2128 = vunpack.c.h.b16 %v412
        %v2129 = vunpack.c.l.b16 %v413
        %v2130 = vunpack.c.h.b16 %v413
        %v2131 = vunpack.c.l.b16 %v414
        %v2132 = vunpack.c.h.b16 %v414
        %v2133 = vunpack.c.l.b16 %v415
        %v2134 = vunpack.c.h.b16 %v415
        %v2135 = vunpack.c.l.b16 %v416
        %v2136 = vunpack.c.h.b16 %v416
        %v2137 = vunpack.c.l.b16 %v417
        %v2138 = vunpack.c.h.b16 %v417
        %v2139 = vunpack.c.l.b16 %v418
        %v2140 = vunpack.c.h.b16 %v418
        %v2141 = vunpack.c.l.b16 %v419
        %v2142 = vunpack.c.h.b16 %v419
        %v2143 = vunpack.c.l.b16 %v420
        %v2144 = vunpack.c.h.b16 %v420
        %v2145 = vunpack.c.l.b16 %v421
        %v2146 = vunpack.c.h.b16 %v421
        %v2147 = vunpack.c.l.b16 %v422
        %v2148 = vunpack.c.h.b16 %v422
        %v2149 = vunpack.c.l.b16 %v423
        %v2150 = vunpack.c.h.b16 %v423
        %v2151 = vunpack.c.l.b16 %v424
        %v2152 = vunpack.c.h.b16 %v424
        %v2153 = vunpack.c.l.b16 %v425
        %v2154 = vunpack.c.h.b16 %v425
        %v2155 = vunpack.c.l.b16 %v426
        %v2156 = vunpack.c.h.b16 %v426
        %v2157 = vunpack.c.l.b16 %v427
        %v2158 = vunpack.c.h.b16 %v427
        %v2159 = vunpack.c.l.b16 %v428
        %v2160 = vunpack.c.h.b16 %v428
        %v2161 = vunpack.c.l.b16 %v429
        %v2162 = vunpack.c.h.b16 %v429
        %v2163 = vunpack.c.l.b16 %v430
        %v2164 = vunpack.c.h.b16 %v430
        %v2165 = vunpack.c.l.b16 %v431
        %v2166 = vunpack.c.h.b16 %v431
        %v2167 = vunpack.c.l.b16 %v432
        %v2168 = vunpack.c.h.b16 %v432
        %v2169 = vunpack.c.l.b16 %v433
        %v2170 = vunpack.c.h.b16 %v433
        %v2171 = vunpack.c.l.b16 %v434
        %v2172 = vunpack.c.h.b16 %v434
        %v2173 = vunpack.c.l.b16 %v435
        %v2174 = vunpack.c.h.b16 %v435
        %v2175 = vunpack.c.l.b16 %v436
        %v2176 = vunpack.c.h.b16 %v436
        %v2177 = vunpack.c.l.b16 %v437
        %v2178 = vunpack.c.h.b16 %v437
        %v2179 = vunpack.c.l.b16 %v438
        %v2180 = vunpack.c.h.b16 %v438
        %v2181 = vunpack.c.l.b16 %v439
        %v2182 = vunpack.c.h.b16 %v439
        %v2183 = vunpack.c.l.b16 %v440
        %v2184 = vunpack.c.h.b16 %v440
        %v2185 = vunpack.c.l.b16 %v441
        %v2186 = vunpack.c.h.b16 %v441
        %v2187 = vunpack.c.l.b16 %v442
        %v2188 = vunpack.c.h.b16 %v442
        %v2189 = vunpack.c.l.b16 %v443
        %v2190 = vunpack.c.h.b16 %v443
        %v2191 = vunpack.c.l.b16 %v444
        %v2192 = vunpack.c.h.b16 %v444
        %v2193 = vunpack.c.l.b16 %v445
        %v2194 = vunpack.c.h.b16 %v445
        %v2195 = vunpack.c.l.b16 %v446
        %v2196 = vunpack.c.h.b16 %v446
        %v2197 = vunpack.c.l.b16 %v447
        %v2198 = vunpack.c.h.b16 %v447
        %v2199 = vunpack.c.l.b16 %v448
        %v2200 = vunpack.c.h.b16 %v448
        %v2201 = vunpack.c.l.b16 %v449
        %v2202 = vunpack.c.h.b16 %v449
        %v2203 = vunpack.c.l.b16 %v450
        %v2204 = vunpack.c.h.b16 %v450
        %v2205 = vunpack.c.l.b16 %v451
        %v2206 = vunpack.c.h.b16 %v451
        %v2207 = vunpack.c.l.b16 %v452
        %v2208 = vunpack.c.h.b16 %v452
        %v2209 = vunpack.c.l.b16 %v453
        %v2210 = vunpack.c.h.b16 %v453
        %v2211 = vunpack.c.l.b16 %v454
        %v2212 = vunpack.c.h.b16 %v454
        %v2213 = vunpack.c.l.b16 %v455
        %v2214 = vunpack.c.h.b16 %v455
        %v2215 = vunpack.c.l.b16 %v456
        %v2216 = vunpack.c.h.b16 %v456
        %v2217 = vunpack.c.l.b16 %v457
        %v2218 = vunpack.c.h.b16 %v457
        %v2219 = vunpack.c.l.b16 %v458
        %v2220 = vunpack.c.h.b16 %v458
        %v2221 = vunpack.c.l.b16 %v459
        %v2222 = vunpack.c.h.b16 %v459
        %v2223 = vunpack.c.l.b16 %v460
        %v2224 = vunpack.c.h.b16 %v460
        %v2225 = vunpack.c.l.b16 %v461
        %v2226 = vunpack.c.h.b16 %v461
        %v2227 = vunpack.c.l.b16 %v462
        %v2228 = vunpack.c.h.b16 %v462
        %v2229 = vunpack.c.l.b16 %v463
        %v2230 = vunpack.c.h.b16 %v463
        %v2231 = vunpack.c.l.b16 %v464
        %v2232 = vunpack.c.h.b16 %v464
        %v2233 = vunpack.c.l.b16 %v465
        %v2234 = vunpack.c.h.b16 %v465
        %v2235 = vunpack.c.l.b16 %v466
        %v2236 = vunpack.c.h.b16 %v466
        %v2237 = vunpack.c.l.b16 %v467
        %v2238 = vunpack.c.h.b16 %v467
        %v2239 = vunpack.c.l.b16 %v468
        %v2240 = vunpack.c.h.b16 %v468
        %v2241 = vunpack.c.l.b16 %v469
        %v2242 = vunpack.c.h.b16 %v469
        %v2243 = vunpack.c.l.b16 %v470
        %v2244 = vunpack.c.h.b16 %v470
        %v2245 = vunpack.c.l.b16 %v471
        %v2246 = vunpack.c.h.b16 %v471
        %v2247 = vunpack.c.l.b16 %v472
        %v2248 = vunpack.c.h.b16 %v472
        %v2249 = vunpack.c.l.b16 %v473
        %v2250 = vunpack.c.h.b16 %v473
        %v2251 = vunpack.c.l.b16 %v474
        %v2252 = vunpack.c.h.b16 %v474
        %v2253 = vunpack.c.l.b16 %v475
        %v2254 = vunpack.c.h.b16 %v475
        %v2255 = vunpack.c.l.b16 %v476
        %v2256 = vunpack.c.h.b16 %v476
        %v2257 = vunpack.c.l.b16 %v477
        %v2258 = vunpack.c.h.b16 %v477
        %v2259 = vunpack.c.l.b16 %v478
        %v2260 = vunpack.c.h.b16 %v478
        %v2261 = vunpack.c.l.b16 %v479
        %v2262 = vunpack.c.h.b16 %v479
        %v2263 = vunpack.c.l.b16 %v480
        %v2264 = vunpack.c.h.b16 %v480
        %v2265 = vunpack.c.l.b16 %v481
        %v2266 = vunpack.c.h.b16 %v481
        %v2267 = vunpack.c.l.b16 %v482
        %v2268 = vunpack.c.h.b16 %v482
        %v2269 = vunpack.c.l.b16 %v483
        %v2270 = vunpack.c.h.b16 %v483
        %v2271 = vunpack.c.l.b16 %v484
        %v2272 = vunpack.c.h.b16 %v484
        %v2273 = vunpack.c.l.b16 %v485
        %v2274 = vunpack.c.h.b16 %v485
        %v2275 = vunpack.c.l.b16 %v486
        %v2276 = vunpack.c.h.b16 %v486
        %v2277 = vunpack.c.l.b16 %v487
        %v2278 = vunpack.c.h.b16 %v487
        %v2279 = vunpack.c.l.b16 %v488
        %v2280 = vunpack.c.h.b16 %v488
        %v2281 = vunpack.c.l.b16 %v489
        %v2282 = vunpack.c.h.b16 %v489
        %v2283 = vunpack.c.l.b16 %v490
        %v2284 = vunpack.c.h.b16 %v490
        %v2285 = vunpack.c.l.b16 %v491
        %v2286 = vunpack.c.h.b16 %v491
        %v2287 = vunpack.c.l.b16 %v492
        %v2288 = vunpack.c.h.b16 %v492
        %v2289 = vunpack.c.l.b16 %v493
        %v2290 = vunpack.c.h.b16 %v493
        %v2291 = vunpack.c.l.b16 %v494
        %v2292 = vunpack.c.h.b16 %v494
        %v2293 = vunpack.c.l.b16 %v495
        %v2294 = vunpack.c.h.b16 %v495
        %v2295 = vunpack.c.l.b16 %v496
        %v2296 = vunpack.c.h.b16 %v496
        %v2297 = vunpack.c.l.b16 %v497
        %v2298 = vunpack.c.h.b16 %v497
        %v2299 = vunpack.c.l.b16 %v498
        %v2300 = vunpack.c.h.b16 %v498
        %v2301 = vunpack.c.l.b16 %v499
        %v2302 = vunpack.c.h.b16 %v499
        %v2303 = vunpack.c.l.b16 %v500
        %v2304 = vunpack.c.h.b16 %v500
        %v2305 = vunpack.c.l.b16 %v501
        %v2306 = vunpack.c.h.b16 %v501
        %v2307 = vunpack.c.l.b16 %v502
        %v2308 = vunpack.c.h.b16 %v502
        %v2309 = vunpack.c.l.b16 %v503
        %v2310 = vunpack.c.h.b16 %v503
        %v2311 = vunpack.c.l.b16 %v504
        %v2312 = vunpack.c.h.b16 %v504
        %v2313 = vunpack.c.l.b16 %v505
        %v2314 = vunpack.c.h.b16 %v505
        %v2315 = vunpack.c.l.b16 %v506
        %v2316 = vunpack.c.h.b16 %v506
        %v2317 = vunpack.c.l.b16 %v507
        %v2318 = vunpack.c.h.b16 %v507
        %v2319 = vunpack.c.l.b16 %v508
        %v2320 = vunpack.c.h.b16 %v508
        %v2321 = vunpack.c.l.b16 %v509
        %v2322 = vunpack.c.h.b16 %v509
        %v2323 = vunpack.c.l.b16 %v510
        %v2324 = vunpack.c.h.b16 %v510
        %v2325 = vunpack.c.l.b16 %v511
        %v2326 = vunpack.c.h.b16 %v511
        %v2327 = vunpack.c.l.b16 %v512
        %v2328 = vunpack.c.h.b16 %v512
        %v2329 = vunpack.c.l.b16 %v513
        %v2330 = vunpack.c.h.b16 %v513
        %v2331 = vunpack.c.l.b16 %v514
        %v2332 = vunpack.c.h.b16 %v514
        %v2333 = vunpack.c.l.b16 %v515
        %v2334 = vunpack.c.h.b16 %v515
        %v2335 = vunpack.c.l.b16 %v516
        %v2336 = vunpack.c.h.b16 %v516
        %v2337 = vunpack.c.l.b16 %v517
        %v2338 = vunpack.c.h.b16 %v517
        %v2339 = vunpack.c.l.b16 %v518
        %v2340 = vunpack.c.h.b16 %v518
        %v2341 = vunpack.c.l.b16 %v519
        %v2342 = vunpack.c.h.b16 %v519
        %v2343 = vunpack.c.l.b16 %v520
        %v2344 = vunpack.c.h.b16 %v520
        %v2345 = vunpack.c.l.b16 %v521
        %v2346 = vunpack.c.h.b16 %v521
        %v2347 = vunpack.c.l.b16 %v522
        %v2348 = vunpack.c.h.b16 %v522
        %v2349 = vunpack.c.l.b16 %v523
        %v2350 = vunpack.c.h.b16 %v523
        %v2351 = vunpack.c.l.b16 %v524
        %v2352 = vunpack.c.h.b16 %v524
        %v2353 = vunpack.c.l.b16 %v525
        %v2354 = vunpack.c.h.b16 %v525
        %v2355 = vunpack.c.l.b16 %v526
        %v2356 = vunpack.c.h.b16 %v526
        %v2357 = vunpack.c.l.b16 %v527
        %v2358 = vunpack.c.h.b16 %v527
        %v2359 = vunpack.c.l.b16 %v528
        %v2360 = vunpack.c.h.b16 %v528
        %v2361 = vunpack.c.l.b16 %v529
        %v2362 = vunpack.c.h.b16 %v529
        %v2363 = vunpack.c.l.b16 %v530
        %v2364 = vunpack.c.h.b16 %v530
        %v2365 = vunpack.c.l.b16 %v531
        %v2366 = vunpack.c.h.b16 %v531
        %v2367 = vunpack.c.l.b16 %v532
        %v2368 = vunpack.c.h.b16 %v532
        %v2369 = vunpack.c.l.b16 %v533
        %v2370 = vunpack.c.h.b16 %v533
        %v2371 = vunpack.c.l.b16 %v534
        %v2372 = vunpack.c.h.b16 %v534
        %v2373 = vunpack.c.l.b16 %v535
        %v2374 = vunpack.c.h.b16 %v535
        %v2375 = vunpack.c.l.b16 %v536
        %v2376 = vunpack.c.h.b16 %v536
        %v2377 = vunpack.c.l.b16 %v537
        %v2378 = vunpack.c.h.b16 %v537
        %v2379 = vunpack.c.l.b16 %v538
        %v2380 = vunpack.c.h.b16 %v538
        %v2381 = vunpack.c.l.b16 %v539
        %v2382 = vunpack.c.h.b16 %v539
        %v2383 = vunpack.c.l.b16 %v540
        %v2384 = vunpack.c.h.b16 %v540
        %v2385 = vunpack.c.l.b16 %v541
        %v2386 = vunpack.c.h.b16 %v541
        %v2387 = vunpack.c.l.b16 %v542
        %v2388 = vunpack.c.h.b16 %v542
        %v2389 = vunpack.c.l.b16 %v543
        %v2390 = vunpack.c.h.b16 %v543
        %v2391 = vunpack.c.l.b16 %v544
        %v2392 = vunpack.c.h.b16 %v544
        %v2393 = vunpack.c.l.b16 %v545
        %v2394 = vunpack.c.h.b16 %v545
        %v2395 = vunpack.c.l.b16 %v546
        %v2396 = vunpack.c.h.b16 %v546
        %v2397 = vunpack.c.l.b16 %v547
        %v2398 = vunpack.c.h.b16 %v547
        %v2399 = vunpack.c.l.b16 %v548
        %v2400 = vunpack.c.h.b16 %v548
        %v2401 = vunpack.c.l.b16 %v549
        %v2402 = vunpack.c.h.b16 %v549
        %v2403 = vunpack.c.l.b16 %v550
        %v2404 = vunpack.c.h.b16 %v550
        %v2405 = vunpack.c.l.b16 %v551
        %v2406 = vunpack.c.h.b16 %v551
        %v2407 = vunpack.c.l.b16 %v552
        %v2408 = vunpack.c.h.b16 %v552
        %v2409 = vunpack.c.l.b16 %v553
        %v2410 = vunpack.c.h.b16 %v553
        %v2411 = vunpack.c.l.b16 %v554
        %v2412 = vunpack.c.h.b16 %v554
        %v2413 = vunpack.c.l.b16 %v555
        %v2414 = vunpack.c.h.b16 %v555
        %v2415 = vunpack.c.l.b16 %v556
        %v2416 = vunpack.c.h.b16 %v556
        %v2417 = vunpack.c.l.b16 %v557
        %v2418 = vunpack.c.h.b16 %v557
        %v2419 = vunpack.c.l.b16 %v558
        %v2420 = vunpack.c.h.b16 %v558
        %v2421 = vunpack.c.l.b16 %v559
        %v2422 = vunpack.c.h.b16 %v559
        %v2423 = vunpack.c.l.b16 %v560
        %v2424 = vunpack.c.h.b16 %v560
        %v2425 = vunpack.c.l.b16 %v561
        %v2426 = vunpack.c.h.b16 %v561
        %v2427 = vunpack.c.l.b16 %v562
        %v2428 = vunpack.c.h.b16 %v562
        %v2429 = vunpack.c.l.b16 %v563
        %v2430 = vunpack.c.h.b16 %v563
        %v2431 = vunpack.c.l.b16 %v564
        %v2432 = vunpack.c.h.b16 %v564
        %v2433 = vunpack.c.l.b16 %v565
        %v2434 = vunpack.c.h.b16 %v565
        %v2435 = vunpack.c.l.b16 %v566
        %v2436 = vunpack.c.h.b16 %v566
        %v2437 = vunpack.c.l.b16 %v567
        %v2438 = vunpack.c.h.b16 %v567
        %v2439 = vunpack.c.l.b16 %v568
        %v2440 = vunpack.c.h.b16 %v568
        %v2441 = vunpack.c.l.b16 %v569
        %v2442 = vunpack.c.h.b16 %v569
        %v2443 = vunpack.c.l.b16 %v570
        %v2444 = vunpack.c.h.b16 %v570
        %v2445 = vunpack.c.l.b16 %v571
        %v2446 = vunpack.c.h.b16 %v571
        %v2447 = vunpack.c.l.b16 %v572
        %v2448 = vunpack.c.h.b16 %v572
        %v2449 = vunpack.c.l.b16 %v573
        %v2450 = vunpack.c.h.b16 %v573
        %v2451 = vunpack.c.l.b16 %v574
        %v2452 = vunpack.c.h.b16 %v574
        %v2453 = vunpack.c.l.b16 %v575
        %v2454 = vunpack.c.h.b16 %v575
        %v2455 = vunpack.c.l.b16 %v576
        %v2456 = vunpack.c.h.b16 %v576
        %v2457 = vunpack.c.l.b16 %v577
        %v2458 = vunpack.c.h.b16 %v577
        %v2459 = vunpack.c.l.b16 %v578
        %v2460 = vunpack.c.h.b16 %v578
        %v2461 = vunpack.c.l.b16 %v579
        %v2462 = vunpack.c.h.b16 %v579
        %v2463 = vunpack.c.l.b16 %v580
        %v2464 = vunpack.c.h.b16 %v580
        %v2465 = vunpack.c.l.b16 %v581
        %v2466 = vunpack.c.h.b16 %v581
        %v2467 = vunpack.c.l.b16 %v582
        %v2468 = vunpack.c.h.b16 %v582
        %v2469 = vunpack.c.l.b16 %v583
        %v2470 = vunpack.c.h.b16 %v583
        %v2471 = vunpack.c.l.b16 %v584
        %v2472 = vunpack.c.h.b16 %v584
        %v2473 = vunpack.c.l.b16 %v585
        %v2474 = vunpack.c.h.b16 %v585
        %v2475 = vunpack.c.l.b16 %v586
        %v2476 = vunpack.c.h.b16 %v586
        %v2477 = vunpack.c.l.b16 %v587
        %v2478 = vunpack.c.h.b16 %v587
        %v2479 = vunpack.c.l.b16 %v588
        %v2480 = vunpack.c.h.b16 %v588
        %v2481 = vunpack.c.l.b16 %v589
        %v2482 = vunpack.c.h.b16 %v589
        %v2483 = vunpack.c.l.b16 %v590
        %v2484 = vunpack.c.h.b16 %v590
        %v2485 = vunpack.c.l.b16 %v591
        %v2486 = vunpack.c.h.b16 %v591
        %v2487 = vunpack.c.l.b16 %v592
        %v2488 = vunpack.c.h.b16 %v592
        %v2489 = vunpack.c.l.b16 %v593
        %v2490 = vunpack.c.h.b16 %v593
        %v2491 = vunpack.c.l.b16 %v594
        %v2492 = vunpack.c.h.b16 %v594
        %v2493 = vunpack.c.l.b16 %v595
        %v2494 = vunpack.c.h.b16 %v595
        %v2495 = vunpack.c.l.b16 %v596
        %v2496 = vunpack.c.h.b16 %v596
        %v2497 = vunpack.c.l.b16 %v597
        %v2498 = vunpack.c.h.b16 %v597
        %v2499 = vunpack.c.l.b16 %v598
        %v2500 = vunpack.c.h.b16 %v598
        %v2501 = vunpack.c.l.b16 %v599
        %v2502 = vunpack.c.h.b16 %v599
        %v2503 = vunpack.c.l.b16 %v600
        %v2504 = vunpack.c.h.b16 %v600
        %v2505 = vunpack.c.l.b16 %v601
        %v2506 = vunpack.c.h.b16 %v601
        %v2507 = vunpack.c.l.b16 %v602
        %v2508 = vunpack.c.h.b16 %v602
        %v2509 = vunpack.c.l.b16 %v603
        %v2510 = vunpack.c.h.b16 %v603
        %v2511 = vunpack.c.l.b16 %v604
        %v2512 = vunpack.c.h.b16 %v604
        %v2513 = vunpack.c.l.b16 %v605
        %v2514 = vunpack.c.h.b16 %v605
        %v2515 = vunpack.c.l.b16 %v606
        %v2516 = vunpack.c.h.b16 %v606
        %v2517 = vunpack.c.l.b16 %v607
        %v2518 = vunpack.c.h.b16 %v607
        %v2519 = vunpack.c.l.b16 %v608
        %v2520 = vunpack.c.h.b16 %v608
        %v2521 = vunpack.c.l.b16 %v609
        %v2522 = vunpack.c.h.b16 %v609
        %v2523 = vunpack.c.l.b16 %v610
        %v2524 = vunpack.c.h.b16 %v610
        %v2525 = vunpack.c.l.b16 %v611
        %v2526 = vunpack.c.h.b16 %v611
        %v2527 = vunpack.c.l.b16 %v612
        %v2528 = vunpack.c.h.b16 %v612
        %v2529 = vunpack.c.l.b16 %v613
        %v2530 = vunpack.c.h.b16 %v613
        %v2531 = vunpack.c.l.b16 %v614
        %v2532 = vunpack.c.h.b16 %v614
        %v2533 = vunpack.c.l.b16 %v615
        %v2534 = vunpack.c.h.b16 %v615
        %v2535 = vunpack.c.l.b16 %v616
        %v2536 = vunpack.c.h.b16 %v616
        %v2537 = vunpack.c.l.b16 %v617
        %v2538 = vunpack.c.h.b16 %v617
        %v2539 = vunpack.c.l.b16 %v618
        %v2540 = vunpack.c.h.b16 %v618
        %v2541 = vunpack.c.l.b16 %v619
        %v2542 = vunpack.c.h.b16 %v619
        %v2543 = vunpack.c.l.b16 %v620
        %v2544 = vunpack.c.h.b16 %v620
        %v2545 = vunpack.c.l.b16 %v621
        %v2546 = vunpack.c.h.b16 %v621
        %v2547 = vunpack.c.l.b16 %v622
        %v2548 = vunpack.c.h.b16 %v622
        %v2549 = vunpack.c.l.b16 %v623
        %v2550 = vunpack.c.h.b16 %v623
        %v2551 = vunpack.c.l.b16 %v624
        %v2552 = vunpack.c.h.b16 %v624
        %v2553 = vunpack.c.l.b16 %v625
        %v2554 = vunpack.c.h.b16 %v625
        %v2555 = vunpack.c.l.b16 %v626
        %v2556 = vunpack.c.h.b16 %v626
        %v2557 = vunpack.c.l.b16 %v627
        %v2558 = vunpack.c.h.b16 %v627
        %v2559 = vunpack.c.l.b16 %v628
        %v2560 = vunpack.c.h.b16 %v628
        %v2561 = vunpack.c.l.b16 %v629
        %v2562 = vunpack.c.h.b16 %v629
        %v2563 = vunpack.c.l.b16 %v630
        %v2564 = vunpack.c.h.b16 %v630
        %v2565 = vunpack.c.l.b16 %v631
        %v2566 = vunpack.c.h.b16 %v631
        %v2567 = vunpack.c.l.b16 %v632
        %v2568 = vunpack.c.h.b16 %v632
        %v2569 = vunpack.c.l.b16 %v633
        %v2570 = vunpack.c.h.b16 %v633
        %v2571 = vunpack.c.l.b16 %v634
        %v2572 = vunpack.c.h.b16 %v634
        %v2573 = vunpack.c.l.b16 %v635
        %v2574 = vunpack.c.h.b16 %v635
        %v2575 = vunpack.c.l.b16 %v636
        %v2576 = vunpack.c.h.b16 %v636
        %v2577 = vunpack.c.l.b16 %v637
        %v2578 = vunpack.c.h.b16 %v637
        %v2579 = vunpack.c.l.b16 %v638
        %v2580 = vunpack.c.h.b16 %v638
        %v2581 = vunpack.c.l.b16 %v639
        %v2582 = vunpack.c.h.b16 %v639
        %v2583 = vunpack.c.l.b16 %v640
        %v2584 = vunpack.c.h.b16 %v640
        %v2585 = vunpack.c.l.b16 %v641
        %v2586 = vunpack.c.h.b16 %v641
        %v2587 = vunpack.c.l.b16 %v642
        %v2588 = vunpack.c.h.b16 %v642
        %v2589 = vunpack.c.l.b16 %v643
        %v2590 = vunpack.c.h.b16 %v643
        %v2591 = vunpack.c.l.b16 %v644
        %v2592 = vunpack.c.h.b16 %v644
        %v2593 = vunpack.c.l.b16 %v645
        %v2594 = vunpack.c.h.b16 %v645
        %v2595 = vunpack.c.l.b16 %v646
        %v2596 = vunpack.c.h.b16 %v646
        %v2597 = vunpack.c.l.b16 %v647
        %v2598 = vunpack.c.h.b16 %v647
        %v2599 = vunpack.c.l.b16 %v648
        %v2600 = vunpack.c.h.b16 %v648
        %v2601 = vunpack.c.l.b16 %v649
        %v2602 = vunpack.c.h.b16 %v649
        %v2603 = vunpack.c.l.b16 %v650
        %v2604 = vunpack.c.h.b16 %v650
        %v2605 = vunpack.c.l.b16 %v651
        %v2606 = vunpack.c.h.b16 %v651
        %v2607 = vunpack.c.l.b16 %v652
        %v2608 = vunpack.c.h.b16 %v652
        %v2609 = vunpack.c.l.b16 %v653
        %v2610 = vunpack.c.h.b16 %v653
        %v2611 = vunpack.c.l.b16 %v654
        %v2612 = vunpack.c.h.b16 %v654
        %v2613 = vunpack.c.l.b16 %v655
        %v2614 = vunpack.c.h.b16 %v655
        %v2615 = vunpack.c.l.b16 %v656
        %v2616 = vunpack.c.h.b16 %v656
        %v2617 = vunpack.c.l.b16 %v657
        %v2618 = vunpack.c.h.b16 %v657
        %v2619 = vunpack.c.l.b16 %v658
        %v2620 = vunpack.c.h.b16 %v658
        %v2621 = vunpack.c.l.b16 %v659
        %v2622 = vunpack.c.h.b16 %v659
        %v2623 = vunpack.c.l.b16 %v660
        %v2624 = vunpack.c.h.b16 %v660
        %v2625 = vunpack.c.l.b16 %v661
        %v2626 = vunpack.c.h.b16 %v661
        %v2627 = vunpack.c.l.b16 %v662
        %v2628 = vunpack.c.h.b16 %v662
        %v2629 = vunpack.c.l.b16 %v663
        %v2630 = vunpack.c.h.b16 %v663
        %v2631 = vunpack.c.l.b16 %v664
        %v2632 = vunpack.c.h.b16 %v664
        %v2633 = vunpack.c.l.b16 %v665
        %v2634 = vunpack.c.h.b16 %v665
        %v2635 = vunpack.c.l.b16 %v666
        %v2636 = vunpack.c.h.b16 %v666
        %v2637 = vunpack.c.l.b16 %v667
        %v2638 = vunpack.c.h.b16 %v667
        %v2639 = vunpack.c.l.b16 %v668
        %v2640 = vunpack.c.h.b16 %v668
        %v2641 = vunpack.c.l.b16 %v669
        %v2642 = vunpack.c.h.b16 %v669
        %v2643 = vunpack.c.l.b16 %v670
        %v2644 = vunpack.c.h.b16 %v670
        %v2645 = vunpack.c.l.b16 %v671
        %v2646 = vunpack.c.h.b16 %v671
        %v2647 = vunpack.c.l.b16 %v672
        %v2648 = vunpack.c.h.b16 %v672
        %v2649 = vunpack.c.l.b16 %v673
        %v2650 = vunpack.c.h.b16 %v673
        %v2651 = vunpack.c.l.b16 %v674
        %v2652 = vunpack.c.h.b16 %v674
        %v2653 = vunpack.c.l.b16 %v675
        %v2654 = vunpack.c.h.b16 %v675
        %v2655 = vunpack.c.l.b16 %v676
        %v2656 = vunpack.c.h.b16 %v676
        %v2657 = vunpack.c.l.b16 %v677
        %v2658 = vunpack.c.h.b16 %v677
        %v2659 = vunpack.c.l.b16 %v678
        %v2660 = vunpack.c.h.b16 %v678
        %v2661 = vunpack.c.l.b16 %v679
        %v2662 = vunpack.c.h.b16 %v679
        %v2663 = vunpack.c.l.b16 %v680
        %v2664 = vunpack.c.h.b16 %v680
        %v2665 = vunpack.c.l.b16 %v681
        %v2666 = vunpack.c.h.b16 %v681
        %v2667 = vunpack.c.l.b16 %v682
        %v2668 = vunpack.c.h.b16 %v682
        %v2669 = vunpack.c.l.b16 %v683
        %v2670 = vunpack.c.h.b16 %v683
        %v2671 = vunpack.c.l.b16 %v684
        %v2672 = vunpack.c.h.b16 %v684
        %v2673 = vunpack.c.l.b16 %v685
        %v2674 = vunpack.c.h.b16 %v685
        %v2675 = vunpack.c.l.b16 %v686
        %v2676 = vunpack.c.h.b16 %v686
        %v2677 = vunpack.c.l.b16 %v687
        %v2678 = vunpack.c.h.b16 %v687
        %v2679 = vunpack.c.l.b16 %v688
        %v2680 = vunpack.c.h.b16 %v688
        %v2681 = vunpack.c.l.b16 %v689
        %v2682 = vunpack.c.h.b16 %v689
        %v2683 = vunpack.c.l.b16 %v690
        %v2684 = vunpack.c.h.b16 %v690
        %v2685 = vunpack.c.l.b16 %v691
        %v2686 = vunpack.c.h.b16 %v691
        %v2687 = vunpack.c.l.b16 %v692
        %v2688 = vunpack.c.h.b16 %v692
        %v2689 = vunpack.c.l.b16 %v693
        %v2690 = vunpack.c.h.b16 %v693
        %v2691 = vunpack.c.l.b16 %v694
        %v2692 = vunpack.c.h.b16 %v694
        %v2693 = vunpack.c.l.b16 %v695
        %v2694 = vunpack.c.h.b16 %v695
        %v2695 = vunpack.c.l.b16 %v696
        %v2696 = vunpack.c.h.b16 %v696
        %v2697 = vunpack.c.l.b16 %v697
        %v2698 = vunpack.c.h.b16 %v697
        %v2699 = vunpack.c.l.b16 %v698
        %v2700 = vunpack.c.h.b16 %v698
        %v2701 = vunpack.c.l.b16 %v699
        %v2702 = vunpack.c.h.b16 %v699
        %v2703 = vunpack.c.l.b16 %v700
        %v2704 = vunpack.c.h.b16 %v700
        %v2705 = vunpack.c.l.b16 %v701
        %v2706 = vunpack.c.h.b16 %v701
        %v2707 = vunpack.c.l.b16 %v702
        %v2708 = vunpack.c.h.b16 %v702
        %v2709 = vunpack.c.l.b16 %v703
        %v2710 = vunpack.c.h.b16 %v703
        %v2711 = vunpack.c.l.b16 %v704
        %v2712 = vunpack.c.h.b16 %v704
        %v2713 = vunpack.c.l.b16 %v705
        %v2714 = vunpack.c.h.b16 %v705
        %v2715 = vunpack.c.l.b16 %v706
        %v2716 = vunpack.c.h.b16 %v706
        %v2717 = vunpack.c.l.b16 %v707
        %v2718 = vunpack.c.h.b16 %v707
        %v2719 = vunpack.c.l.b16 %v708
        %v2720 = vunpack.c.h.b16 %v708
        %v2721 = vunpack.c.l.b16 %v709
        %v2722 = vunpack.c.h.b16 %v709
        %v2723 = vunpack.c.l.b16 %v710
        %v2724 = vunpack.c.h.b16 %v710
        %v2725 = vunpack.c.l.b16 %v711
        %v2726 = vunpack.c.h.b16 %v711
        %v2727 = vunpack.c.l.b16 %v712
        %v2728 = vunpack.c.h.b16 %v712
        %v2729 = vunpack.c.l.b16 %v713
        %v2730 = vunpack.c.h.b16 %v713
        %v2731 = vunpack.c.l.b16 %v714
        %v2732 = vunpack.c.h.b16 %v714
        %v2733 = vunpack.c.l.b16 %v715
        %v2734 = vunpack.c.h.b16 %v715
        %v2735 = vunpack.c.l.b16 %v716
        %v2736 = vunpack.c.h.b16 %v716
        %v2737 = vunpack.c.l.b16 %v717
        %v2738 = vunpack.c.h.b16 %v717
        %v2739 = vunpack.c.l.b16 %v718
        %v2740 = vunpack.c.h.b16 %v718
        %v2741 = vunpack.c.l.b16 %v719
        %v2742 = vunpack.c.h.b16 %v719
        %v2743 = vunpack.c.l.b16 %v720
        %v2744 = vunpack.c.h.b16 %v720
        %v2745 = vunpack.c.l.b16 %v721
        %v2746 = vunpack.c.h.b16 %v721
        %v2747 = vunpack.c.l.b16 %v722
        %v2748 = vunpack.c.h.b16 %v722
        %v2749 = vunpack.c.l.b16 %v723
        %v2750 = vunpack.c.h.b16 %v723
        %v2751 = vunpack.c.l.b16 %v724
        %v2752 = vunpack.c.h.b16 %v724
        %v2753 = vunpack.c.l.b16 %v725
        %v2754 = vunpack.c.h.b16 %v725
        %v2755 = vunpack.c.l.b16 %v726
        %v2756 = vunpack.c.h.b16 %v726
        %v2757 = vunpack.c.l.b16 %v727
        %v2758 = vunpack.c.h.b16 %v727
        %v2759 = vunpack.c.l.b16 %v728
        %v2760 = vunpack.c.h.b16 %v728
        %v2761 = vunpack.c.l.b16 %v729
        %v2762 = vunpack.c.h.b16 %v729
        %v2763 = vunpack.c.l.b16 %v730
        %v2764 = vunpack.c.h.b16 %v730
        %v2765 = vunpack.c.l.b16 %v731
        %v2766 = vunpack.c.h.b16 %v731
        %v2767 = vunpack.c.l.b16 %v732
        %v2768 = vunpack.c.h.b16 %v732
        %v2769 = vunpack.c.l.b16 %v733
        %v2770 = vunpack.c.h.b16 %v733
        %v2771 = vunpack.c.l.b16 %v734
        %v2772 = vunpack.c.h.b16 %v734
        %v2773 = vunpack.c.l.b16 %v735
        %v2774 = vunpack.c.h.b16 %v735
        %v2775 = vunpack.c.l.b16 %v736
        %v2776 = vunpack.c.h.b16 %v736
        %v2777 = vunpack.c.l.b16 %v737
        %v2778 = vunpack.c.h.b16 %v737
        %v2779 = vunpack.c.l.b16 %v738
        %v2780 = vunpack.c.h.b16 %v738
        %v2781 = vunpack.c.l.b16 %v739
        %v2782 = vunpack.c.h.b16 %v739
        %v2783 = vunpack.c.l.b16 %v740
        %v2784 = vunpack.c.h.b16 %v740
        %v2785 = vunpack.c.l.b16 %v741
        %v2786 = vunpack.c.h.b16 %v741
        %v2787 = vunpack.c.l.b16 %v742
        %v2788 = vunpack.c.h.b16 %v742
        %v2789 = vunpack.c.l.b16 %v743
        %v2790 = vunpack.c.h.b16 %v743
        %v2791 = vunpack.c.l.b16 %v744
        %v2792 = vunpack.c.h.b16 %v744
        %v2793 = vunpack.c.l.b16 %v745
        %v2794 = vunpack.c.h.b16 %v745
        %v2795 = vunpack.c.l.b16 %v746
        %v2796 = vunpack.c.h.b16 %v746
        %v2797 = vunpack.c.l.b16 %v747
        %v2798 = vunpack.c.h.b16 %v747
        %v2799 = vunpack.c.l.b16 %v748
        %v2800 = vunpack.c.h.b16 %v748
        %v2801 = vunpack.c.l.b16 %v749
        %v2802 = vunpack.c.h.b16 %v749
        %v2803 = vunpack.c.l.b16 %v750
        %v2804 = vunpack.c.h.b16 %v750
        %v2805 = vunpack.c.l.b16 %v751
        %v2806 = vunpack.c.h.b16 %v751
        %v2807 = vunpack.c.l.b16 %v752
        %v2808 = vunpack.c.h.b16 %v752
        %v2809 = vunpack.c.l.b16 %v753
        %v2810 = vunpack.c.h.b16 %v753
        %v2811 = vunpack.c.l.b16 %v754
        %v2812 = vunpack.c.h.b16 %v754
        %v2813 = vunpack.c.l.b16 %v755
        %v2814 = vunpack.c.h.b16 %v755
        %v2815 = vunpack.c.l.b16 %v756
        %v2816 = vunpack.c.h.b16 %v756
        %v2817 = vunpack.c.l.b16 %v757
        %v2818 = vunpack.c.h.b16 %v757
        %v2819 = vunpack.c.l.b16 %v758
        %v2820 = vunpack.c.h.b16 %v758
        %v2821 = vunpack.c.l.b16 %v759
        %v2822 = vunpack.c.h.b16 %v759
        %v2823 = vunpack.c.l.b16 %v760
        %v2824 = vunpack.c.h.b16 %v760
        %v2825 = vunpack.c.l.b16 %v761
        %v2826 = vunpack.c.h.b16 %v761
        %v2827 = vunpack.c.l.b16 %v762
        %v2828 = vunpack.c.h.b16 %v762
        %v2829 = vunpack.c.l.b16 %v763
        %v2830 = vunpack.c.h.b16 %v763
        %v2831 = vunpack.c.l.b16 %v764
        %v2832 = vunpack.c.h.b16 %v764
        %v2833 = vunpack.c.l.b16 %v765
        %v2834 = vunpack.c.h.b16 %v765
        %v2835 = vunpack.c.l.b16 %v766
        %v2836 = vunpack.c.h.b16 %v766
        %v2837 = vunpack.c.l.b16 %v767
        %v2838 = vunpack.c.h.b16 %v767
        %v2839 = vunpack.c.l.b16 %v768
        %v2840 = vunpack.c.h.b16 %v768
        %v2841 = vunpack.c.l.b16 %v769
        %v2842 = vunpack.c.h.b16 %v769
        %v2843 = vunpack.c.l.b16 %v770
        %v2844 = vunpack.c.h.b16 %v770
        %v2845 = vunpack.c.l.b16 %v771
        %v2846 = vunpack.c.h.b16 %v771
        %v2847 = vunpack.c.l.b16 %v772
        %v2848 = vunpack.c.h.b16 %v772
        %v2849 = vunpack.c.l.b16 %v773
        %v2850 = vunpack.c.h.b16 %v773
        %v2851 = vunpack.c.l.b16 %v774
        %v2852 = vunpack.c.h.b16 %v774
        %v2853 = vunpack.c.l.b16 %v775
        %v2854 = vunpack.c.h.b16 %v775
        %v2855 = vunpack.c.l.b16 %v776
        %v2856 = vunpack.c.h.b16 %v776
        %v2857 = vunpack.c.l.b16 %v777
        %v2858 = vunpack.c.h.b16 %v777
        %v2859 = vunpack.c.l.b16 %v778
        %v2860 = vunpack.c.h.b16 %v778
        %v2861 = vunpack.c.l.b16 %v779
        %v2862 = vunpack.c.h.b16 %v779
        %v2863 = vunpack.c.l.b16 %v780
        %v2864 = vunpack.c.h.b16 %v780
        %v2865 = vunpack.c.l.b16 %v781
        %v2866 = vunpack.c.h.b16 %v781
        %v2867 = vunpack.c.l.b16 %v782
        %v2868 = vunpack.c.h.b16 %v782
        %v2869 = vunpack.c.l.b16 %v783
        %v2870 = vunpack.c.h.b16 %v783
        %v2871 = vunpack.c.l.b16 %v784
        %v2872 = vunpack.c.h.b16 %v784
        %v2873 = vunpack.c.l.b16 %v785
        %v2874 = vunpack.c.h.b16 %v785
        %v2875 = vunpack.c.l.b16 %v786
        %v2876 = vunpack.c.h.b16 %v786
        %v2877 = vunpack.c.l.b16 %v787
        %v2878 = vunpack.c.h.b16 %v787
        %v2879 = vunpack.c.l.b16 %v788
        %v2880 = vunpack.c.h.b16 %v788
        %v2881 = vunpack.c.l.b16 %v789
        %v2882 = vunpack.c.h.b16 %v789
        %v2883 = vunpack.c.l.b16 %v790
        %v2884 = vunpack.c.h.b16 %v790
        %v2885 = vunpack.c.l.b16 %v791
        %v2886 = vunpack.c.h.b16 %v791
        %v2887 = vunpack.c.l.b16 %v792
        %v2888 = vunpack.c.h.b16 %v792
        %v2889 = vunpack.c.l.b16 %v793
        %v2890 = vunpack.c.h.b16 %v793
        %v2891 = vunpack.c.l.b16 %v794
        %v2892 = vunpack.c.h.b16 %v794
        %v2893 = vunpack.c.l.b16 %v795
        %v2894 = vunpack.c.h.b16 %v795
        %v2895 = vunpack.c.l.b16 %v796
        %v2896 = vunpack.c.h.b16 %v796
        %v2897 = vunpack.c.l.b16 %v797
        %v2898 = vunpack.c.h.b16 %v797
        %v2899 = vunpack.c.l.b16 %v798
        %v2900 = vunpack.c.h.b16 %v798
        %v2901 = vunpack.c.l.b16 %v799
        %v2902 = vunpack.c.h.b16 %v799
        %v2903 = vunpack.c.l.b16 %v800
        %v2904 = vunpack.c.h.b16 %v800
        %v2905 = vunpack.c.l.b16 %v801
        %v2906 = vunpack.c.h.b16 %v801
        %v2907 = vunpack.c.l.b16 %v802
        %v2908 = vunpack.c.h.b16 %v802
        %v2909 = vunpack.c.l.b16 %v803
        %v2910 = vunpack.c.h.b16 %v803
        %v2911 = vunpack.c.l.b16 %v804
        %v2912 = vunpack.c.h.b16 %v804
        %v2913 = vunpack.c.l.b16 %v805
        %v2914 = vunpack.c.h.b16 %v805
        %v2915 = vunpack.c.l.b16 %v806
        %v2916 = vunpack.c.h.b16 %v806
        %v2917 = vunpack.c.l.b16 %v807
        %v2918 = vunpack.c.h.b16 %v807
        %v2919 = vunpack.c.l.b16 %v808
        %v2920 = vunpack.c.h.b16 %v808
        %v2921 = vunpack.c.l.b16 %v809
        %v2922 = vunpack.c.h.b16 %v809
        %v2923 = vunpack.c.l.b16 %v810
        %v2924 = vunpack.c.h.b16 %v810
        %v2925 = vunpack.c.l.b16 %v811
        %v2926 = vunpack.c.h.b16 %v811
        %v2927 = vunpack.c.l.b16 %v812
        %v2928 = vunpack.c.h.b16 %v812
        %v2929 = vunpack.c.l.b16 %v813
        %v2930 = vunpack.c.h.b16 %v813
        %v2931 = vunpack.c.l.b16 %v814
        %v2932 = vunpack.c.h.b16 %v814
        %v2933 = vunpack.c.l.b16 %v815
        %v2934 = vunpack.c.h.b16 %v815
        %v2935 = vunpack.c.l.b16 %v816
        %v2936 = vunpack.c.h.b16 %v816
        %v2937 = vunpack.c.l.b16 %v817
        %v2938 = vunpack.c.h.b16 %v817
        %v2939 = vunpack.c.l.b16 %v818
        %v2940 = vunpack.c.h.b16 %v818
        %v2941 = vunpack.c.l.b16 %v819
        %v2942 = vunpack.c.h.b16 %v819
        %v2943 = vunpack.c.l.b16 %v820
        %v2944 = vunpack.c.h.b16 %v820
        %v2945 = vunpack.c.l.b16 %v821
        %v2946 = vunpack.c.h.b16 %v821
        %v2947 = vunpack.c.l.b16 %v822
        %v2948 = vunpack.c.h.b16 %v822
        %v2949 = vunpack.c.l.b16 %v823
        %v2950 = vunpack.c.h.b16 %v823
        %v2951 = vunpack.c.l.b16 %v824
        %v2952 = vunpack.c.h.b16 %v824
        %v2953 = vunpack.c.l.b16 %v825
        %v2954 = vunpack.c.h.b16 %v825
        %v2955 = vunpack.c.l.b16 %v826
        %v2956 = vunpack.c.h.b16 %v826
        %v2957 = vunpack.c.l.b16 %v827
        %v2958 = vunpack.c.h.b16 %v827
        %v2959 = vunpack.c.l.b16 %v828
        %v2960 = vunpack.c.h.b16 %v828
        %v2961 = vunpack.c.l.b16 %v829
        %v2962 = vunpack.c.h.b16 %v829
        %v2963 = vunpack.c.l.b16 %v830
        %v2964 = vunpack.c.h.b16 %v830
        %v2965 = vunpack.c.l.b16 %v831
        %v2966 = vunpack.c.h.b16 %v831
        %v2967 = vunpack.c.l.b16 %v832
        %v2968 = vunpack.c.h.b16 %v832
        %v2969 = vunpack.c.l.b16 %v833
        %v2970 = vunpack.c.h.b16 %v833
        %v2971 = vunpack.c.l.b16 %v834
        %v2972 = vunpack.c.h.b16 %v834
        %v2973 = vunpack.c.l.b16 %v835
        %v2974 = vunpack.c.h.b16 %v835
        %v2975 = vunpack.c.l.b16 %v836
        %v2976 = vunpack.c.h.b16 %v836
        %v2977 = vunpack.c.l.b16 %v837
        %v2978 = vunpack.c.h.b16 %v837
        %v2979 = vunpack.c.l.b16 %v838
        %v2980 = vunpack.c.h.b16 %v838
        %v2981 = vunpack.c.l.b16 %v839
        %v2982 = vunpack.c.h.b16 %v839
        %v2983 = vunpack.c.l.b16 %v840
        %v2984 = vunpack.c.h.b16 %v840
        %v2985 = vunpack.c.l.b16 %v841
        %v2986 = vunpack.c.h.b16 %v841
        %v2987 = vunpack.c.l.b16 %v842
        %v2988 = vunpack.c.h.b16 %v842
        %v2989 = vunpack.c.l.b16 %v843
        %v2990 = vunpack.c.h.b16 %v843
        %v2991 = vunpack.c.l.b16 %v844
        %v2992 = vunpack.c.h.b16 %v844
        %v2993 = vunpack.c.l.b16 %v845
        %v2994 = vunpack.c.h.b16 %v845
        %v2995 = vunpack.c.l.b16 %v846
        %v2996 = vunpack.c.h.b16 %v846
        %v2997 = vunpack.c.l.b16 %v847
        %v2998 = vunpack.c.h.b16 %v847
        %v2999 = vunpack.c.l.b16 %v848
        %v3000 = vunpack.c.h.b16 %v848
        %v3001 = vunpack.c.l.b16 %v849
        %v3002 = vunpack.c.h.b16 %v849
        %v3003 = vunpack.c.l.b16 %v850
        %v3004 = vunpack.c.h.b16 %v850
        %v3005 = vunpack.c.l.b16 %v851
        %v3006 = vunpack.c.h.b16 %v851
        %v3007 = vunpack.c.l.b16 %v852
        %v3008 = vunpack.c.h.b16 %v852
        %v3009 = vunpack.c.l.b16 %v853
        %v3010 = vunpack.c.h.b16 %v853
        %v3011 = vunpack.c.l.b16 %v854
        %v3012 = vunpack.c.h.b16 %v854
        %v3013 = vunpack.c.l.b16 %v855
        %v3014 = vunpack.c.h.b16 %v855
        %v3015 = vunpack.c.l.b16 %v856
        %v3016 = vunpack.c.h.b16 %v856
        %v3017 = vunpack.c.l.b16 %v857
        %v3018 = vunpack.c.h.b16 %v857
        %v3019 = vunpack.c.l.b16 %v858
        %v3020 = vunpack.c.h.b16 %v858
        %v3021 = vunpack.c.l.b16 %v859
        %v3022 = vunpack.c.h.b16 %v859
        %v3023 = vunpack.c.l.b16 %v860
        %v3024 = vunpack.c.h.b16 %v860
        %v3025 = vunpack.c.l.b16 %v861
        %v3026 = vunpack.c.h.b16 %v861
        %v3027 = vunpack.c.l.b16 %v862
        %v3028 = vunpack.c.h.b16 %v862
        %v3029 = vunpack.c.l.b16 %v863
        %v3030 = vunpack.c.h.b16 %v863
        %v3031 = vunpack.c.l.b16 %v864
        %v3032 = vunpack.c.h.b16 %v864
        %v3033 = vunpack.c.l.b16 %v865
        %v3034 = vunpack.c.h.b16 %v865
        %v3035 = vunpack.c.l.b16 %v866
        %v3036 = vunpack.c.h.b16 %v866
        %v3037 = vunpack.c.l.b16 %v867
        %v3038 = vunpack.c.h.b16 %v867
        %v3039 = vunpack.c.l.b16 %v868
        %v3040 = vunpack.c.h.b16 %v868
        %v3041 = vunpack.c.l.b16 %v869
        %v3042 = vunpack.c.h.b16 %v869
        %v3043 = vunpack.c.l.b16 %v870
        %v3044 = vunpack.c.h.b16 %v870
        %v3045 = vunpack.c.l.b16 %v871
        %v3046 = vunpack.c.h.b16 %v871
        %v3047 = vunpack.c.l.b16 %v872
        %v3048 = vunpack.c.h.b16 %v872
        %v3049 = vunpack.c.l.b16 %v873
        %v3050 = vunpack.c.h.b16 %v873
        %v3051 = vunpack.c.l.b16 %v874
        %v3052 = vunpack.c.h.b16 %v874
        %v3053 = vunpack.c.l.b16 %v875
        %v3054 = vunpack.c.h.b16 %v875
        %v3055 = vunpack.c.l.b16 %v876
        %v3056 = vunpack.c.h.b16 %v876
        %v3057 = vunpack.c.l.b16 %v877
        %v3058 = vunpack.c.h.b16 %v877
        %v3059 = vunpack.c.l.b16 %v878
        %v3060 = vunpack.c.h.b16 %v878
        %v3061 = vunpack.c.l.b16 %v879
        %v3062 = vunpack.c.h.b16 %v879
        %v3063 = vunpack.c.l.b16 %v880
        %v3064 = vunpack.c.h.b16 %v880
        %v3065 = vunpack.c.l.b16 %v881
        %v3066 = vunpack.c.h.b16 %v881
        %v3067 = vunpack.c.l.b16 %v882
        %v3068 = vunpack.c.h.b16 %v882
        %v3069 = vunpack.c.l.b16 %v883
        %v3070 = vunpack.c.h.b16 %v883
        %v3071 = vunpack.c.l.b16 %v884
        %v3072 = vunpack.c.h.b16 %v884
        %v3073 = vunpack.c.l.b16 %v885
        %v3074 = vunpack.c.h.b16 %v885
        %v3075 = vunpack.c.l.b16 %v886
        %v3076 = vunpack.c.h.b16 %v886
        %v3077 = vunpack.c.l.b16 %v887
        %v3078 = vunpack.c.h.b16 %v887
        %v3079 = vunpack.c.l.b16 %v888
        %v3080 = vunpack.c.h.b16 %v888
        %v3081 = vunpack.c.l.b16 %v889
        %v3082 = vunpack.c.h.b16 %v889
        %v3083 = vunpack.c.l.b16 %v890
        %v3084 = vunpack.c.h.b16 %v890
        %v3085 = vunpack.c.l.b16 %v891
        %v3086 = vunpack.c.h.b16 %v891
        %v3087 = vunpack.c.l.b16 %v892
        %v3088 = vunpack.c.h.b16 %v892
        %v3089 = vunpack.c.l.b16 %v893
        %v3090 = vunpack.c.h.b16 %v893
        %v3091 = vunpack.c.l.b16 %v894
        %v3092 = vunpack.c.h.b16 %v894
        %v3093 = vunpack.c.l.b16 %v895
        %v3094 = vunpack.c.h.b16 %v895
        %v3095 = vunpack.c.l.b16 %v896
        %v3096 = vunpack.c.h.b16 %v896
        %v3097 = vunpack.c.l.b16 %v897
        %v3098 = vunpack.c.h.b16 %v897
        %v3099 = vunpack.c.l.b16 %v898
        %v3100 = vunpack.c.h.b16 %v898
        %v3101 = vunpack.c.l.b16 %v899
        %v3102 = vunpack.c.h.b16 %v899
        %v3103 = vunpack.c.l.b16 %v900
        %v3104 = vunpack.c.h.b16 %v900
        %v3105 = vunpack.c.l.b16 %v901
        %v3106 = vunpack.c.h.b16 %v901
        %v3107 = vunpack.c.l.b16 %v902
        %v3108 = vunpack.c.h.b16 %v902
        %v3109 = vunpack.c.l.b16 %v903
        %v3110 = vunpack.c.h.b16 %v903
        %v3111 = vunpack.c.l.b16 %v904
        %v3112 = vunpack.c.h.b16 %v904
        %v3113 = vunpack.c.l.b16 %v905
        %v3114 = vunpack.c.h.b16 %v905
        %v3115 = vunpack.c.l.b16 %v906
        %v3116 = vunpack.c.h.b16 %v906
        %v3117 = vunpack.c.l.b16 %v907
        %v3118 = vunpack.c.h.b16 %v907
        %v3119 = vunpack.c.l.b16 %v908
        %v3120 = vunpack.c.h.b16 %v908
        %v3121 = vunpack.c.l.b16 %v909
        %v3122 = vunpack.c.h.b16 %v909
        %v3123 = vunpack.c.l.b16 %v910
        %v3124 = vunpack.c.h.b16 %v910
        %v3125 = vunpack.c.l.b16 %v911
        %v3126 = vunpack.c.h.b16 %v911
        %v3127 = vunpack.c.l.b16 %v912
        %v3128 = vunpack.c.h.b16 %v912
        %v3129 = vunpack.c.l.b16 %v913
        %v3130 = vunpack.c.h.b16 %v913
        %v3131 = vunpack.c.l.b16 %v914
        %v3132 = vunpack.c.h.b16 %v914
        %v3133 = vunpack.c.l.b16 %v915
        %v3134 = vunpack.c.h.b16 %v915
        %v3135 = vunpack.c.l.b16 %v916
        %v3136 = vunpack.c.h.b16 %v916
        %v3137 = vunpack.c.l.b16 %v917
        %v3138 = vunpack.c.h.b16 %v917
        %v3139 = vunpack.c.l.b16 %v918
        %v3140 = vunpack.c.h.b16 %v918
        %v3141 = vunpack.c.l.b16 %v919
        %v3142 = vunpack.c.h.b16 %v919
        %v3143 = vunpack.c.l.b16 %v920
        %v3144 = vunpack.c.h.b16 %v920
        %v3145 = vunpack.c.l.b16 %v921
        %v3146 = vunpack.c.h.b16 %v921
        %v3147 = vunpack.c.l.b16 %v922
        %v3148 = vunpack.c.h.b16 %v922
        %v3149 = vunpack.c.l.b16 %v923
        %v3150 = vunpack.c.h.b16 %v923
        %v3151 = vunpack.c.l.b16 %v924
        %v3152 = vunpack.c.h.b16 %v924
        %v3153 = vunpack.c.l.b16 %v925
        %v3154 = vunpack.c.h.b16 %v925
        %v3155 = vunpack.c.l.b16 %v926
        %v3156 = vunpack.c.h.b16 %v926
        %v3157 = vunpack.c.l.b16 %v927
        %v3158 = vunpack.c.h.b16 %v927
        %v3159 = vunpack.c.l.b16 %v928
        %v3160 = vunpack.c.h.b16 %v928
        %v3161 = vunpack.c.l.b16 %v929
        %v3162 = vunpack.c.h.b16 %v929
        %v3163 = vunpack.c.l.b16 %v930
        %v3164 = vunpack.c.h.b16 %v930
        %v3165 = vunpack.c.l.b16 %v931
        %v3166 = vunpack.c.h.b16 %v931
        %v3167 = vunpack.c.l.b16 %v932
        %v3168 = vunpack.c.h.b16 %v932
        %v3169 = vunpack.c.l.b16 %v933
        %v3170 = vunpack.c.h.b16 %v933
        %v3171 = vunpack.c.l.b16 %v934
        %v3172 = vunpack.c.h.b16 %v934
        %v3173 = vunpack.c.l.b16 %v935
        %v3174 = vunpack.c.h.b16 %v935
        %v3175 = vunpack.c.l.b16 %v936
        %v3176 = vunpack.c.h.b16 %v936
        %v3177 = vunpack.c.l.b16 %v937
        %v3178 = vunpack.c.h.b16 %v937
        %v3179 = vunpack.c.l.b16 %v938
        %v3180 = vunpack.c.h.b16 %v938
        %v3181 = vunpack.c.l.b16 %v939
        %v3182 = vunpack.c.h.b16 %v939
        %v3183 = vunpack.c.l.b16 %v940
        %v3184 = vunpack.c.h.b16 %v940
        %v3185 = vunpack.c.l.b16 %v941
        %v3186 = vunpack.c.h.b16 %v941
        %v3187 = vunpack.c.l.b16 %v942
        %v3188 = vunpack.c.h.b16 %v942
        %v3189 = vunpack.c.l.b16 %v943
        %v3190 = vunpack.c.h.b16 %v943
        %v3191 = vunpack.c.l.b16 %v944
        %v3192 = vunpack.c.h.b16 %v944
        %v3193 = vunpack.c.l.b16 %v945
        %v3194 = vunpack.c.h.b16 %v945
        %v3195 = vunpack.c.l.b16 %v946
        %v3196 = vunpack.c.h.b16 %v946
        %v3197 = vunpack.c.l.b16 %v947
        %v3198 = vunpack.c.h.b16 %v947
        %v3199 = vunpack.c.l.b16 %v948
        %v3200 = vunpack.c.h.b16 %v948
        %v3201 = vunpack.c.l.b16 %v949
        %v3202 = vunpack.c.h.b16 %v949
        %v3203 = vunpack.c.l.b16 %v950
        %v3204 = vunpack.c.h.b16 %v950
        %v3205 = vunpack.c.l.b16 %v951
        %v3206 = vunpack.c.h.b16 %v951
        %v3207 = vunpack.c.l.b16 %v952
        %v3208 = vunpack.c.h.b16 %v952
        %v3209 = vunpack.c.l.b16 %v953
        %v3210 = vunpack.c.h.b16 %v953
        %v3211 = vunpack.c.l.b16 %v954
        %v3212 = vunpack.c.h.b16 %v954
        %v3213 = vunpack.c.l.b16 %v955
        %v3214 = vunpack.c.h.b16 %v955
        %v3215 = vunpack.c.l.b16 %v956
        %v3216 = vunpack.c.h.b16 %v956
        %v3217 = vunpack.c.l.b16 %v957
        %v3218 = vunpack.c.h.b16 %v957
        %v3219 = vunpack.c.l.b16 %v958
        %v3220 = vunpack.c.h.b16 %v958
        %v3221 = vunpack.c.l.b16 %v959
        %v3222 = vunpack.c.h.b16 %v959
        %v3223 = vunpack.c.l.b16 %v960
        %v3224 = vunpack.c.h.b16 %v960
        %v3225 = vunpack.c.l.b16 %v961
        %v3226 = vunpack.c.h.b16 %v961
        %v3227 = vunpack.c.l.b16 %v962
        %v3228 = vunpack.c.h.b16 %v962
        %v3229 = vunpack.c.l.b16 %v963
        %v3230 = vunpack.c.h.b16 %v963
        %v3231 = vunpack.c.l.b16 %v964
        %v3232 = vunpack.c.h.b16 %v964
        %v3233 = vunpack.c.l.b16 %v965
        %v3234 = vunpack.c.h.b16 %v965
        %v3235 = vunpack.c.l.b16 %v966
        %v3236 = vunpack.c.h.b16 %v966
        %v3237 = vunpack.c.l.b16 %v967
        %v3238 = vunpack.c.h.b16 %v967
        %v3239 = vunpack.c.l.b16 %v968
        %v3240 = vunpack.c.h.b16 %v968
        %v3241 = vunpack.c.l.b16 %v969
        %v3242 = vunpack.c.h.b16 %v969
        %v3243 = vunpack.c.l.b16 %v970
        %v3244 = vunpack.c.h.b16 %v970
        %v3245 = vunpack.c.l.b16 %v971
        %v3246 = vunpack.c.h.b16 %v971
        %v3247 = vunpack.c.l.b16 %v972
        %v3248 = vunpack.c.h.b16 %v972
        %v3249 = vunpack.c.l.b16 %v973
        %v3250 = vunpack.c.h.b16 %v973
        %v3251 = vunpack.c.l.b16 %v974
        %v3252 = vunpack.c.h.b16 %v974
        %v3253 = vunpack.c.l.b16 %v975
        %v3254 = vunpack.c.h.b16 %v975
        %v3255 = vunpack.c.l.b16 %v976
        %v3256 = vunpack.c.h.b16 %v976
        %v3257 = vunpack.c.l.b16 %v977
        %v3258 = vunpack.c.h.b16 %v977
        %v3259 = vunpack.c.l.b16 %v978
        %v3260 = vunpack.c.h.b16 %v978
        %v3261 = vunpack.c.l.b16 %v979
        %v3262 = vunpack.c.h.b16 %v979
        %v3263 = vunpack.c.l.b16 %v980
        %v3264 = vunpack.c.h.b16 %v980
        %v3265 = vunpack.c.l.b16 %v981
        %v3266 = vunpack.c.h.b16 %v981
        %v3267 = vunpack.c.l.b16 %v982
        %v3268 = vunpack.c.h.b16 %v982
        %v3269 = vunpack.c.l.b16 %v983
        %v3270 = vunpack.c.h.b16 %v983
        %v3271 = vunpack.c.l.b16 %v984
        %v3272 = vunpack.c.h.b16 %v984
        %v3273 = vunpack.c.l.b16 %v985
        %v3274 = vunpack.c.h.b16 %v985
        %v3275 = vunpack.c.l.b16 %v986
        %v3276 = vunpack.c.h.b16 %v986
        %v3277 = vunpack.c.l.b16 %v987
        %v3278 = vunpack.c.h.b16 %v987
        %v3279 = vunpack.c.l.b16 %v988
        %v3280 = vunpack.c.h.b16 %v988
        %v3281 = vunpack.c.l.b16 %v989
        %v3282 = vunpack.c.h.b16 %v989
        %v3283 = vunpack.c.l.b16 %v990
        %v3284 = vunpack.c.h.b16 %v990
        %v3285 = vunpack.c.l.b16 %v991
        %v3286 = vunpack.c.h.b16 %v991
        %v3287 = vunpack.c.l.b16 %v992
        %v3288 = vunpack.c.h.b16 %v992
        %v3289 = vunpack.c.l.b16 %v993
        %v3290 = vunpack.c.h.b16 %v993
        %v3291 = vunpack.c.l.b16 %v994
        %v3292 = vunpack.c.h.b16 %v994
        %v3293 = vunpack.c.l.b16 %v995
        %v3294 = vunpack.c.h.b16 %v995
        %v3295 = vunpack.c.l.b16 %v996
        %v3296 = vunpack.c.h.b16 %v996
        %v3297 = vunpack.c.l.b16 %v997
        %v3298 = vunpack.c.h.b16 %v997
        %v3299 = vunpack.c.l.b16 %v998
        %v3300 = vunpack.c.h.b16 %v998
        %v3301 = vunpack.c.l.b16 %v999
        %v3302 = vunpack.c.h.b16 %v999
        %v3303 = vunpack.c.l.b16 %v1000
        %v3304 = vunpack.c.h.b16 %v1000
        %v3305 = vunpack.c.l.b16 %v1001
        %v3306 = vunpack.c.h.b16 %v1001
        %v3307 = vunpack.c.l.b16 %v1002
        %v3308 = vunpack.c.h.b16 %v1002
        %v3309 = vunpack.c.l.b16 %v1003
        %v3310 = vunpack.c.h.b16 %v1003
        %v3311 = vunpack.c.l.b16 %v1004
        %v3312 = vunpack.c.h.b16 %v1004
        %v3313 = vunpack.c.l.b16 %v1005
        %v3314 = vunpack.c.h.b16 %v1005
        %v3315 = vunpack.c.l.b16 %v1006
        %v3316 = vunpack.c.h.b16 %v1006
        %v3317 = vunpack.c.l.b16 %v1007
        %v3318 = vunpack.c.h.b16 %v1007
        %v3319 = vunpack.c.l.b16 %v1008
        %v3320 = vunpack.c.h.b16 %v1008
        %v3321 = vunpack.c.l.b16 %v1009
        %v3322 = vunpack.c.h.b16 %v1009
        %v3323 = vunpack.c.l.b16 %v1010
        %v3324 = vunpack.c.h.b16 %v1010
        %v3325 = vunpack.c.l.b16 %v1011
        %v3326 = vunpack.c.h.b16 %v1011
        %v3327 = vunpack.c.l.b16 %v1012
        %v3328 = vunpack.c.h.b16 %v1012
        %v3329 = vunpack.c.l.b16 %v1013
        %v3330 = vunpack.c.h.b16 %v1013
        %v3331 = vunpack.c.l.b16 %v1014
        %v3332 = vunpack.c.h.b16 %v1014
        %v3333 = vunpack.c.l.b16 %v1015
        %v3334 = vunpack.c.h.b16 %v1015
        %v3335 = vunpack.c.l.b16 %v1016
        %v3336 = vunpack.c.h.b16 %v1016
        %v3337 = vunpack.c.l.b16 %v1017
        %v3338 = vunpack.c.h.b16 %v1017
        %v3339 = vunpack.c.l.b16 %v1018
        %v3340 = vunpack.c.h.b16 %v1018
        %v3341 = vunpack.c.l.b16 %v1019
        %v3342 = vunpack.c.h.b16 %v1019
        %v3343 = vunpack.c.l.b16 %v1020
        %v3344 = vunpack.c.h.b16 %v1020
        %v3345 = vunpack.c.l.b16 %v1021
        %v3346 = vunpack.c.h.b16 %v1021
        %v3347 = vunpack.c.l.b16 %v1022
        %v3348 = vunpack.c.h.b16 %v1022
        %v3349 = vunpack.c.l.b16 %v1023
        %v3350 = vunpack.c.h.b16 %v1023
        %v3351 = vunpack.c.l.b16 %v1024
        %v3352 = vunpack.c.h.b16 %v1024
        %v3353 = vunpack.c.l.b16 %v1025
        %v3354 = vunpack.c.h.b16 %v1025
        %v3355 = vunpack.c.l.b16 %v1026
        %v3356 = vunpack.c.h.b16 %v1026
        %v3357 = vunpack.c.l.b16 %v1027
        %v3358 = vunpack.c.h.b16 %v1027
        %v3359 = vunpack.c.l.b16 %v1028
        %v3360 = vunpack.c.h.b16 %v1028
        %v3361 = vunpack.c.l.b16 %v1029
        %v3362 = vunpack.c.h.b16 %v1029
        %v3363 = vunpack.c.l.b16 %v1030
        %v3364 = vunpack.c.h.b16 %v1030
        %v3365 = vunpack.c.l.b16 %v1031
        %v3366 = vunpack.c.h.b16 %v1031
        %v3367 = vunpack.c.l.b16 %v1032
        %v3368 = vunpack.c.h.b16 %v1032
        %v3369 = vunpack.c.l.b16 %v1033
        %v3370 = vunpack.c.h.b16 %v1033
        %v3371 = vunpack.c.l.b16 %v1034
        %v3372 = vunpack.c.h.b16 %v1034
        %v3373 = vunpack.c.l.b16 %v1035
        %v3374 = vunpack.c.h.b16 %v1035
        %v3375 = vunpack.c.l.b16 %v1036
        %v3376 = vunpack.c.h.b16 %v1036
        %v3377 = vunpack.c.l.b16 %v1037
        %v3378 = vunpack.c.h.b16 %v1037
        %v3379 = vunpack.c.l.b16 %v1038
        %v3380 = vunpack.c.h.b16 %v1038
        %v3381 = vunpack.c.l.b16 %v1039
        %v3382 = vunpack.c.h.b16 %v1039
        %v3383 = vunpack.c.l.b16 %v1040
        %v3384 = vunpack.c.h.b16 %v1040
        %v3385 = vunpack.c.l.b16 %v1041
        %v3386 = vunpack.c.h.b16 %v1041
        %v3387 = vunpack.c.l.b16 %v1042
        %v3388 = vunpack.c.h.b16 %v1042
        %v3389 = vunpack.c.l.b16 %v1043
        %v3390 = vunpack.c.h.b16 %v1043
        %v3391 = vunpack.c.l.b16 %v1044
        %v3392 = vunpack.c.h.b16 %v1044
        %v3393 = vunpack.c.l.b16 %v1045
        %v3394 = vunpack.c.h.b16 %v1045
        %v3395 = vunpack.c.l.b16 %v1046
        %v3396 = vunpack.c.h.b16 %v1046
        %v3397 = vunpack.c.l.b16 %v1047
        %v3398 = vunpack.c.h.b16 %v1047
        %v3399 = vunpack.c.l.b16 %v1048
        %v3400 = vunpack.c.h.b16 %v1048
        %v3401 = vunpack.c.l.b16 %v1049
        %v3402 = vunpack.c.h.b16 %v1049
        %v3403 = vunpack.c.l.b16 %v1050
        %v3404 = vunpack.c.h.b16 %v1050
        %v3405 = vunpack.c.l.b16 %v1051
        %v3406 = vunpack.c.h.b16 %v1051
        %v3407 = vunpack.c.l.b16 %v1052
        %v3408 = vunpack.c.h.b16 %v1052
        %v3409 = vunpack.c.l.b16 %v1053
        %v3410 = vunpack.c.h.b16 %v1053
        %v3411 = vunpack.c.l.b16 %v1054
        %v3412 = vunpack.c.h.b16 %v1054
        %v3413 = vunpack.c.l.b16 %v1055
        %v3414 = vunpack.c.h.b16 %v1055
        %v3415 = vunpack.c.l.b16 %v1056
        %v3416 = vunpack.c.h.b16 %v1056
        %v3417 = vunpack.c.l.b16 %v1057
        %v3418 = vunpack.c.h.b16 %v1057
        %v3419 = vunpack.c.l.b16 %v1058
        %v3420 = vunpack.c.h.b16 %v1058
        %v3421 = vunpack.c.l.b16 %v1059
        %v3422 = vunpack.c.h.b16 %v1059
        %v3423 = vunpack.c.l.b16 %v1060
        %v3424 = vunpack.c.h.b16 %v1060
        %v3425 = vunpack.c.l.b16 %v1061
        %v3426 = vunpack.c.h.b16 %v1061
        %v3427 = vunpack.c.l.b16 %v1062
        %v3428 = vunpack.c.h.b16 %v1062
        %v3429 = vunpack.c.l.b16 %v1063
        %v3430 = vunpack.c.h.b16 %v1063
        %v3431 = vunpack.c.l.b16 %v1064
        %v3432 = vunpack.c.h.b16 %v1064
        %v3433 = vunpack.c.l.b16 %v1065
        %v3434 = vunpack.c.h.b16 %v1065
        %v3435 = vunpack.c.l.b16 %v1066
        %v3436 = vunpack.c.h.b16 %v1066
        %v3437 = vunpack.c.l.b16 %v1067
        %v3438 = vunpack.c.h.b16 %v1067
        %v3439 = vunpack.c.l.b16 %v1068
        %v3440 = vunpack.c.h.b16 %v1068
        %v3441 = vunpack.c.l.b16 %v1069
        %v3442 = vunpack.c.h.b16 %v1069
        %v3443 = vunpack.c.l.b16 %v1070
        %v3444 = vunpack.c.h.b16 %v1070
        %v3445 = vunpack.c.l.b16 %v1071
        %v3446 = vunpack.c.h.b16 %v1071
        %v3447 = vunpack.c.l.b16 %v1072
        %v3448 = vunpack.c.h.b16 %v1072
        %v3449 = vunpack.c.l.b16 %v1073
        %v3450 = vunpack.c.h.b16 %v1073
        %v3451 = vunpack.c.l.b16 %v1074
        %v3452 = vunpack.c.h.b16 %v1074
        %v3453 = vunpack.c.l.b16 %v1075
        %v3454 = vunpack.c.h.b16 %v1075
        %v3455 = vunpack.c.l.b16 %v1076
        %v3456 = vunpack.c.h.b16 %v1076
        %v3457 = vunpack.c.l.b16 %v1077
        %v3458 = vunpack.c.h.b16 %v1077
        %v3459 = vunpack.c.l.b16 %v1078
        %v3460 = vunpack.c.h.b16 %v1078
        %v3461 = vunpack.c.l.b16 %v1079
        %v3462 = vunpack.c.h.b16 %v1079
        %v3463 = vunpack.c.l.b16 %v1080
        %v3464 = vunpack.c.h.b16 %v1080
        %v3465 = vunpack.c.l.b16 %v1081
        %v3466 = vunpack.c.h.b16 %v1081
        %v3467 = vunpack.c.l.b16 %v1082
        %v3468 = vunpack.c.h.b16 %v1082
        %v3469 = vunpack.c.l.b16 %v1083
        %v3470 = vunpack.c.h.b16 %v1083
        %v3471 = vunpack.c.l.b16 %v1084
        %v3472 = vunpack.c.h.b16 %v1084
        %v3473 = vpack.c.b16 %v1941, %v1937
        %v3474 = vpack.c.b16 %v1942, %v1938
        %v3475 = vpack.c.b16 %v1943, %v1939
        %v3476 = vpack.c.b16 %v1944, %v1940
        %v3477 = vpack.c.b16 %v1949, %v1945
        %v3478 = vpack.c.b16 %v1950, %v1946
        %v3479 = vpack.c.b16 %v1951, %v1947
        %v3480 = vpack.c.b16 %v1952, %v1948
        %v3481 = vpack.c.b16 %v1957, %v1953
        %v3482 = vpack.c.b16 %v1958, %v1954
        %v3483 = vpack.c.b16 %v1959, %v1955
        %v3484 = vpack.c.b16 %v1960, %v1956
        %v3485 = vpack.c.b16 %v1965, %v1961
        %v3486 = vpack.c.b16 %v1966, %v1962
        %v3487 = vpack.c.b16 %v1967, %v1963
        %v3488 = vpack.c.b16 %v1968, %v1964
        %v3489 = vpack.c.b16 %v1973, %v1969
        %v3490 = vpack.c.b16 %v1974, %v1970
        %v3491 = vpack.c.b16 %v1975, %v1971
        %v3492 = vpack.c.b16 %v1976, %v1972
        %v3493 = vpack.c.b16 %v1981, %v1977
        %v3494 = vpack.c.b16 %v1982, %v1978
        %v3495 = vpack.c.b16 %v1983, %v1979
        %v3496 = vpack.c.b16 %v1984, %v1980
        %v3497 = vpack.c.b16 %v1989, %v1985
        %v3498 = vpack.c.b16 %v1990, %v1986
        %v3499 = vpack.c.b16 %v1991, %v1987
        %v3500 = vpack.c.b16 %v1992, %v1988
        %v3501 = vpack.c.b16 %v1997, %v1993
        %v3502 = vpack.c.b16 %v1998, %v1994
        %v3503 = vpack.c.b16 %v1999, %v1995
        %v3504 = vpack.c.b16 %v2000, %v1996
        %v3505 = vpack.c.b16 %v2005, %v2001
        %v3506 = vpack.c.b16 %v2006, %v2002
        %v3507 = vpack.c.b16 %v2007, %v2003
        %v3508 = vpack.c.b16 %v2008, %v2004
        %v3509 = vpack.c.b16 %v2013, %v2009
        %v3510 = vpack.c.b16 %v2014, %v2010
        %v3511 = vpack.c.b16 %v2015, %v2011
        %v3512 = vpack.c.b16 %v2016, %v2012
        %v3513 = vpack.c.b16 %v2021, %v2017
        %v3514 = vpack.c.b16 %v2022, %v2018
        %v3515 = vpack.c.b16 %v2023, %v2019
        %v3516 = vpack.c.b16 %v2024, %v2020
        %v3517 = vpack.c.b16 %v2029, %v2025
        %v3518 = vpack.c.b16 %v2030, %v2026
        %v3519 = vpack.c.b16 %v2031, %v2027
        %v3520 = vpack.c.b16 %v2032, %v2028
        %v3521 = vpack.c.b16 %v2037, %v2033
        %v3522 = vpack.c.b16 %v2038, %v2034
        %v3523 = vpack.c.b16 %v2039, %v2035
        %v3524 = vpack.c.b16 %v2040, %v2036
        %v3525 = vpack.c.b16 %v2045, %v2041
        %v3526 = vpack.c.b16 %v2046, %v2042
        %v3527 = vpack.c.b16 %v2047, %v2043
        %v3528 = vpack.c.b16 %v2048, %v2044
        %v3529 = vpack.c.b16 %v2053, %v2049
        %v3530 = vpack.c.b16 %v2054, %v2050
        %v3531 = vpack.c.b16 %v2055, %v2051
        %v3532 = vpack.c.b16 %v2056, %v2052
        %v3533 = vpack.c.b16 %v2061, %v2057
        %v3534 = vpack.c.b16 %v2062, %v2058
        %v3535 = vpack.c.b16 %v2063, %v2059
        %v3536 = vpack.c.b16 %v2064, %v2060
        %v3537 = vpack.c.b16 %v2069, %v2065
        %v3538 = vpack.c.b16 %v2070, %v2066
        %v3539 = vpack.c.b16 %v2071, %v2067
        %v3540 = vpack.c.b16 %v2072, %v2068
        %v3541 = vpack.c.b16 %v2077, %v2073
        %v3542 = vpack.c.b16 %v2078, %v2074
        %v3543 = vpack.c.b16 %v2079, %v2075
        %v3544 = vpack.c.b16 %v2080, %v2076
        %v3545 = vpack.c.b16 %v2085, %v2081
        %v3546 = vpack.c.b16 %v2086, %v2082
        %v3547 = vpack.c.b16 %v2087, %v2083
        %v3548 = vpack.c.b16 %v2088, %v2084
        %v3549 = vpack.c.b16 %v2093, %v2089
        %v3550 = vpack.c.b16 %v2094, %v2090
        %v3551 = vpack.c.b16 %v2095, %v2091
        %v3552 = vpack.c.b16 %v2096, %v2092
        %v3553 = vpack.c.b16 %v2101, %v2097
        %v3554 = vpack.c.b16 %v2102, %v2098
        %v3555 = vpack.c.b16 %v2103, %v2099
        %v3556 = vpack.c.b16 %v2104, %v2100
        %v3557 = vpack.c.b16 %v2109, %v2105
        %v3558 = vpack.c.b16 %v2110, %v2106
        %v3559 = vpack.c.b16 %v2111, %v2107
        %v3560 = vpack.c.b16 %v2112, %v2108
        %v3561 = vpack.c.b16 %v2117, %v2113
        %v3562 = vpack.c.b16 %v2118, %v2114
        %v3563 = vpack.c.b16 %v2119, %v2115
        %v3564 = vpack.c.b16 %v2120, %v2116
        %v3565 = vpack.c.b16 %v2125, %v2121
        %v3566 = vpack.c.b16 %v2126, %v2122
        %v3567 = vpack.c.b16 %v2127, %v2123
        %v3568 = vpack.c.b16 %v2128, %v2124
        %v3569 = vpack.c.b16 %v2133, %v2129
        %v3570 = vpack.c.b16 %v2134, %v2130
        %v3571 = vpack.c.b16 %v2135, %v2131
        %v3572 = vpack.c.b16 %v2136, %v2132
        %v3573 = vpack.c.b16 %v2141, %v2137
        %v3574 = vpack.c.b16 %v2142, %v2138
        %v3575 = vpack.c.b16 %v2143, %v2139
        %v3576 = vpack.c.b16 %v2144, %v2140
        %v3577 = vpack.c.b16 %v2149, %v2145
        %v3578 = vpack.c.b16 %v2150, %v2146
        %v3579 = vpack.c.b16 %v2151, %v2147
        %v3580 = vpack.c.b16 %v2152, %v2148
        %v3581 = vpack.c.b16 %v2157, %v2153
        %v3582 = vpack.c.b16 %v2158, %v2154
        %v3583 = vpack.c.b16 %v2159, %v2155
        %v3584 = vpack.c.b16 %v2160, %v2156
        %v3585 = vpack.c.b16 %v2165, %v2161
        %v3586 = vpack.c.b16 %v2166, %v2162
        %v3587 = vpack.c.b16 %v2167, %v2163
        %v3588 = vpack.c.b16 %v2168, %v2164
        %v3589 = vpack.c.b16 %v2173, %v2169
        %v3590 = vpack.c.b16 %v2174, %v2170
        %v3591 = vpack.c.b16 %v2175, %v2171
        %v3592 = vpack.c.b16 %v2176, %v2172
        %v3593 = vpack.c.b16 %v2181, %v2177
        %v3594 = vpack.c.b16 %v2182, %v2178
        %v3595 = vpack.c.b16 %v2183, %v2179
        %v3596 = vpack.c.b16 %v2184, %v2180
        %v3597 = vpack.c.b16 %v2189, %v2185
        %v3598 = vpack.c.b16 %v2190, %v2186
        %v3599 = vpack.c.b16 %v2191, %v2187
        %v3600 = vpack.c.b16 %v2192, %v2188
        %v3601 = vpack.c.b16 %v2197, %v2193
        %v3602 = vpack.c.b16 %v2198, %v2194
        %v3603 = vpack.c.b16 %v2199, %v2195
        %v3604 = vpack.c.b16 %v2200, %v2196
        %v3605 = vpack.c.b16 %v2205, %v2201
        %v3606 = vpack.c.b16 %v2206, %v2202
        %v3607 = vpack.c.b16 %v2207, %v2203
        %v3608 = vpack.c.b16 %v2208, %v2204
        %v3609 = vpack.c.b16 %v2213, %v2209
        %v3610 = vpack.c.b16 %v2214, %v2210
        %v3611 = vpack.c.b16 %v2215, %v2211
        %v3612 = vpack.c.b16 %v2216, %v2212
        %v3613 = vpack.c.b16 %v2221, %v2217
        %v3614 = vpack.c.b16 %v2222, %v2218
        %v3615 = vpack.c.b16 %v2223, %v2219
        %v3616 = vpack.c.b16 %v2224, %v2220
        %v3617 = vpack.c.b16 %v2229, %v2225
        %v3618 = vpack.c.b16 %v2230, %v2226
        %v3619 = vpack.c.b16 %v2231, %v2227
        %v3620 = vpack.c.b16 %v2232, %v2228
        %v3621 = vpack.c.b16 %v2237, %v2233
        %v3622 = vpack.c.b16 %v2238, %v2234
        %v3623 = vpack.c.b16 %v2239, %v2235
        %v3624 = vpack.c.b16 %v2240, %v2236
        %v3625 = vpack.c.b16 %v2245, %v2241
        %v3626 = vpack.c.b16 %v2246, %v2242
        %v3627 = vpack.c.b16 %v2247, %v2243
        %v3628 = vpack.c.b16 %v2248, %v2244
        %v3629 = vpack.c.b16 %v2253, %v2249
        %v3630 = vpack.c.b16 %v2254, %v2250
        %v3631 = vpack.c.b16 %v2255, %v2251
        %v3632 = vpack.c.b16 %v2256, %v2252
        %v3633 = vpack.c.b16 %v2261, %v2257
        %v3634 = vpack.c.b16 %v2262, %v2258
        %v3635 = vpack.c.b16 %v2263, %v2259
        %v3636 = vpack.c.b16 %v2264, %v2260
        %v3637 = vpack.c.b16 %v2269, %v2265
        %v3638 = vpack.c.b16 %v2270, %v2266
        %v3639 = vpack.c.b16 %v2271, %v2267
        %v3640 = vpack.c.b16 %v2272, %v2268
        %v3641 = vpack.c.b16 %v2277, %v2273
        %v3642 = vpack.c.b16 %v2278, %v2274
        %v3643 = vpack.c.b16 %v2279, %v2275
        %v3644 = vpack.c.b16 %v2280, %v2276
        %v3645 = vpack.c.b16 %v2285, %v2281
        %v3646 = vpack.c.b16 %v2286, %v2282
        %v3647 = vpack.c.b16 %v2287, %v2283
        %v3648 = vpack.c.b16 %v2288, %v2284
        %v3649 = vpack.c.b16 %v2293, %v2289
        %v3650 = vpack.c.b16 %v2294, %v2290
        %v3651 = vpack.c.b16 %v2295, %v2291
        %v3652 = vpack.c.b16 %v2296, %v2292
        %v3653 = vpack.c.b16 %v2301, %v2297
        %v3654 = vpack.c.b16 %v2302, %v2298
        %v3655 = vpack.c.b16 %v2303, %v2299
        %v3656 = vpack.c.b16 %v2304, %v2300
        %v3657 = vpack.c.b16 %v2309, %v2305
        %v3658 = vpack.c.b16 %v2310, %v2306
        %v3659 = vpack.c.b16 %v2311, %v2307
        %v3660 = vpack.c.b16 %v2312, %v2308
        %v3661 = vpack.c.b16 %v2317, %v2313
        %v3662 = vpack.c.b16 %v2318, %v2314
        %v3663 = vpack.c.b16 %v2319, %v2315
        %v3664 = vpack.c.b16 %v2320, %v2316
        %v3665 = vpack.c.b16 %v2325, %v2321
        %v3666 = vpack.c.b16 %v2326, %v2322
        %v3667 = vpack.c.b16 %v2327, %v2323
        %v3668 = vpack.c.b16 %v2328, %v2324
        %v3669 = vpack.c.b16 %v2333, %v2329
        %v3670 = vpack.c.b16 %v2334, %v2330
        %v3671 = vpack.c.b16 %v2335, %v2331
        %v3672 = vpack.c.b16 %v2336, %v2332
        %v3673 = vpack.c.b16 %v2341, %v2337
        %v3674 = vpack.c.b16 %v2342, %v2338
        %v3675 = vpack.c.b16 %v2343, %v2339
        %v3676 = vpack.c.b16 %v2344, %v2340
        %v3677 = vpack.c.b16 %v2349, %v2345
        %v3678 = vpack.c.b16 %v2350, %v2346
        %v3679 = vpack.c.b16 %v2351, %v2347
        %v3680 = vpack.c.b16 %v2352, %v2348
        %v3681 = vpack.c.b16 %v2357, %v2353
        %v3682 = vpack.c.b16 %v2358, %v2354
        %v3683 = vpack.c.b16 %v2359, %v2355
        %v3684 = vpack.c.b16 %v2360, %v2356
        %v3685 = vpack.c.b16 %v2365, %v2361
        %v3686 = vpack.c.b16 %v2366, %v2362
        %v3687 = vpack.c.b16 %v2367, %v2363
        %v3688 = vpack.c.b16 %v2368, %v2364
        %v3689 = vpack.c.b16 %v2373, %v2369
        %v3690 = vpack.c.b16 %v2374, %v2370
        %v3691 = vpack.c.b16 %v2375, %v2371
        %v3692 = vpack.c.b16 %v2376, %v2372
        %v3693 = vpack.c.b16 %v2381, %v2377
        %v3694 = vpack.c.b16 %v2382, %v2378
        %v3695 = vpack.c.b16 %v2383, %v2379
        %v3696 = vpack.c.b16 %v2384, %v2380
        %v3697 = vpack.c.b16 %v2389, %v2385
        %v3698 = vpack.c.b16 %v2390, %v2386
        %v3699 = vpack.c.b16 %v2391, %v2387
        %v3700 = vpack.c.b16 %v2392, %v2388
        %v3701 = vpack.c.b16 %v2397, %v2393
        %v3702 = vpack.c.b16 %v2398, %v2394
        %v3703 = vpack.c.b16 %v2399, %v2395
        %v3704 = vpack.c.b16 %v2400, %v2396
        %v3705 = vpack.c.b16 %v2405, %v2401
        %v3706 = vpack.c.b16 %v2406, %v2402
        %v3707 = vpack.c.b16 %v2407, %v2403
        %v3708 = vpack.c.b16 %v2408, %v2404
        %v3709 = vpack.c.b16 %v2413, %v2409
        %v3710 = vpack.c.b16 %v2414, %v2410
        %v3711 = vpack.c.b16 %v2415, %v2411
        %v3712 = vpack.c.b16 %v2416, %v2412
        %v3713 = vpack.c.b16 %v2421, %v2417
        %v3714 = vpack.c.b16 %v2422, %v2418
        %v3715 = vpack.c.b16 %v2423, %v2419
        %v3716 = vpack.c.b16 %v2424, %v2420
        %v3717 = vpack.c.b16 %v2429, %v2425
        %v3718 = vpack.c.b16 %v2430, %v2426
        %v3719 = vpack.c.b16 %v2431, %v2427
        %v3720 = vpack.c.b16 %v2432, %v2428
        %v3721 = vpack.c.b16 %v2437, %v2433
        %v3722 = vpack.c.b16 %v2438, %v2434
        %v3723 = vpack.c.b16 %v2439, %v2435
        %v3724 = vpack.c.b16 %v2440, %v2436
        %v3725 = vpack.c.b16 %v2445, %v2441
        %v3726 = vpack.c.b16 %v2446, %v2442
        %v3727 = vpack.c.b16 %v2447, %v2443
        %v3728 = vpack.c.b16 %v2448, %v2444
        %v3729 = vpack.c.b16 %v2453, %v2449
        %v3730 = vpack.c.b16 %v2454, %v2450
        %v3731 = vpack.c.b16 %v2455, %v2451
        %v3732 = vpack.c.b16 %v2456, %v2452
        %v3733 = vpack.c.b16 %v2461, %v2457
        %v3734 = vpack.c.b16 %v2462, %v2458
        %v3735 = vpack.c.b16 %v2463, %v2459
        %v3736 = vpack.c.b16 %v2464, %v2460
        %v3737 = vpack.c.b16 %v2469, %v2465
        %v3738 = vpack.c.b16 %v2470, %v2466
        %v3739 = vpack.c.b16 %v2471, %v2467
        %v3740 = vpack.c.b16 %v2472, %v2468
        %v3741 = vpack.c.b16 %v2477, %v2473
        %v3742 = vpack.c.b16 %v2478, %v2474
        %v3743 = vpack.c.b16 %v2479, %v2475
        %v3744 = vpack.c.b16 %v2480, %v2476
        %v3745 = vpack.c.b16 %v2485, %v2481
        %v3746 = vpack.c.b16 %v2486, %v2482
        %v3747 = vpack.c.b16 %v2487, %v2483
        %v3748 = vpack.c.b16 %v2488, %v2484
        %v3749 = vpack.c.b16 %v2493, %v2489
        %v3750 = vpack.c.b16 %v2494, %v2490
        %v3751 = vpack.c.b16 %v2495, %v2491
        %v3752 = vpack.c.b16 %v2496, %v2492
        %v3753 = vpack.c.b16 %v2501, %v2497
        %v3754 = vpack.c.b16 %v2502, %v2498
        %v3755 = vpack.c.b16 %v2503, %v2499
        %v3756 = vpack.c.b16 %v2504, %v2500
        %v3757 = vpack.c.b16 %v2509, %v2505
        %v3758 = vpack.c.b16 %v2510, %v2506
        %v3759 = vpack.c.b16 %v2511, %v2507
        %v3760 = vpack.c.b16 %v2512, %v2508
        %v3761 = vpack.c.b16 %v2517, %v2513
        %v3762 = vpack.c.b16 %v2518, %v2514
        %v3763 = vpack.c.b16 %v2519, %v2515
        %v3764 = vpack.c.b16 %v2520, %v2516
        %v3765 = vpack.c.b16 %v2525, %v2521
        %v3766 = vpack.c.b16 %v2526, %v2522
        %v3767 = vpack.c.b16 %v2527, %v2523
        %v3768 = vpack.c.b16 %v2528, %v2524
        %v3769 = vpack.c.b16 %v2533, %v2529
        %v3770 = vpack.c.b16 %v2534, %v2530
        %v3771 = vpack.c.b16 %v2535, %v2531
        %v3772 = vpack.c.b16 %v2536, %v2532
        %v3773 = vpack.c.b16 %v2541, %v2537
        %v3774 = vpack.c.b16 %v2542, %v2538
        %v3775 = vpack.c.b16 %v2543, %v2539
        %v3776 = vpack.c.b16 %v2544, %v2540
        %v3777 = vpack.c.b16 %v2549, %v2545
        %v3778 = vpack.c.b16 %v2550, %v2546
        %v3779 = vpack.c.b16 %v2551, %v2547
        %v3780 = vpack.c.b16 %v2552, %v2548
        %v3781 = vpack.c.b16 %v2557, %v2553
        %v3782 = vpack.c.b16 %v2558, %v2554
        %v3783 = vpack.c.b16 %v2559, %v2555
        %v3784 = vpack.c.b16 %v2560, %v2556
        %v3785 = vpack.c.b16 %v2565, %v2561
        %v3786 = vpack.c.b16 %v2566, %v2562
        %v3787 = vpack.c.b16 %v2567, %v2563
        %v3788 = vpack.c.b16 %v2568, %v2564
        %v3789 = vpack.c.b16 %v2573, %v2569
        %v3790 = vpack.c.b16 %v2574, %v2570
        %v3791 = vpack.c.b16 %v2575, %v2571
        %v3792 = vpack.c.b16 %v2576, %v2572
        %v3793 = vpack.c.b16 %v2581, %v2577
        %v3794 = vpack.c.b16 %v2582, %v2578
        %v3795 = vpack.c.b16 %v2583, %v2579
        %v3796 = vpack.c.b16 %v2584, %v2580
        %v3797 = vpack.c.b16 %v2589, %v2585
        %v3798 = vpack.c.b16 %v2590, %v2586
        %v3799 = vpack.c.b16 %v2591, %v2587
        %v3800 = vpack.c.b16 %v2592, %v2588
        %v3801 = vpack.c.b16 %v2597, %v2593
        %v3802 = vpack.c.b16 %v2598, %v2594
        %v3803 = vpack.c.b16 %v2599, %v2595
        %v3804 = vpack.c.b16 %v2600, %v2596
        %v3805 = vpack.c.b16 %v2605, %v2601
        %v3806 = vpack.c.b16 %v2606, %v2602
        %v3807 = vpack.c.b16 %v2607, %v2603
        %v3808 = vpack.c.b16 %v2608, %v2604
        %v3809 = vpack.c.b16 %v2613, %v2609
        %v3810 = vpack.c.b16 %v2614, %v2610
        %v3811 = vpack.c.b16 %v2615, %v2611
        %v3812 = vpack.c.b16 %v2616, %v2612
        %v3813 = vpack.c.b16 %v2621, %v2617
        %v3814 = vpack.c.b16 %v2622, %v2618
        %v3815 = vpack.c.b16 %v2623, %v2619
        %v3816 = vpack.c.b16 %v2624, %v2620
        %v3817 = vpack.c.b16 %v2629, %v2625
        %v3818 = vpack.c.b16 %v2630, %v2626
        %v3819 = vpack.c.b16 %v2631, %v2627
        %v3820 = vpack.c.b16 %v2632, %v2628
        %v3821 = vpack.c.b16 %v2637, %v2633
        %v3822 = vpack.c.b16 %v2638, %v2634
        %v3823 = vpack.c.b16 %v2639, %v2635
        %v3824 = vpack.c.b16 %v2640, %v2636
        %v3825 = vpack.c.b16 %v2645, %v2641
        %v3826 = vpack.c.b16 %v2646, %v2642
        %v3827 = vpack.c.b16 %v2647, %v2643
        %v3828 = vpack.c.b16 %v2648, %v2644
        %v3829 = vpack.c.b16 %v2653, %v2649
        %v3830 = vpack.c.b16 %v2654, %v2650
        %v3831 = vpack.c.b16 %v2655, %v2651
        %v3832 = vpack.c.b16 %v2656, %v2652
        %v3833 = vpack.c.b16 %v2661, %v2657
        %v3834 = vpack.c.b16 %v2662, %v2658
        %v3835 = vpack.c.b16 %v2663, %v2659
        %v3836 = vpack.c.b16 %v2664, %v2660
        %v3837 = vpack.c.b16 %v2669, %v2665
        %v3838 = vpack.c.b16 %v2670, %v2666
        %v3839 = vpack.c.b16 %v2671, %v2667
        %v3840 = vpack.c.b16 %v2672, %v2668
        %v3841 = vpack.c.b16 %v2677, %v2673
        %v3842 = vpack.c.b16 %v2678, %v2674
        %v3843 = vpack.c.b16 %v2679, %v2675
        %v3844 = vpack.c.b16 %v2680, %v2676
        %v3845 = vpack.c.b16 %v2685, %v2681
        %v3846 = vpack.c.b16 %v2686, %v2682
        %v3847 = vpack.c.b16 %v2687, %v2683
        %v3848 = vpack.c.b16 %v2688, %v2684
        %v3849 = vpack.c.b16 %v2693, %v2689
        %v3850 = vpack.c.b16 %v2694, %v2690
        %v3851 = vpack.c.b16 %v2695, %v2691
        %v3852 = vpack.c.b16 %v2696, %v2692
        %v3853 = vpack.c.b16 %v2701, %v2697
        %v3854 = vpack.c.b16 %v2702, %v2698
        %v3855 = vpack.c.b16 %v2703, %v2699
        %v3856 = vpack.c.b16 %v2704, %v2700
        %v3857 = vpack.c.b16 %v2709, %v2705
        %v3858 = vpack.c.b16 %v2710, %v2706
        %v3859 = vpack.c.b16 %v2711, %v2707
        %v3860 = vpack.c.b16 %v2712, %v2708
        %v3861 = vpack.c.b16 %v2717, %v2713
        %v3862 = vpack.c.b16 %v2718, %v2714
        %v3863 = vpack.c.b16 %v2719, %v2715
        %v3864 = vpack.c.b16 %v2720, %v2716
        %v3865 = vpack.c.b16 %v2725, %v2721
        %v3866 = vpack.c.b16 %v2726, %v2722
        %v3867 = vpack.c.b16 %v2727, %v2723
        %v3868 = vpack.c.b16 %v2728, %v2724
        %v3869 = vpack.c.b16 %v2733, %v2729
        %v3870 = vpack.c.b16 %v2734, %v2730
        %v3871 = vpack.c.b16 %v2735, %v2731
        %v3872 = vpack.c.b16 %v2736, %v2732
        %v3873 = vpack.c.b16 %v2741, %v2737
        %v3874 = vpack.c.b16 %v2742, %v2738
        %v3875 = vpack.c.b16 %v2743, %v2739
        %v3876 = vpack.c.b16 %v2744, %v2740
        %v3877 = vpack.c.b16 %v2749, %v2745
        %v3878 = vpack.c.b16 %v2750, %v2746
        %v3879 = vpack.c.b16 %v2751, %v2747
        %v3880 = vpack.c.b16 %v2752, %v2748
        %v3881 = vpack.c.b16 %v2757, %v2753
        %v3882 = vpack.c.b16 %v2758, %v2754
        %v3883 = vpack.c.b16 %v2759, %v2755
        %v3884 = vpack.c.b16 %v2760, %v2756
        %v3885 = vpack.c.b16 %v2765, %v2761
        %v3886 = vpack.c.b16 %v2766, %v2762
        %v3887 = vpack.c.b16 %v2767, %v2763
        %v3888 = vpack.c.b16 %v2768, %v2764
        %v3889 = vpack.c.b16 %v2773, %v2769
        %v3890 = vpack.c.b16 %v2774, %v2770
        %v3891 = vpack.c.b16 %v2775, %v2771
        %v3892 = vpack.c.b16 %v2776, %v2772
        %v3893 = vpack.c.b16 %v2781, %v2777
        %v3894 = vpack.c.b16 %v2782, %v2778
        %v3895 = vpack.c.b16 %v2783, %v2779
        %v3896 = vpack.c.b16 %v2784, %v2780
        %v3897 = vpack.c.b16 %v2789, %v2785
        %v3898 = vpack.c.b16 %v2790, %v2786
        %v3899 = vpack.c.b16 %v2791, %v2787
        %v3900 = vpack.c.b16 %v2792, %v2788
        %v3901 = vpack.c.b16 %v2797, %v2793
        %v3902 = vpack.c.b16 %v2798, %v2794
        %v3903 = vpack.c.b16 %v2799, %v2795
        %v3904 = vpack.c.b16 %v2800, %v2796
        %v3905 = vpack.c.b16 %v2805, %v2801
        %v3906 = vpack.c.b16 %v2806, %v2802
        %v3907 = vpack.c.b16 %v2807, %v2803
        %v3908 = vpack.c.b16 %v2808, %v2804
        %v3909 = vpack.c.b16 %v2813, %v2809
        %v3910 = vpack.c.b16 %v2814, %v2810
        %v3911 = vpack.c.b16 %v2815, %v2811
        %v3912 = vpack.c.b16 %v2816, %v2812
        %v3913 = vpack.c.b16 %v2821, %v2817
        %v3914 = vpack.c.b16 %v2822, %v2818
        %v3915 = vpack.c.b16 %v2823, %v2819
        %v3916 = vpack.c.b16 %v2824, %v2820
        %v3917 = vpack.c.b16 %v2829, %v2825
        %v3918 = vpack.c.b16 %v2830, %v2826
        %v3919 = vpack.c.b16 %v2831, %v2827
        %v3920 = vpack.c.b16 %v2832, %v2828
        %v3921 = vpack.c.b16 %v2837, %v2833
        %v3922 = vpack.c.b16 %v2838, %v2834
        %v3923 = vpack.c.b16 %v2839, %v2835
        %v3924 = vpack.c.b16 %v2840, %v2836
        %v3925 = vpack.c.b16 %v2845, %v2841
        %v3926 = vpack.c.b16 %v2846, %v2842
        %v3927 = vpack.c.b16 %v2847, %v2843
        %v3928 = vpack.c.b16 %v2848, %v2844
        %v3929 = vpack.c.b16 %v2853, %v2849
        %v3930 = vpack.c.b16 %v2854, %v2850
        %v3931 = vpack.c.b16 %v2855, %v2851
        %v3932 = vpack.c.b16 %v2856, %v2852
        %v3933 = vpack.c.b16 %v2861, %v2857
        %v3934 = vpack.c.b16 %v2862, %v2858
        %v3935 = vpack.c.b16 %v2863, %v2859
        %v3936 = vpack.c.b16 %v2864, %v2860
        %v3937 = vpack.c.b16 %v2869, %v2865
        %v3938 = vpack.c.b16 %v2870, %v2866
        %v3939 = vpack.c.b16 %v2871, %v2867
        %v3940 = vpack.c.b16 %v2872, %v2868
        %v3941 = vpack.c.b16 %v2877, %v2873
        %v3942 = vpack.c.b16 %v2878, %v2874
        %v3943 = vpack.c.b16 %v2879, %v2875
        %v3944 = vpack.c.b16 %v2880, %v2876
        %v3945 = vpack.c.b16 %v2885, %v2881
        %v3946 = vpack.c.b16 %v2886, %v2882
        %v3947 = vpack.c.b16 %v2887, %v2883
        %v3948 = vpack.c.b16 %v2888, %v2884
        %v3949 = vpack.c.b16 %v2893, %v2889
        %v3950 = vpack.c.b16 %v2894, %v2890
        %v3951 = vpack.c.b16 %v2895, %v2891
        %v3952 = vpack.c.b16 %v2896, %v2892
        %v3953 = vpack.c.b16 %v2901, %v2897
        %v3954 = vpack.c.b16 %v2902, %v2898
        %v3955 = vpack.c.b16 %v2903, %v2899
        %v3956 = vpack.c.b16 %v2904, %v2900
        %v3957 = vpack.c.b16 %v2909, %v2905
        %v3958 = vpack.c.b16 %v2910, %v2906
        %v3959 = vpack.c.b16 %v2911, %v2907
        %v3960 = vpack.c.b16 %v2912, %v2908
        %v3961 = vpack.c.b16 %v2917, %v2913
        %v3962 = vpack.c.b16 %v2918, %v2914
        %v3963 = vpack.c.b16 %v2919, %v2915
        %v3964 = vpack.c.b16 %v2920, %v2916
        %v3965 = vpack.c.b16 %v2925, %v2921
        %v3966 = vpack.c.b16 %v2926, %v2922
        %v3967 = vpack.c.b16 %v2927, %v2923
        %v3968 = vpack.c.b16 %v2928, %v2924
        %v3969 = vpack.c.b16 %v2933, %v2929
        %v3970 = vpack.c.b16 %v2934, %v2930
        %v3971 = vpack.c.b16 %v2935, %v2931
        %v3972 = vpack.c.b16 %v2936, %v2932
        %v3973 = vpack.c.b16 %v2941, %v2937
        %v3974 = vpack.c.b16 %v2942, %v2938
        %v3975 = vpack.c.b16 %v2943, %v2939
        %v3976 = vpack.c.b16 %v2944, %v2940
        %v3977 = vpack.c.b16 %v2949, %v2945
        %v3978 = vpack.c.b16 %v2950, %v2946
        %v3979 = vpack.c.b16 %v2951, %v2947
        %v3980 = vpack.c.b16 %v2952, %v2948
        %v3981 = vpack.c.b16 %v2957, %v2953
        %v3982 = vpack.c.b16 %v2958, %v2954
        %v3983 = vpack.c.b16 %v2959, %v2955
        %v3984 = vpack.c.b16 %v2960, %v2956
        %v3985 = vpack.c.b16 %v2965, %v2961
        %v3986 = vpack.c.b16 %v2966, %v2962
        %v3987 = vpack.c.b16 %v2967, %v2963
        %v3988 = vpack.c.b16 %v2968, %v2964
        %v3989 = vpack.c.b16 %v2973, %v2969
        %v3990 = vpack.c.b16 %v2974, %v2970
        %v3991 = vpack.c.b16 %v2975, %v2971
        %v3992 = vpack.c.b16 %v2976, %v2972
        %v3993 = vpack.c.b16 %v2981, %v2977
        %v3994 = vpack.c.b16 %v2982, %v2978
        %v3995 = vpack.c.b16 %v2983, %v2979
        %v3996 = vpack.c.b16 %v2984, %v2980
        %v3997 = vpack.c.b16 %v2989, %v2985
        %v3998 = vpack.c.b16 %v2990, %v2986
        %v3999 = vpack.c.b16 %v2991, %v2987
        %v4000 = vpack.c.b16 %v2992, %v2988
        %v4001 = vpack.c.b16 %v2997, %v2993
        %v4002 = vpack.c.b16 %v2998, %v2994
        %v4003 = vpack.c.b16 %v2999, %v2995
        %v4004 = vpack.c.b16 %v3000, %v2996
        %v4005 = vpack.c.b16 %v3005, %v3001
        %v4006 = vpack.c.b16 %v3006, %v3002
        %v4007 = vpack.c.b16 %v3007, %v3003
        %v4008 = vpack.c.b16 %v3008, %v3004
        %v4009 = vpack.c.b16 %v3013, %v3009
        %v4010 = vpack.c.b16 %v3014, %v3010
        %v4011 = vpack.c.b16 %v3015, %v3011
        %v4012 = vpack.c.b16 %v3016, %v3012
        %v4013 = vpack.c.b16 %v3021, %v3017
        %v4014 = vpack.c.b16 %v3022, %v3018
        %v4015 = vpack.c.b16 %v3023, %v3019
        %v4016 = vpack.c.b16 %v3024, %v3020
        %v4017 = vpack.c.b16 %v3029, %v3025
        %v4018 = vpack.c.b16 %v3030, %v3026
        %v4019 = vpack.c.b16 %v3031, %v3027
        %v4020 = vpack.c.b16 %v3032, %v3028
        %v4021 = vpack.c.b16 %v3037, %v3033
        %v4022 = vpack.c.b16 %v3038, %v3034
        %v4023 = vpack.c.b16 %v3039, %v3035
        %v4024 = vpack.c.b16 %v3040, %v3036
        %v4025 = vpack.c.b16 %v3045, %v3041
        %v4026 = vpack.c.b16 %v3046, %v3042
        %v4027 = vpack.c.b16 %v3047, %v3043
        %v4028 = vpack.c.b16 %v3048, %v3044
        %v4029 = vpack.c.b16 %v3053, %v3049
        %v4030 = vpack.c.b16 %v3054, %v3050
        %v4031 = vpack.c.b16 %v3055, %v3051
        %v4032 = vpack.c.b16 %v3056, %v3052
        %v4033 = vpack.c.b16 %v3061, %v3057
        %v4034 = vpack.c.b16 %v3062, %v3058
        %v4035 = vpack.c.b16 %v3063, %v3059
        %v4036 = vpack.c.b16 %v3064, %v3060
        %v4037 = vpack.c.b16 %v3069, %v3065
        %v4038 = vpack.c.b16 %v3070, %v3066
        %v4039 = vpack.c.b16 %v3071, %v3067
        %v4040 = vpack.c.b16 %v3072, %v3068
        %v4041 = vpack.c.b16 %v3077, %v3073
        %v4042 = vpack.c.b16 %v3078, %v3074
        %v4043 = vpack.c.b16 %v3079, %v3075
        %v4044 = vpack.c.b16 %v3080, %v3076
        %v4045 = vpack.c.b16 %v3085, %v3081
        %v4046 = vpack.c.b16 %v3086, %v3082
        %v4047 = vpack.c.b16 %v3087, %v3083
        %v4048 = vpack.c.b16 %v3088, %v3084
        %v4049 = vpack.c.b16 %v3093, %v3089
        %v4050 = vpack.c.b16 %v3094, %v3090
        %v4051 = vpack.c.b16 %v3095, %v3091
        %v4052 = vpack.c.b16 %v3096, %v3092
        %v4053 = vpack.c.b16 %v3101, %v3097
        %v4054 = vpack.c.b16 %v3102, %v3098
        %v4055 = vpack.c.b16 %v3103, %v3099
        %v4056 = vpack.c.b16 %v3104, %v3100
        %v4057 = vpack.c.b16 %v3109, %v3105
        %v4058 = vpack.c.b16 %v3110, %v3106
        %v4059 = vpack.c.b16 %v3111, %v3107
        %v4060 = vpack.c.b16 %v3112, %v3108
        %v4061 = vpack.c.b16 %v3117, %v3113
        %v4062 = vpack.c.b16 %v3118, %v3114
        %v4063 = vpack.c.b16 %v3119, %v3115
        %v4064 = vpack.c.b16 %v3120, %v3116
        %v4065 = vpack.c.b16 %v3125, %v3121
        %v4066 = vpack.c.b16 %v3126, %v3122
        %v4067 = vpack.c.b16 %v3127, %v3123
        %v4068 = vpack.c.b16 %v3128, %v3124
        %v4069 = vpack.c.b16 %v3133, %v3129
        %v4070 = vpack.c.b16 %v3134, %v3130
        %v4071 = vpack.c.b16 %v3135, %v3131
        %v4072 = vpack.c.b16 %v3136, %v3132
        %v4073 = vpack.c.b16 %v3141, %v3137
        %v4074 = vpack.c.b16 %v3142, %v3138
        %v4075 = vpack.c.b16 %v3143, %v3139
        %v4076 = vpack.c.b16 %v3144, %v3140
        %v4077 = vpack.c.b16 %v3149, %v3145
        %v4078 = vpack.c.b16 %v3150, %v3146
        %v4079 = vpack.c.b16 %v3151, %v3147
        %v4080 = vpack.c.b16 %v3152, %v3148
        %v4081 = vpack.c.b16 %v3157, %v3153
        %v4082 = vpack.c.b16 %v3158, %v3154
        %v4083 = vpack.c.b16 %v3159, %v3155
        %v4084 = vpack.c.b16 %v3160, %v3156
        %v4085 = vpack.c.b16 %v3165, %v3161
        %v4086 = vpack.c.b16 %v3166, %v3162
        %v4087 = vpack.c.b16 %v3167, %v3163
        %v4088 = vpack.c.b16 %v3168, %v3164
        %v4089 = vpack.c.b16 %v3173, %v3169
        %v4090 = vpack.c.b16 %v3174, %v3170
        %v4091 = vpack.c.b16 %v3175, %v3171
        %v4092 = vpack.c.b16 %v3176, %v3172
        %v4093 = vpack.c.b16 %v3181, %v3177
        %v4094 = vpack.c.b16 %v3182, %v3178
        %v4095 = vpack.c.b16 %v3183, %v3179
        %v4096 = vpack.c.b16 %v3184, %v3180
        %v4097 = vpack.c.b16 %v3189, %v3185
        %v4098 = vpack.c.b16 %v3190, %v3186
        %v4099 = vpack.c.b16 %v3191, %v3187
        %v4100 = vpack.c.b16 %v3192, %v3188
        %v4101 = vpack.c.b16 %v3197, %v3193
        %v4102 = vpack.c.b16 %v3198, %v3194
        %v4103 = vpack.c.b16 %v3199, %v3195
        %v4104 = vpack.c.b16 %v3200, %v3196
        %v4105 = vpack.c.b16 %v3205, %v3201
        %v4106 = vpack.c.b16 %v3206, %v3202
        %v4107 = vpack.c.b16 %v3207, %v3203
        %v4108 = vpack.c.b16 %v3208, %v3204
        %v4109 = vpack.c.b16 %v3213, %v3209
        %v4110 = vpack.c.b16 %v3214, %v3210
        %v4111 = vpack.c.b16 %v3215, %v3211
        %v4112 = vpack.c.b16 %v3216, %v3212
        %v4113 = vpack.c.b16 %v3221, %v3217
        %v4114 = vpack.c.b16 %v3222, %v3218
        %v4115 = vpack.c.b16 %v3223, %v3219
        %v4116 = vpack.c.b16 %v3224, %v3220
        %v4117 = vpack.c.b16 %v3229, %v3225
        %v4118 = vpack.c.b16 %v3230, %v3226
        %v4119 = vpack.c.b16 %v3231, %v3227
        %v4120 = vpack.c.b16 %v3232, %v3228
        %v4121 = vpack.c.b16 %v3237, %v3233
        %v4122 = vpack.c.b16 %v3238, %v3234
        %v4123 = vpack.c.b16 %v3239, %v3235
        %v4124 = vpack.c.b16 %v3240, %v3236
        %v4125 = vpack.c.b16 %v3245, %v3241
        %v4126 = vpack.c.b16 %v3246, %v3242
        %v4127 = vpack.c.b16 %v3247, %v3243
        %v4128 = vpack.c.b16 %v3248, %v3244
        %v4129 = vpack.c.b16 %v3253, %v3249
        %v4130 = vpack.c.b16 %v3254, %v3250
        %v4131 = vpack.c.b16 %v3255, %v3251
        %v4132 = vpack.c.b16 %v3256, %v3252
        %v4133 = vpack.c.b16 %v3261, %v3257
        %v4134 = vpack.c.b16 %v3262, %v3258
        %v4135 = vpack.c.b16 %v3263, %v3259
        %v4136 = vpack.c.b16 %v3264, %v3260
        %v4137 = vpack.c.b16 %v3269, %v3265
        %v4138 = vpack.c.b16 %v3270, %v3266
        %v4139 = vpack.c.b16 %v3271, %v3267
        %v4140 = vpack.c.b16 %v3272, %v3268
        %v4141 = vpack.c.b16 %v3277, %v3273
        %v4142 = vpack.c.b16 %v3278, %v3274
        %v4143 = vpack.c.b16 %v3279, %v3275
        %v4144 = vpack.c.b16 %v3280, %v3276
        %v4145 = vpack.c.b16 %v3285, %v3281
        %v4146 = vpack.c.b16 %v3286, %v3282
        %v4147 = vpack.c.b16 %v3287, %v3283
        %v4148 = vpack.c.b16 %v3288, %v3284
        %v4149 = vpack.c.b16 %v3293, %v3289
        %v4150 = vpack.c.b16 %v3294, %v3290
        %v4151 = vpack.c.b16 %v3295, %v3291
        %v4152 = vpack.c.b16 %v3296, %v3292
        %v4153 = vpack.c.b16 %v3301, %v3297
        %v4154 = vpack.c.b16 %v3302, %v3298
        %v4155 = vpack.c.b16 %v3303, %v3299
        %v4156 = vpack.c.b16 %v3304, %v3300
        %v4157 = vpack.c.b16 %v3309, %v3305
        %v4158 = vpack.c.b16 %v3310, %v3306
        %v4159 = vpack.c.b16 %v3311, %v3307
        %v4160 = vpack.c.b16 %v3312, %v3308
        %v4161 = vpack.c.b16 %v3317, %v3313
        %v4162 = vpack.c.b16 %v3318, %v3314
        %v4163 = vpack.c.b16 %v3319, %v3315
        %v4164 = vpack.c.b16 %v3320, %v3316
        %v4165 = vpack.c.b16 %v3325, %v3321
        %v4166 = vpack.c.b16 %v3326, %v3322
        %v4167 = vpack.c.b16 %v3327, %v3323
        %v4168 = vpack.c.b16 %v3328, %v3324
        %v4169 = vpack.c.b16 %v3333, %v3329
        %v4170 = vpack.c.b16 %v3334, %v3330
        %v4171 = vpack.c.b16 %v3335, %v3331
        %v4172 = vpack.c.b16 %v3336, %v3332
        %v4173 = vpack.c.b16 %v3341, %v3337
        %v4174 = vpack.c.b16 %v3342, %v3338
        %v4175 = vpack.c.b16 %v3343, %v3339
        %v4176 = vpack.c.b16 %v3344, %v3340
        %v4177 = vpack.c.b16 %v3349, %v3345
        %v4178 = vpack.c.b16 %v3350, %v3346
        %v4179 = vpack.c.b16 %v3351, %v3347
        %v4180 = vpack.c.b16 %v3352, %v3348
        %v4181 = vpack.c.b16 %v3357, %v3353
        %v4182 = vpack.c.b16 %v3358, %v3354
        %v4183 = vpack.c.b16 %v3359, %v3355
        %v4184 = vpack.c.b16 %v3360, %v3356
        %v4185 = vpack.c.b16 %v3365, %v3361
        %v4186 = vpack.c.b16 %v3366, %v3362
        %v4187 = vpack.c.b16 %v3367, %v3363
        %v4188 = vpack.c.b16 %v3368, %v3364
        %v4189 = vpack.c.b16 %v3373, %v3369
        %v4190 = vpack.c.b16 %v3374, %v3370
        %v4191 = vpack.c.b16 %v3375, %v3371
        %v4192 = vpack.c.b16 %v3376, %v3372
        %v4193 = vpack.c.b16 %v3381, %v3377
        %v4194 = vpack.c.b16 %v3382, %v3378
        %v4195 = vpack.c.b16 %v3383, %v3379
        %v4196 = vpack.c.b16 %v3384, %v3380
        %v4197 = vpack.c.b16 %v3389, %v3385
        %v4198 = vpack.c.b16 %v3390, %v3386
        %v4199 = vpack.c.b16 %v3391, %v3387
        %v4200 = vpack.c.b16 %v3392, %v3388
        %v4201 = vpack.c.b16 %v3397, %v3393
        %v4202 = vpack.c.b16 %v3398, %v3394
        %v4203 = vpack.c.b16 %v3399, %v3395
        %v4204 = vpack.c.b16 %v3400, %v3396
        %v4205 = vpack.c.b16 %v3405, %v3401
        %v4206 = vpack.c.b16 %v3406, %v3402
        %v4207 = vpack.c.b16 %v3407, %v3403
        %v4208 = vpack.c.b16 %v3408, %v3404
        %v4209 = vpack.c.b16 %v3413, %v3409
        %v4210 = vpack.c.b16 %v3414, %v3410
        %v4211 = vpack.c.b16 %v3415, %v3411
        %v4212 = vpack.c.b16 %v3416, %v3412
        %v4213 = vpack.c.b16 %v3421, %v3417
        %v4214 = vpack.c.b16 %v3422, %v3418
        %v4215 = vpack.c.b16 %v3423, %v3419
        %v4216 = vpack.c.b16 %v3424, %v3420
        %v4217 = vpack.c.b16 %v3429, %v3425
        %v4218 = vpack.c.b16 %v3430, %v3426
        %v4219 = vpack.c.b16 %v3431, %v3427
        %v4220 = vpack.c.b16 %v3432, %v3428
        %v4221 = vpack.c.b16 %v3437, %v3433
        %v4222 = vpack.c.b16 %v3438, %v3434
        %v4223 = vpack.c.b16 %v3439, %v3435
        %v4224 = vpack.c.b16 %v3440, %v3436
        %v4225 = vpack.c.b16 %v3445, %v3441
        %v4226 = vpack.c.b16 %v3446, %v3442
        %v4227 = vpack.c.b16 %v3447, %v3443
        %v4228 = vpack.c.b16 %v3448, %v3444
        %v4229 = vpack.c.b16 %v3453, %v3449
        %v4230 = vpack.c.b16 %v3454, %v3450
        %v4231 = vpack.c.b16 %v3455, %v3451
        %v4232 = vpack.c.b16 %v3456, %v3452
        %v4233 = vpack.c.b16 %v3461, %v3457
        %v4234 = vpack.c.b16 %v3462, %v3458
        %v4235 = vpack.c.b16 %v3463, %v3459
        %v4236 = vpack.c.b16 %v3464, %v3460
        %v4237 = vpack.c.b16 %v3469, %v3465
        %v4238 = vpack.c.b16 %v3470, %v3466
        %v4239 = vpack.c.b16 %v3471, %v3467
        %v4240 = vpack.c.b16 %v3472, %v3468
        %5009 = vmatprep.subr.bf16.mxu0 %v3502
        %5010 = vmatpush1.bf16.msra.mxu0 %v3501
        %5011 = vmatprep.subr.bf16.mxu0 %v3498
        %5012 = vmatpush1.bf16.msra.mxu0 %v3497
        %5013 = vmatprep.subr.bf16.mxu0 %v3494
        %5014 = vmatpush1.bf16.msra.mxu0 %v3493
        %5015 = vmatprep.subr.bf16.mxu0 %v3490
        %5016 = vmatpush1.bf16.msra.mxu0 %v3489
        %5017 = vmatprep.subr.bf16.mxu0 %v3486
        %5018 = vmatpush1.bf16.msra.mxu0 %v3485
        %5019 = vmatprep.subr.bf16.mxu0 %v3482
        %5020 = vmatpush1.bf16.msra.mxu0 %v3481
        %5021 = vmatprep.subr.bf16.mxu0 %v3478
        %5022 = vmatpush1.bf16.msra.mxu0 %v3477
        %5023 = vmatprep.subr.bf16.mxu0 %v3474
        %5024 = vmatpush1.bf16.msra.mxu0 %v3473
        %5025 = vmatprep.subr.bf16.mxu0 %v3534
        %5026 = vmatpush2.bf16.msra.mxu0 %v3533
        %5027 = vmatprep.subr.bf16.mxu0 %v3530
        %5028 = vmatpush2.bf16.msra.mxu0 %v3529
        %5029 = vmatprep.subr.bf16.mxu0 %v3526
        %5030 = vmatpush2.bf16.msra.mxu0 %v3525
        %5031 = vmatprep.subr.bf16.mxu0 %v3522
        %5032 = vmatpush2.bf16.msra.mxu0 %v3521
        %5033 = vmatprep.subr.bf16.mxu0 %v3518
        %5034 = vmatpush2.bf16.msra.mxu0 %v3517
        %5035 = vmatprep.subr.bf16.mxu0 %v3514
        %5036 = vmatpush2.bf16.msra.mxu0 %v3513
        %5037 = vmatprep.subr.bf16.mxu0 %v3510
        %5038 = vmatpush2.bf16.msra.mxu0 %v3509
        %5039 = vmatprep.subr.bf16.mxu0 %v3506
        %5040 = vmatpush2.bf16.msra.mxu0 %v3505
        %5041 = vmatprep.mubr.bf16.mxu0 %v1122
        %5042 = vmatmul.mubr.bf16.gmra.mxu0 %v1121
        %v5043 = vpop.f32.mrf.mxu0
        %v5044 = vadd.f32 0.0, %v5043
        %v5045 = vpop.f32.mrf.mxu0
        %v5046 = vadd.f32 0.0, %v5045
        %v5047 = vpop.f32.mrf.mxu0
        %v5048 = vpop.f32.mrf.mxu0
        %5049 = vdwg.mxu0
        %5050 = vmatprep.subr.bf16.mxu0 %v3566
        %5051 = vmatpush1.bf16.msra.mxu0 %v3565
        %5052 = vmatprep.subr.bf16.mxu0 %v3562
        %5053 = vmatpush1.bf16.msra.mxu0 %v3561
        %5054 = vmatprep.subr.bf16.mxu0 %v3558
        %5055 = vmatpush1.bf16.msra.mxu0 %v3557
        %5056 = vmatprep.subr.bf16.mxu0 %v3554
        %5057 = vmatpush1.bf16.msra.mxu0 %v3553
        %5058 = vmatprep.subr.bf16.mxu0 %v3550
        %5059 = vmatpush1.bf16.msra.mxu0 %v3549
        %5060 = vmatprep.subr.bf16.mxu0 %v3546
        %5061 = vmatpush1.bf16.msra.mxu0 %v3545
        %5062 = vmatprep.subr.bf16.mxu0 %v3542
        %5063 = vmatpush1.bf16.msra.mxu0 %v3541
        %5064 = vmatprep.subr.bf16.mxu0 %v3538
        %5065 = vmatpush1.bf16.msra.mxu0 %v3537
        %5066 = vmatprep.subr.bf16.mxu0 %v3598
        %5067 = vmatpush2.bf16.msra.mxu0 %v3597
        %5068 = vmatprep.subr.bf16.mxu0 %v3594
        %5069 = vmatpush2.bf16.msra.mxu0 %v3593
        %5070 = vmatprep.subr.bf16.mxu0 %v3590
        %5071 = vmatpush2.bf16.msra.mxu0 %v3589
        %5072 = vmatprep.subr.bf16.mxu0 %v3586
        %5073 = vmatpush2.bf16.msra.mxu0 %v3585
        %5074 = vmatprep.subr.bf16.mxu0 %v3582
        %5075 = vmatpush2.bf16.msra.mxu0 %v3581
        %5076 = vmatprep.subr.bf16.mxu0 %v3578
        %5077 = vmatpush2.bf16.msra.mxu0 %v3577
        %5078 = vmatprep.subr.bf16.mxu0 %v3574
        %5079 = vmatpush2.bf16.msra.mxu0 %v3573
        %5080 = vmatprep.subr.bf16.mxu0 %v3570
        %5081 = vmatpush2.bf16.msra.mxu0 %v3569
        %5082 = vmatprep.mubr.bf16.mxu0 %v1124
        %5083 = vmatmul.mubr.bf16.gmra.mxu0 %v1123
        %v5084 = vpop.f32.mrf.mxu0
        %v5085 = vadd.f32 %v5044, %v5084
        %v5086 = vpop.f32.mrf.mxu0
        %v5087 = vadd.f32 %v5046, %v5086
        %v5088 = vpop.f32.mrf.mxu0
        %v5089 = vpop.f32.mrf.mxu0
        %5090 = vdwg.mxu0
        %5091 = vmatprep.subr.bf16.mxu0 %v3630
        %5092 = vmatpush1.bf16.msra.mxu0 %v3629
        %5093 = vmatprep.subr.bf16.mxu0 %v3626
        %5094 = vmatpush1.bf16.msra.mxu0 %v3625
        %5095 = vmatprep.subr.bf16.mxu0 %v3622
        %5096 = vmatpush1.bf16.msra.mxu0 %v3621
        %5097 = vmatprep.subr.bf16.mxu0 %v3618
        %5098 = vmatpush1.bf16.msra.mxu0 %v3617
        %5099 = vmatprep.subr.bf16.mxu0 %v3614
        %5100 = vmatpush1.bf16.msra.mxu0 %v3613
        %5101 = vmatprep.subr.bf16.mxu0 %v3610
        %5102 = vmatpush1.bf16.msra.mxu0 %v3609
        %5103 = vmatprep.subr.bf16.mxu0 %v3606
        %5104 = vmatpush1.bf16.msra.mxu0 %v3605
        %5105 = vmatprep.subr.bf16.mxu0 %v3602
        %5106 = vmatpush1.bf16.msra.mxu0 %v3601
        %5107 = vmatprep.subr.bf16.mxu0 %v3662
        %5108 = vmatpush2.bf16.msra.mxu0 %v3661
        %5109 = vmatprep.subr.bf16.mxu0 %v3658
        %5110 = vmatpush2.bf16.msra.mxu0 %v3657
        %5111 = vmatprep.subr.bf16.mxu0 %v3654
        %5112 = vmatpush2.bf16.msra.mxu0 %v3653
        %5113 = vmatprep.subr.bf16.mxu0 %v3650
        %5114 = vmatpush2.bf16.msra.mxu0 %v3649
        %5115 = vmatprep.subr.bf16.mxu0 %v3646
        %5116 = vmatpush2.bf16.msra.mxu0 %v3645
        %5117 = vmatprep.subr.bf16.mxu0 %v3642
        %5118 = vmatpush2.bf16.msra.mxu0 %v3641
        %5119 = vmatprep.subr.bf16.mxu0 %v3638
        %5120 = vmatpush2.bf16.msra.mxu0 %v3637
        %5121 = vmatprep.subr.bf16.mxu0 %v3634
        %5122 = vmatpush2.bf16.msra.mxu0 %v3633
        %5123 = vmatprep.mubr.bf16.mxu0 %v1126
        %5124 = vmatmul.mubr.bf16.gmra.mxu0 %v1125
        %v5125 = vpop.f32.mrf.mxu0
        %v5126 = vadd.f32 %v5085, %v5125
        %v5127 = vpop.f32.mrf.mxu0
        %v5128 = vadd.f32 %v5087, %v5127
        %v5129 = vpop.f32.mrf.mxu0
        %v5130 = vpop.f32.mrf.mxu0
        %5131 = vdwg.mxu0
        %5132 = vmatprep.subr.bf16.mxu0 %v3694
        %5133 = vmatpush1.bf16.msra.mxu0 %v3693
        %5134 = vmatprep.subr.bf16.mxu0 %v3690
        %5135 = vmatpush1.bf16.msra.mxu0 %v3689
        %5136 = vmatprep.subr.bf16.mxu0 %v3686
        %5137 = vmatpush1.bf16.msra.mxu0 %v3685
        %5138 = vmatprep.subr.bf16.mxu0 %v3682
        %5139 = vmatpush1.bf16.msra.mxu0 %v3681
        %5140 = vmatprep.subr.bf16.mxu0 %v3678
        %5141 = vmatpush1.bf16.msra.mxu0 %v3677
        %5142 = vmatprep.subr.bf16.mxu0 %v3674
        %5143 = vmatpush1.bf16.msra.mxu0 %v3673
        %5144 = vmatprep.subr.bf16.mxu0 %v3670
        %5145 = vmatpush1.bf16.msra.mxu0 %v3669
        %5146 = vmatprep.subr.bf16.mxu0 %v3666
        %5147 = vmatpush1.bf16.msra.mxu0 %v3665
        %5148 = vmatprep.subr.bf16.mxu0 %v3726
        %5149 = vmatpush2.bf16.msra.mxu0 %v3725
        %5150 = vmatprep.subr.bf16.mxu0 %v3722
        %5151 = vmatpush2.bf16.msra.mxu0 %v3721
        %5152 = vmatprep.subr.bf16.mxu0 %v3718
        %5153 = vmatpush2.bf16.msra.mxu0 %v3717
        %5154 = vmatprep.subr.bf16.mxu0 %v3714
        %5155 = vmatpush2.bf16.msra.mxu0 %v3713
        %5156 = vmatprep.subr.bf16.mxu0 %v3710
        %5157 = vmatpush2.bf16.msra.mxu0 %v3709
        %5158 = vmatprep.subr.bf16.mxu0 %v3706
        %5159 = vmatpush2.bf16.msra.mxu0 %v3705
        %5160 = vmatprep.subr.bf16.mxu0 %v3702
        %5161 = vmatpush2.bf16.msra.mxu0 %v3701
        %5162 = vmatprep.subr.bf16.mxu0 %v3698
        %5163 = vmatpush2.bf16.msra.mxu0 %v3697
        %5164 = vmatprep.mubr.bf16.mxu0 %v1128
        %5165 = vmatmul.mubr.bf16.gmra.mxu0 %v1127
        %v5166 = vpop.f32.mrf.mxu0
        %v5167 = vadd.f32 %v5126, %v5166
        %v5168 = vpop.f32.mrf.mxu0
        %v5169 = vadd.f32 %v5128, %v5168
        %v5170 = vpop.f32.mrf.mxu0
        %v5171 = vpop.f32.mrf.mxu0
        %5172 = vdwg.mxu0
        %5173 = vmatprep.subr.bf16.mxu0 %v3758
        %5174 = vmatpush1.bf16.msra.mxu0 %v3757
        %5175 = vmatprep.subr.bf16.mxu0 %v3754
        %5176 = vmatpush1.bf16.msra.mxu0 %v3753
        %5177 = vmatprep.subr.bf16.mxu0 %v3750
        %5178 = vmatpush1.bf16.msra.mxu0 %v3749
        %5179 = vmatprep.subr.bf16.mxu0 %v3746
        %5180 = vmatpush1.bf16.msra.mxu0 %v3745
        %5181 = vmatprep.subr.bf16.mxu0 %v3742
        %5182 = vmatpush1.bf16.msra.mxu0 %v3741
        %5183 = vmatprep.subr.bf16.mxu0 %v3738
        %5184 = vmatpush1.bf16.msra.mxu0 %v3737
        %5185 = vmatprep.subr.bf16.mxu0 %v3734
        %5186 = vmatpush1.bf16.msra.mxu0 %v3733
        %5187 = vmatprep.subr.bf16.mxu0 %v3730
        %5188 = vmatpush1.bf16.msra.mxu0 %v3729
        %5189 = vmatprep.subr.bf16.mxu0 %v3790
        %5190 = vmatpush2.bf16.msra.mxu0 %v3789
        %5191 = vmatprep.subr.bf16.mxu0 %v3786
        %5192 = vmatpush2.bf16.msra.mxu0 %v3785
        %5193 = vmatprep.subr.bf16.mxu0 %v3782
        %5194 = vmatpush2.bf16.msra.mxu0 %v3781
        %5195 = vmatprep.subr.bf16.mxu0 %v3778
        %5196 = vmatpush2.bf16.msra.mxu0 %v3777
        %5197 = vmatprep.subr.bf16.mxu0 %v3774
        %5198 = vmatpush2.bf16.msra.mxu0 %v3773
        %5199 = vmatprep.subr.bf16.mxu0 %v3770
        %5200 = vmatpush2.bf16.msra.mxu0 %v3769
        %5201 = vmatprep.subr.bf16.mxu0 %v3766
        %5202 = vmatpush2.bf16.msra.mxu0 %v3765
        %5203 = vmatprep.subr.bf16.mxu0 %v3762
        %5204 = vmatpush2.bf16.msra.mxu0 %v3761
        %5205 = vmatprep.mubr.bf16.mxu0 %v1130
        %5206 = vmatmul.mubr.bf16.gmra.mxu0 %v1129
        %v5207 = vpop.f32.mrf.mxu0
        %v5208 = vadd.f32 %v5167, %v5207
        %v5209 = vpop.f32.mrf.mxu0
        %v5210 = vadd.f32 %v5169, %v5209
        %v5211 = vpop.f32.mrf.mxu0
        %v5212 = vpop.f32.mrf.mxu0
        %5213 = vdwg.mxu0
        %5214 = vmatprep.subr.bf16.mxu0 %v3822
        %5215 = vmatpush1.bf16.msra.mxu0 %v3821
        %5216 = vmatprep.subr.bf16.mxu0 %v3818
        %5217 = vmatpush1.bf16.msra.mxu0 %v3817
        %5218 = vmatprep.subr.bf16.mxu0 %v3814
        %5219 = vmatpush1.bf16.msra.mxu0 %v3813
        %5220 = vmatprep.subr.bf16.mxu0 %v3810
        %5221 = vmatpush1.bf16.msra.mxu0 %v3809
        %5222 = vmatprep.subr.bf16.mxu0 %v3806
        %5223 = vmatpush1.bf16.msra.mxu0 %v3805
        %5224 = vmatprep.subr.bf16.mxu0 %v3802
        %5225 = vmatpush1.bf16.msra.mxu0 %v3801
        %5226 = vmatprep.subr.bf16.mxu0 %v3798
        %5227 = vmatpush1.bf16.msra.mxu0 %v3797
        %5228 = vmatprep.subr.bf16.mxu0 %v3794
        %5229 = vmatpush1.bf16.msra.mxu0 %v3793
        %5230 = vmatprep.subr.bf16.mxu0 %v3854
        %5231 = vmatpush2.bf16.msra.mxu0 %v3853
        %5232 = vmatprep.subr.bf16.mxu0 %v3850
        %5233 = vmatpush2.bf16.msra.mxu0 %v3849
        %5234 = vmatprep.subr.bf16.mxu0 %v3846
        %5235 = vmatpush2.bf16.msra.mxu0 %v3845
        %5236 = vmatprep.subr.bf16.mxu0 %v3842
        %5237 = vmatpush2.bf16.msra.mxu0 %v3841
        %5238 = vmatprep.subr.bf16.mxu0 %v3838
        %5239 = vmatpush2.bf16.msra.mxu0 %v3837
        %5240 = vmatprep.subr.bf16.mxu0 %v3834
        %5241 = vmatpush2.bf16.msra.mxu0 %v3833
        %5242 = vmatprep.subr.bf16.mxu0 %v3830
        %5243 = vmatpush2.bf16.msra.mxu0 %v3829
        %5244 = vmatprep.subr.bf16.mxu0 %v3826
        %5245 = vmatpush2.bf16.msra.mxu0 %v3825
        %5246 = vmatprep.mubr.bf16.mxu0 %v1132
        %5247 = vmatmul.mubr.bf16.gmra.mxu0 %v1131
        %v5248 = vpop.f32.mrf.mxu0
        %v5249 = vadd.f32 %v5208, %v5248
        %v5250 = vpop.f32.mrf.mxu0
        %v5251 = vadd.f32 %v5210, %v5250
        %v5252 = vpop.f32.mrf.mxu0
        %v5253 = vpop.f32.mrf.mxu0
        %5254 = vdwg.mxu0
        %5255 = vmatprep.subr.bf16.mxu0 %v3886
        %5256 = vmatpush1.bf16.msra.mxu0 %v3885
        %5257 = vmatprep.subr.bf16.mxu0 %v3882
        %5258 = vmatpush1.bf16.msra.mxu0 %v3881
        %5259 = vmatprep.subr.bf16.mxu0 %v3878
        %5260 = vmatpush1.bf16.msra.mxu0 %v3877
        %5261 = vmatprep.subr.bf16.mxu0 %v3874
        %5262 = vmatpush1.bf16.msra.mxu0 %v3873
        %5263 = vmatprep.subr.bf16.mxu0 %v3870
        %5264 = vmatpush1.bf16.msra.mxu0 %v3869
        %5265 = vmatprep.subr.bf16.mxu0 %v3866
        %5266 = vmatpush1.bf16.msra.mxu0 %v3865
        %5267 = vmatprep.subr.bf16.mxu0 %v3862
        %5268 = vmatpush1.bf16.msra.mxu0 %v3861
        %5269 = vmatprep.subr.bf16.mxu0 %v3858
        %5270 = vmatpush1.bf16.msra.mxu0 %v3857
        %5271 = vmatprep.subr.bf16.mxu0 %v3918
        %5272 = vmatpush2.bf16.msra.mxu0 %v3917
        %5273 = vmatprep.subr.bf16.mxu0 %v3914
        %5274 = vmatpush2.bf16.msra.mxu0 %v3913
        %5275 = vmatprep.subr.bf16.mxu0 %v3910
        %5276 = vmatpush2.bf16.msra.mxu0 %v3909
        %5277 = vmatprep.subr.bf16.mxu0 %v3906
        %5278 = vmatpush2.bf16.msra.mxu0 %v3905
        %5279 = vmatprep.subr.bf16.mxu0 %v3902
        %5280 = vmatpush2.bf16.msra.mxu0 %v3901
        %5281 = vmatprep.subr.bf16.mxu0 %v3898
        %5282 = vmatpush2.bf16.msra.mxu0 %v3897
        %5283 = vmatprep.subr.bf16.mxu0 %v3894
        %5284 = vmatpush2.bf16.msra.mxu0 %v3893
        %5285 = vmatprep.subr.bf16.mxu0 %v3890
        %5286 = vmatpush2.bf16.msra.mxu0 %v3889
        %5287 = vmatprep.mubr.bf16.mxu0 %v1134
        %5288 = vmatmul.mubr.bf16.gmra.mxu0 %v1133
        %v5289 = vpop.f32.mrf.mxu0
        %v5290 = vadd.f32 %v5249, %v5289
        %v5291 = vpop.f32.mrf.mxu0
        %v5292 = vadd.f32 %v5251, %v5291
        %v5293 = vpop.f32.mrf.mxu0
        %v5294 = vpop.f32.mrf.mxu0
        %5295 = vdwg.mxu0
        %5296 = vmatprep.subr.bf16.mxu0 %v3950
        %5297 = vmatpush1.bf16.msra.mxu0 %v3949
        %5298 = vmatprep.subr.bf16.mxu0 %v3946
        %5299 = vmatpush1.bf16.msra.mxu0 %v3945
        %5300 = vmatprep.subr.bf16.mxu0 %v3942
        %5301 = vmatpush1.bf16.msra.mxu0 %v3941
        %5302 = vmatprep.subr.bf16.mxu0 %v3938
        %5303 = vmatpush1.bf16.msra.mxu0 %v3937
        %5304 = vmatprep.subr.bf16.mxu0 %v3934
        %5305 = vmatpush1.bf16.msra.mxu0 %v3933
        %5306 = vmatprep.subr.bf16.mxu0 %v3930
        %5307 = vmatpush1.bf16.msra.mxu0 %v3929
        %5308 = vmatprep.subr.bf16.mxu0 %v3926
        %5309 = vmatpush1.bf16.msra.mxu0 %v3925
        %5310 = vmatprep.subr.bf16.mxu0 %v3922
        %5311 = vmatpush1.bf16.msra.mxu0 %v3921
        %5312 = vmatprep.subr.bf16.mxu0 %v3982
        %5313 = vmatpush2.bf16.msra.mxu0 %v3981
        %5314 = vmatprep.subr.bf16.mxu0 %v3978
        %5315 = vmatpush2.bf16.msra.mxu0 %v3977
        %5316 = vmatprep.subr.bf16.mxu0 %v3974
        %5317 = vmatpush2.bf16.msra.mxu0 %v3973
        %5318 = vmatprep.subr.bf16.mxu0 %v3970
        %5319 = vmatpush2.bf16.msra.mxu0 %v3969
        %5320 = vmatprep.subr.bf16.mxu0 %v3966
        %5321 = vmatpush2.bf16.msra.mxu0 %v3965
        %5322 = vmatprep.subr.bf16.mxu0 %v3962
        %5323 = vmatpush2.bf16.msra.mxu0 %v3961
        %5324 = vmatprep.subr.bf16.mxu0 %v3958
        %5325 = vmatpush2.bf16.msra.mxu0 %v3957
        %5326 = vmatprep.subr.bf16.mxu0 %v3954
        %5327 = vmatpush2.bf16.msra.mxu0 %v3953
        %5328 = vmatprep.mubr.bf16.mxu0 %v1136
        %5329 = vmatmul.mubr.bf16.gmra.mxu0 %v1135
        %v5330 = vpop.f32.mrf.mxu0
        %v5331 = vadd.f32 %v5290, %v5330
        %v5332 = vpop.f32.mrf.mxu0
        %v5333 = vadd.f32 %v5292, %v5332
        %v5334 = vpop.f32.mrf.mxu0
        %v5335 = vpop.f32.mrf.mxu0
        %5336 = vdwg.mxu0
        %5337 = vmatprep.subr.bf16.mxu0 %v4014
        %5338 = vmatpush1.bf16.msra.mxu0 %v4013
        %5339 = vmatprep.subr.bf16.mxu0 %v4010
        %5340 = vmatpush1.bf16.msra.mxu0 %v4009
        %5341 = vmatprep.subr.bf16.mxu0 %v4006
        %5342 = vmatpush1.bf16.msra.mxu0 %v4005
        %5343 = vmatprep.subr.bf16.mxu0 %v4002
        %5344 = vmatpush1.bf16.msra.mxu0 %v4001
        %5345 = vmatprep.subr.bf16.mxu0 %v3998
        %5346 = vmatpush1.bf16.msra.mxu0 %v3997
        %5347 = vmatprep.subr.bf16.mxu0 %v3994
        %5348 = vmatpush1.bf16.msra.mxu0 %v3993
        %5349 = vmatprep.subr.bf16.mxu0 %v3990
        %5350 = vmatpush1.bf16.msra.mxu0 %v3989
        %5351 = vmatprep.subr.bf16.mxu0 %v3986
        %5352 = vmatpush1.bf16.msra.mxu0 %v3985
        %5353 = vmatprep.subr.bf16.mxu0 %v4046
        %5354 = vmatpush2.bf16.msra.mxu0 %v4045
        %5355 = vmatprep.subr.bf16.mxu0 %v4042
        %5356 = vmatpush2.bf16.msra.mxu0 %v4041
        %5357 = vmatprep.subr.bf16.mxu0 %v4038
        %5358 = vmatpush2.bf16.msra.mxu0 %v4037
        %5359 = vmatprep.subr.bf16.mxu0 %v4034
        %5360 = vmatpush2.bf16.msra.mxu0 %v4033
        %5361 = vmatprep.subr.bf16.mxu0 %v4030
        %5362 = vmatpush2.bf16.msra.mxu0 %v4029
        %5363 = vmatprep.subr.bf16.mxu0 %v4026
        %5364 = vmatpush2.bf16.msra.mxu0 %v4025
        %5365 = vmatprep.subr.bf16.mxu0 %v4022
        %5366 = vmatpush2.bf16.msra.mxu0 %v4021
        %5367 = vmatprep.subr.bf16.mxu0 %v4018
        %5368 = vmatpush2.bf16.msra.mxu0 %v4017
        %5369 = vmatprep.mubr.bf16.mxu0 %v1138
        %5370 = vmatmul.mubr.bf16.gmra.mxu0 %v1137
        %v5371 = vpop.f32.mrf.mxu0
        %v5372 = vadd.f32 %v5331, %v5371
        %v5373 = vpop.f32.mrf.mxu0
        %v5374 = vadd.f32 %v5333, %v5373
        %v5375 = vpop.f32.mrf.mxu0
        %v5376 = vpop.f32.mrf.mxu0
        %5377 = vdwg.mxu0
        %5378 = vmatprep.subr.bf16.mxu0 %v4078
        %5379 = vmatpush1.bf16.msra.mxu0 %v4077
        %5380 = vmatprep.subr.bf16.mxu0 %v4074
        %5381 = vmatpush1.bf16.msra.mxu0 %v4073
        %5382 = vmatprep.subr.bf16.mxu0 %v4070
        %5383 = vmatpush1.bf16.msra.mxu0 %v4069
        %5384 = vmatprep.subr.bf16.mxu0 %v4066
        %5385 = vmatpush1.bf16.msra.mxu0 %v4065
        %5386 = vmatprep.subr.bf16.mxu0 %v4062
        %5387 = vmatpush1.bf16.msra.mxu0 %v4061
        %5388 = vmatprep.subr.bf16.mxu0 %v4058
        %5389 = vmatpush1.bf16.msra.mxu0 %v4057
        %5390 = vmatprep.subr.bf16.mxu0 %v4054
        %5391 = vmatpush1.bf16.msra.mxu0 %v4053
        %5392 = vmatprep.subr.bf16.mxu0 %v4050
        %5393 = vmatpush1.bf16.msra.mxu0 %v4049
        %5394 = vmatprep.subr.bf16.mxu0 %v4110
        %5395 = vmatpush2.bf16.msra.mxu0 %v4109
        %5396 = vmatprep.subr.bf16.mxu0 %v4106
        %5397 = vmatpush2.bf16.msra.mxu0 %v4105
        %5398 = vmatprep.subr.bf16.mxu0 %v4102
        %5399 = vmatpush2.bf16.msra.mxu0 %v4101
        %5400 = vmatprep.subr.bf16.mxu0 %v4098
        %5401 = vmatpush2.bf16.msra.mxu0 %v4097
        %5402 = vmatprep.subr.bf16.mxu0 %v4094
        %5403 = vmatpush2.bf16.msra.mxu0 %v4093
        %5404 = vmatprep.subr.bf16.mxu0 %v4090
        %5405 = vmatpush2.bf16.msra.mxu0 %v4089
        %5406 = vmatprep.subr.bf16.mxu0 %v4086
        %5407 = vmatpush2.bf16.msra.mxu0 %v4085
        %5408 = vmatprep.subr.bf16.mxu0 %v4082
        %5409 = vmatpush2.bf16.msra.mxu0 %v4081
        %5410 = vmatprep.mubr.bf16.mxu0 %v1140
        %5411 = vmatmul.mubr.bf16.gmra.mxu0 %v1139
        %v5412 = vpop.f32.mrf.mxu0
        %v5413 = vadd.f32 %v5372, %v5412
        %v5414 = vpop.f32.mrf.mxu0
        %v5415 = vadd.f32 %v5374, %v5414
        %v5416 = vpop.f32.mrf.mxu0
        %v5417 = vpop.f32.mrf.mxu0
        %5418 = vdwg.mxu0
        %5419 = vmatprep.subr.bf16.mxu0 %v4142
        %5420 = vmatpush1.bf16.msra.mxu0 %v4141
        %5421 = vmatprep.subr.bf16.mxu0 %v4138
        %5422 = vmatpush1.bf16.msra.mxu0 %v4137
        %5423 = vmatprep.subr.bf16.mxu0 %v4134
        %5424 = vmatpush1.bf16.msra.mxu0 %v4133
        %5425 = vmatprep.subr.bf16.mxu0 %v4130
        %5426 = vmatpush1.bf16.msra.mxu0 %v4129
        %5427 = vmatprep.subr.bf16.mxu0 %v4126
        %5428 = vmatpush1.bf16.msra.mxu0 %v4125
        %5429 = vmatprep.subr.bf16.mxu0 %v4122
        %5430 = vmatpush1.bf16.msra.mxu0 %v4121
        %5431 = vmatprep.subr.bf16.mxu0 %v4118
        %5432 = vmatpush1.bf16.msra.mxu0 %v4117
        %5433 = vmatprep.subr.bf16.mxu0 %v4114
        %5434 = vmatpush1.bf16.msra.mxu0 %v4113
        %5435 = vmatprep.subr.bf16.mxu0 %v4174
        %5436 = vmatpush2.bf16.msra.mxu0 %v4173
        %5437 = vmatprep.subr.bf16.mxu0 %v4170
        %5438 = vmatpush2.bf16.msra.mxu0 %v4169
        %5439 = vmatprep.subr.bf16.mxu0 %v4166
        %5440 = vmatpush2.bf16.msra.mxu0 %v4165
        %5441 = vmatprep.subr.bf16.mxu0 %v4162
        %5442 = vmatpush2.bf16.msra.mxu0 %v4161
        %5443 = vmatprep.subr.bf16.mxu0 %v4158
        %5444 = vmatpush2.bf16.msra.mxu0 %v4157
        %5445 = vmatprep.subr.bf16.mxu0 %v4154
        %5446 = vmatpush2.bf16.msra.mxu0 %v4153
        %5447 = vmatprep.subr.bf16.mxu0 %v4150
        %5448 = vmatpush2.bf16.msra.mxu0 %v4149
        %5449 = vmatprep.subr.bf16.mxu0 %v4146
        %5450 = vmatpush2.bf16.msra.mxu0 %v4145
        %5451 = vmatprep.mubr.bf16.mxu0 %v1142
        %5452 = vmatmul.mubr.bf16.gmra.mxu0 %v1141
        %v5453 = vpop.f32.mrf.mxu0
        %v5454 = vadd.f32 %v5413, %v5453
        %v5455 = vpop.f32.mrf.mxu0
        %v5456 = vadd.f32 %v5415, %v5455
        %v5457 = vpop.f32.mrf.mxu0
        %v5458 = vpop.f32.mrf.mxu0
        %5459 = vdwg.mxu0
        %5460 = vmatprep.subr.bf16.mxu0 %v4206
        %5461 = vmatpush1.bf16.msra.mxu0 %v4205
        %5462 = vmatprep.subr.bf16.mxu0 %v4202
        %5463 = vmatpush1.bf16.msra.mxu0 %v4201
        %5464 = vmatprep.subr.bf16.mxu0 %v4198
        %5465 = vmatpush1.bf16.msra.mxu0 %v4197
        %5466 = vmatprep.subr.bf16.mxu0 %v4194
        %5467 = vmatpush1.bf16.msra.mxu0 %v4193
        %5468 = vmatprep.subr.bf16.mxu0 %v4190
        %5469 = vmatpush1.bf16.msra.mxu0 %v4189
        %5470 = vmatprep.subr.bf16.mxu0 %v4186
        %5471 = vmatpush1.bf16.msra.mxu0 %v4185
        %5472 = vmatprep.subr.bf16.mxu0 %v4182
        %5473 = vmatpush1.bf16.msra.mxu0 %v4181
        %5474 = vmatprep.subr.bf16.mxu0 %v4178
        %5475 = vmatpush1.bf16.msra.mxu0 %v4177
        %5476 = vmatprep.subr.bf16.mxu0 %v4238
        %5477 = vmatpush2.bf16.msra.mxu0 %v4237
        %5478 = vmatprep.subr.bf16.mxu0 %v4234
        %5479 = vmatpush2.bf16.msra.mxu0 %v4233
        %5480 = vmatprep.subr.bf16.mxu0 %v4230
        %5481 = vmatpush2.bf16.msra.mxu0 %v4229
        %5482 = vmatprep.subr.bf16.mxu0 %v4226
        %5483 = vmatpush2.bf16.msra.mxu0 %v4225
        %5484 = vmatprep.subr.bf16.mxu0 %v4222
        %5485 = vmatpush2.bf16.msra.mxu0 %v4221
        %5486 = vmatprep.subr.bf16.mxu0 %v4218
        %5487 = vmatpush2.bf16.msra.mxu0 %v4217
        %5488 = vmatprep.subr.bf16.mxu0 %v4214
        %5489 = vmatpush2.bf16.msra.mxu0 %v4213
        %5490 = vmatprep.subr.bf16.mxu0 %v4210
        %5491 = vmatpush2.bf16.msra.mxu0 %v4209
        %5492 = vmatprep.mubr.bf16.mxu0 %v1144
        %5493 = vmatmul.mubr.bf16.gmra.mxu0 %v1143
        %v5494 = vpop.f32.mrf.mxu0
        %v5495 = vadd.f32 %v5454, %v5494
        %v5496 = vpop.f32.mrf.mxu0
        %v5497 = vadd.f32 %v5456, %v5496
        %v5498 = vpop.f32.mrf.mxu0
        %v5499 = vpop.f32.mrf.mxu0
        %5500 = vdwg.mxu0
        %5501 = vmatprep.subr.bf16.mxu0 %v3504
        %5502 = vmatpush1.bf16.msra.mxu0 %v3503
        %5503 = vmatprep.subr.bf16.mxu0 %v3500
        %5504 = vmatpush1.bf16.msra.mxu0 %v3499
        %5505 = vmatprep.subr.bf16.mxu0 %v3496
        %5506 = vmatpush1.bf16.msra.mxu0 %v3495
        %5507 = vmatprep.subr.bf16.mxu0 %v3492
        %5508 = vmatpush1.bf16.msra.mxu0 %v3491
        %5509 = vmatprep.subr.bf16.mxu0 %v3488
        %5510 = vmatpush1.bf16.msra.mxu0 %v3487
        %5511 = vmatprep.subr.bf16.mxu0 %v3484
        %5512 = vmatpush1.bf16.msra.mxu0 %v3483
        %5513 = vmatprep.subr.bf16.mxu0 %v3480
        %5514 = vmatpush1.bf16.msra.mxu0 %v3479
        %5515 = vmatprep.subr.bf16.mxu0 %v3476
        %5516 = vmatpush1.bf16.msra.mxu0 %v3475
        %5517 = vmatprep.subr.bf16.mxu0 %v3536
        %5518 = vmatpush2.bf16.msra.mxu0 %v3535
        %5519 = vmatprep.subr.bf16.mxu0 %v3532
        %5520 = vmatpush2.bf16.msra.mxu0 %v3531
        %5521 = vmatprep.subr.bf16.mxu0 %v3528
        %5522 = vmatpush2.bf16.msra.mxu0 %v3527
        %5523 = vmatprep.subr.bf16.mxu0 %v3524
        %5524 = vmatpush2.bf16.msra.mxu0 %v3523
        %5525 = vmatprep.subr.bf16.mxu0 %v3520
        %5526 = vmatpush2.bf16.msra.mxu0 %v3519
        %5527 = vmatprep.subr.bf16.mxu0 %v3516
        %5528 = vmatpush2.bf16.msra.mxu0 %v3515
        %5529 = vmatprep.subr.bf16.mxu0 %v3512
        %5530 = vmatpush2.bf16.msra.mxu0 %v3511
        %5531 = vmatprep.subr.bf16.mxu0 %v3508
        %5532 = vmatpush2.bf16.msra.mxu0 %v3507
        %5533 = vmatprep.mubr.bf16.mxu0 %v1122
        %5534 = vmatmul.mubr.bf16.gmra.mxu0 %v1121
        %v5535 = vpop.f32.mrf.mxu0
        %v5536 = vadd.f32 0.0, %v5535
        %v5537 = vpop.f32.mrf.mxu0
        %v5538 = vadd.f32 0.0, %v5537
        %v5539 = vpop.f32.mrf.mxu0
        %v5540 = vpop.f32.mrf.mxu0
        %5541 = vdwg.mxu0
        %5542 = vmatprep.subr.bf16.mxu0 %v3568
        %5543 = vmatpush1.bf16.msra.mxu0 %v3567
        %5544 = vmatprep.subr.bf16.mxu0 %v3564
        %5545 = vmatpush1.bf16.msra.mxu0 %v3563
        %5546 = vmatprep.subr.bf16.mxu0 %v3560
        %5547 = vmatpush1.bf16.msra.mxu0 %v3559
        %5548 = vmatprep.subr.bf16.mxu0 %v3556
        %5549 = vmatpush1.bf16.msra.mxu0 %v3555
        %5550 = vmatprep.subr.bf16.mxu0 %v3552
        %5551 = vmatpush1.bf16.msra.mxu0 %v3551
        %5552 = vmatprep.subr.bf16.mxu0 %v3548
        %5553 = vmatpush1.bf16.msra.mxu0 %v3547
        %5554 = vmatprep.subr.bf16.mxu0 %v3544
        %5555 = vmatpush1.bf16.msra.mxu0 %v3543
        %5556 = vmatprep.subr.bf16.mxu0 %v3540
        %5557 = vmatpush1.bf16.msra.mxu0 %v3539
        %5558 = vmatprep.subr.bf16.mxu0 %v3600
        %5559 = vmatpush2.bf16.msra.mxu0 %v3599
        %5560 = vmatprep.subr.bf16.mxu0 %v3596
        %5561 = vmatpush2.bf16.msra.mxu0 %v3595
        %5562 = vmatprep.subr.bf16.mxu0 %v3592
        %5563 = vmatpush2.bf16.msra.mxu0 %v3591
        %5564 = vmatprep.subr.bf16.mxu0 %v3588
        %5565 = vmatpush2.bf16.msra.mxu0 %v3587
        %5566 = vmatprep.subr.bf16.mxu0 %v3584
        %5567 = vmatpush2.bf16.msra.mxu0 %v3583
        %5568 = vmatprep.subr.bf16.mxu0 %v3580
        %5569 = vmatpush2.bf16.msra.mxu0 %v3579
        %5570 = vmatprep.subr.bf16.mxu0 %v3576
        %5571 = vmatpush2.bf16.msra.mxu0 %v3575
        %5572 = vmatprep.subr.bf16.mxu0 %v3572
        %5573 = vmatpush2.bf16.msra.mxu0 %v3571
        %5574 = vmatprep.mubr.bf16.mxu0 %v1124
        %5575 = vmatmul.mubr.bf16.gmra.mxu0 %v1123
        %v5576 = vpop.f32.mrf.mxu0
        %v5577 = vadd.f32 %v5536, %v5576
        %v5578 = vpop.f32.mrf.mxu0
        %v5579 = vadd.f32 %v5538, %v5578
        %v5580 = vpop.f32.mrf.mxu0
        %v5581 = vpop.f32.mrf.mxu0
        %5582 = vdwg.mxu0
        %5583 = vmatprep.subr.bf16.mxu0 %v3632
        %5584 = vmatpush1.bf16.msra.mxu0 %v3631
        %5585 = vmatprep.subr.bf16.mxu0 %v3628
        %5586 = vmatpush1.bf16.msra.mxu0 %v3627
        %5587 = vmatprep.subr.bf16.mxu0 %v3624
        %5588 = vmatpush1.bf16.msra.mxu0 %v3623
        %5589 = vmatprep.subr.bf16.mxu0 %v3620
        %5590 = vmatpush1.bf16.msra.mxu0 %v3619
        %5591 = vmatprep.subr.bf16.mxu0 %v3616
        %5592 = vmatpush1.bf16.msra.mxu0 %v3615
        %5593 = vmatprep.subr.bf16.mxu0 %v3612
        %5594 = vmatpush1.bf16.msra.mxu0 %v3611
        %5595 = vmatprep.subr.bf16.mxu0 %v3608
        %5596 = vmatpush1.bf16.msra.mxu0 %v3607
        %5597 = vmatprep.subr.bf16.mxu0 %v3604
        %5598 = vmatpush1.bf16.msra.mxu0 %v3603
        %5599 = vmatprep.subr.bf16.mxu0 %v3664
        %5600 = vmatpush2.bf16.msra.mxu0 %v3663
        %5601 = vmatprep.subr.bf16.mxu0 %v3660
        %5602 = vmatpush2.bf16.msra.mxu0 %v3659
        %5603 = vmatprep.subr.bf16.mxu0 %v3656
        %5604 = vmatpush2.bf16.msra.mxu0 %v3655
        %5605 = vmatprep.subr.bf16.mxu0 %v3652
        %5606 = vmatpush2.bf16.msra.mxu0 %v3651
        %5607 = vmatprep.subr.bf16.mxu0 %v3648
        %5608 = vmatpush2.bf16.msra.mxu0 %v3647
        %5609 = vmatprep.subr.bf16.mxu0 %v3644
        %5610 = vmatpush2.bf16.msra.mxu0 %v3643
        %5611 = vmatprep.subr.bf16.mxu0 %v3640
        %5612 = vmatpush2.bf16.msra.mxu0 %v3639
        %5613 = vmatprep.subr.bf16.mxu0 %v3636
        %5614 = vmatpush2.bf16.msra.mxu0 %v3635
        %5615 = vmatprep.mubr.bf16.mxu0 %v1126
        %5616 = vmatmul.mubr.bf16.gmra.mxu0 %v1125
        %v5617 = vpop.f32.mrf.mxu0
        %v5618 = vadd.f32 %v5577, %v5617
        %v5619 = vpop.f32.mrf.mxu0
        %v5620 = vadd.f32 %v5579, %v5619
        %v5621 = vpop.f32.mrf.mxu0
        %v5622 = vpop.f32.mrf.mxu0
        %5623 = vdwg.mxu0
        %5624 = vmatprep.subr.bf16.mxu0 %v3696
        %5625 = vmatpush1.bf16.msra.mxu0 %v3695
        %5626 = vmatprep.subr.bf16.mxu0 %v3692
        %5627 = vmatpush1.bf16.msra.mxu0 %v3691
        %5628 = vmatprep.subr.bf16.mxu0 %v3688
        %5629 = vmatpush1.bf16.msra.mxu0 %v3687
        %5630 = vmatprep.subr.bf16.mxu0 %v3684
        %5631 = vmatpush1.bf16.msra.mxu0 %v3683
        %5632 = vmatprep.subr.bf16.mxu0 %v3680
        %5633 = vmatpush1.bf16.msra.mxu0 %v3679
        %5634 = vmatprep.subr.bf16.mxu0 %v3676
        %5635 = vmatpush1.bf16.msra.mxu0 %v3675
        %5636 = vmatprep.subr.bf16.mxu0 %v3672
        %5637 = vmatpush1.bf16.msra.mxu0 %v3671
        %5638 = vmatprep.subr.bf16.mxu0 %v3668
        %5639 = vmatpush1.bf16.msra.mxu0 %v3667
        %5640 = vmatprep.subr.bf16.mxu0 %v3728
        %5641 = vmatpush2.bf16.msra.mxu0 %v3727
        %5642 = vmatprep.subr.bf16.mxu0 %v3724
        %5643 = vmatpush2.bf16.msra.mxu0 %v3723
        %5644 = vmatprep.subr.bf16.mxu0 %v3720
        %5645 = vmatpush2.bf16.msra.mxu0 %v3719
        %5646 = vmatprep.subr.bf16.mxu0 %v3716
        %5647 = vmatpush2.bf16.msra.mxu0 %v3715
        %5648 = vmatprep.subr.bf16.mxu0 %v3712
        %5649 = vmatpush2.bf16.msra.mxu0 %v3711
        %5650 = vmatprep.subr.bf16.mxu0 %v3708
        %5651 = vmatpush2.bf16.msra.mxu0 %v3707
        %5652 = vmatprep.subr.bf16.mxu0 %v3704
        %5653 = vmatpush2.bf16.msra.mxu0 %v3703
        %5654 = vmatprep.subr.bf16.mxu0 %v3700
        %5655 = vmatpush2.bf16.msra.mxu0 %v3699
        %5656 = vmatprep.mubr.bf16.mxu0 %v1128
        %5657 = vmatmul.mubr.bf16.gmra.mxu0 %v1127
        %v5658 = vpop.f32.mrf.mxu0
        %v5659 = vadd.f32 %v5618, %v5658
        %v5660 = vpop.f32.mrf.mxu0
        %v5661 = vadd.f32 %v5620, %v5660
        %v5662 = vpop.f32.mrf.mxu0
        %v5663 = vpop.f32.mrf.mxu0
        %5664 = vdwg.mxu0
        %5665 = vmatprep.subr.bf16.mxu0 %v3760
        %5666 = vmatpush1.bf16.msra.mxu0 %v3759
        %5667 = vmatprep.subr.bf16.mxu0 %v3756
        %5668 = vmatpush1.bf16.msra.mxu0 %v3755
        %5669 = vmatprep.subr.bf16.mxu0 %v3752
        %5670 = vmatpush1.bf16.msra.mxu0 %v3751
        %5671 = vmatprep.subr.bf16.mxu0 %v3748
        %5672 = vmatpush1.bf16.msra.mxu0 %v3747
        %5673 = vmatprep.subr.bf16.mxu0 %v3744
        %5674 = vmatpush1.bf16.msra.mxu0 %v3743
        %5675 = vmatprep.subr.bf16.mxu0 %v3740
        %5676 = vmatpush1.bf16.msra.mxu0 %v3739
        %5677 = vmatprep.subr.bf16.mxu0 %v3736
        %5678 = vmatpush1.bf16.msra.mxu0 %v3735
        %5679 = vmatprep.subr.bf16.mxu0 %v3732
        %5680 = vmatpush1.bf16.msra.mxu0 %v3731
        %5681 = vmatprep.subr.bf16.mxu0 %v3792
        %5682 = vmatpush2.bf16.msra.mxu0 %v3791
        %5683 = vmatprep.subr.bf16.mxu0 %v3788
        %5684 = vmatpush2.bf16.msra.mxu0 %v3787
        %5685 = vmatprep.subr.bf16.mxu0 %v3784
        %5686 = vmatpush2.bf16.msra.mxu0 %v3783
        %5687 = vmatprep.subr.bf16.mxu0 %v3780
        %5688 = vmatpush2.bf16.msra.mxu0 %v3779
        %5689 = vmatprep.subr.bf16.mxu0 %v3776
        %5690 = vmatpush2.bf16.msra.mxu0 %v3775
        %5691 = vmatprep.subr.bf16.mxu0 %v3772
        %5692 = vmatpush2.bf16.msra.mxu0 %v3771
        %5693 = vmatprep.subr.bf16.mxu0 %v3768
        %5694 = vmatpush2.bf16.msra.mxu0 %v3767
        %5695 = vmatprep.subr.bf16.mxu0 %v3764
        %5696 = vmatpush2.bf16.msra.mxu0 %v3763
        %5697 = vmatprep.mubr.bf16.mxu0 %v1130
        %5698 = vmatmul.mubr.bf16.gmra.mxu0 %v1129
        %v5699 = vpop.f32.mrf.mxu0
        %v5700 = vadd.f32 %v5659, %v5699
        %v5701 = vpop.f32.mrf.mxu0
        %v5702 = vadd.f32 %v5661, %v5701
        %v5703 = vpop.f32.mrf.mxu0
        %v5704 = vpop.f32.mrf.mxu0
        %5705 = vdwg.mxu0
        %5706 = vmatprep.subr.bf16.mxu0 %v3824
        %5707 = vmatpush1.bf16.msra.mxu0 %v3823
        %5708 = vmatprep.subr.bf16.mxu0 %v3820
        %5709 = vmatpush1.bf16.msra.mxu0 %v3819
        %5710 = vmatprep.subr.bf16.mxu0 %v3816
        %5711 = vmatpush1.bf16.msra.mxu0 %v3815
        %5712 = vmatprep.subr.bf16.mxu0 %v3812
        %5713 = vmatpush1.bf16.msra.mxu0 %v3811
        %5714 = vmatprep.subr.bf16.mxu0 %v3808
        %5715 = vmatpush1.bf16.msra.mxu0 %v3807
        %5716 = vmatprep.subr.bf16.mxu0 %v3804
        %5717 = vmatpush1.bf16.msra.mxu0 %v3803
        %5718 = vmatprep.subr.bf16.mxu0 %v3800
        %5719 = vmatpush1.bf16.msra.mxu0 %v3799
        %5720 = vmatprep.subr.bf16.mxu0 %v3796
        %5721 = vmatpush1.bf16.msra.mxu0 %v3795
        %5722 = vmatprep.subr.bf16.mxu0 %v3856
        %5723 = vmatpush2.bf16.msra.mxu0 %v3855
        %5724 = vmatprep.subr.bf16.mxu0 %v3852
        %5725 = vmatpush2.bf16.msra.mxu0 %v3851
        %5726 = vmatprep.subr.bf16.mxu0 %v3848
        %5727 = vmatpush2.bf16.msra.mxu0 %v3847
        %5728 = vmatprep.subr.bf16.mxu0 %v3844
        %5729 = vmatpush2.bf16.msra.mxu0 %v3843
        %5730 = vmatprep.subr.bf16.mxu0 %v3840
        %5731 = vmatpush2.bf16.msra.mxu0 %v3839
        %5732 = vmatprep.subr.bf16.mxu0 %v3836
        %5733 = vmatpush2.bf16.msra.mxu0 %v3835
        %5734 = vmatprep.subr.bf16.mxu0 %v3832
        %5735 = vmatpush2.bf16.msra.mxu0 %v3831
        %5736 = vmatprep.subr.bf16.mxu0 %v3828
        %5737 = vmatpush2.bf16.msra.mxu0 %v3827
        %5738 = vmatprep.mubr.bf16.mxu0 %v1132
        %5739 = vmatmul.mubr.bf16.gmra.mxu0 %v1131
        %v5740 = vpop.f32.mrf.mxu0
        %v5741 = vadd.f32 %v5700, %v5740
        %v5742 = vpop.f32.mrf.mxu0
        %v5743 = vadd.f32 %v5702, %v5742
        %v5744 = vpop.f32.mrf.mxu0
        %v5745 = vpop.f32.mrf.mxu0
        %5746 = vdwg.mxu0
        %5747 = vmatprep.subr.bf16.mxu0 %v3888
        %5748 = vmatpush1.bf16.msra.mxu0 %v3887
        %5749 = vmatprep.subr.bf16.mxu0 %v3884
        %5750 = vmatpush1.bf16.msra.mxu0 %v3883
        %5751 = vmatprep.subr.bf16.mxu0 %v3880
        %5752 = vmatpush1.bf16.msra.mxu0 %v3879
        %5753 = vmatprep.subr.bf16.mxu0 %v3876
        %5754 = vmatpush1.bf16.msra.mxu0 %v3875
        %5755 = vmatprep.subr.bf16.mxu0 %v3872
        %5756 = vmatpush1.bf16.msra.mxu0 %v3871
        %5757 = vmatprep.subr.bf16.mxu0 %v3868
        %5758 = vmatpush1.bf16.msra.mxu0 %v3867
        %5759 = vmatprep.subr.bf16.mxu0 %v3864
        %5760 = vmatpush1.bf16.msra.mxu0 %v3863
        %5761 = vmatprep.subr.bf16.mxu0 %v3860
        %5762 = vmatpush1.bf16.msra.mxu0 %v3859
        %5763 = vmatprep.subr.bf16.mxu0 %v3920
        %5764 = vmatpush2.bf16.msra.mxu0 %v3919
        %5765 = vmatprep.subr.bf16.mxu0 %v3916
        %5766 = vmatpush2.bf16.msra.mxu0 %v3915
        %5767 = vmatprep.subr.bf16.mxu0 %v3912
        %5768 = vmatpush2.bf16.msra.mxu0 %v3911
        %5769 = vmatprep.subr.bf16.mxu0 %v3908
        %5770 = vmatpush2.bf16.msra.mxu0 %v3907
        %5771 = vmatprep.subr.bf16.mxu0 %v3904
        %5772 = vmatpush2.bf16.msra.mxu0 %v3903
        %5773 = vmatprep.subr.bf16.mxu0 %v3900
        %5774 = vmatpush2.bf16.msra.mxu0 %v3899
        %5775 = vmatprep.subr.bf16.mxu0 %v3896
        %5776 = vmatpush2.bf16.msra.mxu0 %v3895
        %5777 = vmatprep.subr.bf16.mxu0 %v3892
        %5778 = vmatpush2.bf16.msra.mxu0 %v3891
        %5779 = vmatprep.mubr.bf16.mxu0 %v1134
        %5780 = vmatmul.mubr.bf16.gmra.mxu0 %v1133
        %v5781 = vpop.f32.mrf.mxu0
        %v5782 = vadd.f32 %v5741, %v5781
        %v5783 = vpop.f32.mrf.mxu0
        %v5784 = vadd.f32 %v5743, %v5783
        %v5785 = vpop.f32.mrf.mxu0
        %v5786 = vpop.f32.mrf.mxu0
        %5787 = vdwg.mxu0
        %5788 = vmatprep.subr.bf16.mxu0 %v3952
        %5789 = vmatpush1.bf16.msra.mxu0 %v3951
        %5790 = vmatprep.subr.bf16.mxu0 %v3948
        %5791 = vmatpush1.bf16.msra.mxu0 %v3947
        %5792 = vmatprep.subr.bf16.mxu0 %v3944
        %5793 = vmatpush1.bf16.msra.mxu0 %v3943
        %5794 = vmatprep.subr.bf16.mxu0 %v3940
        %5795 = vmatpush1.bf16.msra.mxu0 %v3939
        %5796 = vmatprep.subr.bf16.mxu0 %v3936
        %5797 = vmatpush1.bf16.msra.mxu0 %v3935
        %5798 = vmatprep.subr.bf16.mxu0 %v3932
        %5799 = vmatpush1.bf16.msra.mxu0 %v3931
        %5800 = vmatprep.subr.bf16.mxu0 %v3928
        %5801 = vmatpush1.bf16.msra.mxu0 %v3927
        %5802 = vmatprep.subr.bf16.mxu0 %v3924
        %5803 = vmatpush1.bf16.msra.mxu0 %v3923
        %5804 = vmatprep.subr.bf16.mxu0 %v3984
        %5805 = vmatpush2.bf16.msra.mxu0 %v3983
        %5806 = vmatprep.subr.bf16.mxu0 %v3980
        %5807 = vmatpush2.bf16.msra.mxu0 %v3979
        %5808 = vmatprep.subr.bf16.mxu0 %v3976
        %5809 = vmatpush2.bf16.msra.mxu0 %v3975
        %5810 = vmatprep.subr.bf16.mxu0 %v3972
        %5811 = vmatpush2.bf16.msra.mxu0 %v3971
        %5812 = vmatprep.subr.bf16.mxu0 %v3968
        %5813 = vmatpush2.bf16.msra.mxu0 %v3967
        %5814 = vmatprep.subr.bf16.mxu0 %v3964
        %5815 = vmatpush2.bf16.msra.mxu0 %v3963
        %5816 = vmatprep.subr.bf16.mxu0 %v3960
        %5817 = vmatpush2.bf16.msra.mxu0 %v3959
        %5818 = vmatprep.subr.bf16.mxu0 %v3956
        %5819 = vmatpush2.bf16.msra.mxu0 %v3955
        %5820 = vmatprep.mubr.bf16.mxu0 %v1136
        %5821 = vmatmul.mubr.bf16.gmra.mxu0 %v1135
        %v5822 = vpop.f32.mrf.mxu0
        %v5823 = vadd.f32 %v5782, %v5822
        %v5824 = vpop.f32.mrf.mxu0
        %v5825 = vadd.f32 %v5784, %v5824
        %v5826 = vpop.f32.mrf.mxu0
        %v5827 = vpop.f32.mrf.mxu0
        %5828 = vdwg.mxu0
        %5829 = vmatprep.subr.bf16.mxu0 %v4016
        %5830 = vmatpush1.bf16.msra.mxu0 %v4015
        %5831 = vmatprep.subr.bf16.mxu0 %v4012
        %5832 = vmatpush1.bf16.msra.mxu0 %v4011
        %5833 = vmatprep.subr.bf16.mxu0 %v4008
        %5834 = vmatpush1.bf16.msra.mxu0 %v4007
        %5835 = vmatprep.subr.bf16.mxu0 %v4004
        %5836 = vmatpush1.bf16.msra.mxu0 %v4003
        %5837 = vmatprep.subr.bf16.mxu0 %v4000
        %5838 = vmatpush1.bf16.msra.mxu0 %v3999
        %5839 = vmatprep.subr.bf16.mxu0 %v3996
        %5840 = vmatpush1.bf16.msra.mxu0 %v3995
        %5841 = vmatprep.subr.bf16.mxu0 %v3992
        %5842 = vmatpush1.bf16.msra.mxu0 %v3991
        %5843 = vmatprep.subr.bf16.mxu0 %v3988
        %5844 = vmatpush1.bf16.msra.mxu0 %v3987
        %5845 = vmatprep.subr.bf16.mxu0 %v4048
        %5846 = vmatpush2.bf16.msra.mxu0 %v4047
        %5847 = vmatprep.subr.bf16.mxu0 %v4044
        %5848 = vmatpush2.bf16.msra.mxu0 %v4043
        %5849 = vmatprep.subr.bf16.mxu0 %v4040
        %5850 = vmatpush2.bf16.msra.mxu0 %v4039
        %5851 = vmatprep.subr.bf16.mxu0 %v4036
        %5852 = vmatpush2.bf16.msra.mxu0 %v4035
        %5853 = vmatprep.subr.bf16.mxu0 %v4032
        %5854 = vmatpush2.bf16.msra.mxu0 %v4031
        %5855 = vmatprep.subr.bf16.mxu0 %v4028
        %5856 = vmatpush2.bf16.msra.mxu0 %v4027
        %5857 = vmatprep.subr.bf16.mxu0 %v4024
        %5858 = vmatpush2.bf16.msra.mxu0 %v4023
        %5859 = vmatprep.subr.bf16.mxu0 %v4020
        %5860 = vmatpush2.bf16.msra.mxu0 %v4019
        %5861 = vmatprep.mubr.bf16.mxu0 %v1138
        %5862 = vmatmul.mubr.bf16.gmra.mxu0 %v1137
        %v5863 = vpop.f32.mrf.mxu0
        %v5864 = vadd.f32 %v5823, %v5863
        %v5865 = vpop.f32.mrf.mxu0
        %v5866 = vadd.f32 %v5825, %v5865
        %v5867 = vpop.f32.mrf.mxu0
        %v5868 = vpop.f32.mrf.mxu0
        %5869 = vdwg.mxu0
        %5870 = vmatprep.subr.bf16.mxu0 %v4080
        %5871 = vmatpush1.bf16.msra.mxu0 %v4079
        %5872 = vmatprep.subr.bf16.mxu0 %v4076
        %5873 = vmatpush1.bf16.msra.mxu0 %v4075
        %5874 = vmatprep.subr.bf16.mxu0 %v4072
        %5875 = vmatpush1.bf16.msra.mxu0 %v4071
        %5876 = vmatprep.subr.bf16.mxu0 %v4068
        %5877 = vmatpush1.bf16.msra.mxu0 %v4067
        %5878 = vmatprep.subr.bf16.mxu0 %v4064
        %5879 = vmatpush1.bf16.msra.mxu0 %v4063
        %5880 = vmatprep.subr.bf16.mxu0 %v4060
        %5881 = vmatpush1.bf16.msra.mxu0 %v4059
        %5882 = vmatprep.subr.bf16.mxu0 %v4056
        %5883 = vmatpush1.bf16.msra.mxu0 %v4055
        %5884 = vmatprep.subr.bf16.mxu0 %v4052
        %5885 = vmatpush1.bf16.msra.mxu0 %v4051
        %5886 = vmatprep.subr.bf16.mxu0 %v4112
        %5887 = vmatpush2.bf16.msra.mxu0 %v4111
        %5888 = vmatprep.subr.bf16.mxu0 %v4108
        %5889 = vmatpush2.bf16.msra.mxu0 %v4107
        %5890 = vmatprep.subr.bf16.mxu0 %v4104
        %5891 = vmatpush2.bf16.msra.mxu0 %v4103
        %5892 = vmatprep.subr.bf16.mxu0 %v4100
        %5893 = vmatpush2.bf16.msra.mxu0 %v4099
        %5894 = vmatprep.subr.bf16.mxu0 %v4096
        %5895 = vmatpush2.bf16.msra.mxu0 %v4095
        %5896 = vmatprep.subr.bf16.mxu0 %v4092
        %5897 = vmatpush2.bf16.msra.mxu0 %v4091
        %5898 = vmatprep.subr.bf16.mxu0 %v4088
        %5899 = vmatpush2.bf16.msra.mxu0 %v4087
        %5900 = vmatprep.subr.bf16.mxu0 %v4084
        %5901 = vmatpush2.bf16.msra.mxu0 %v4083
        %5902 = vmatprep.mubr.bf16.mxu0 %v1140
        %5903 = vmatmul.mubr.bf16.gmra.mxu0 %v1139
        %v5904 = vpop.f32.mrf.mxu0
        %v5905 = vadd.f32 %v5864, %v5904
        %v5906 = vpop.f32.mrf.mxu0
        %v5907 = vadd.f32 %v5866, %v5906
        %v5908 = vpop.f32.mrf.mxu0
        %v5909 = vpop.f32.mrf.mxu0
        %5910 = vdwg.mxu0
        %5911 = vmatprep.subr.bf16.mxu0 %v4144
        %5912 = vmatpush1.bf16.msra.mxu0 %v4143
        %5913 = vmatprep.subr.bf16.mxu0 %v4140
        %5914 = vmatpush1.bf16.msra.mxu0 %v4139
        %5915 = vmatprep.subr.bf16.mxu0 %v4136
        %5916 = vmatpush1.bf16.msra.mxu0 %v4135
        %5917 = vmatprep.subr.bf16.mxu0 %v4132
        %5918 = vmatpush1.bf16.msra.mxu0 %v4131
        %5919 = vmatprep.subr.bf16.mxu0 %v4128
        %5920 = vmatpush1.bf16.msra.mxu0 %v4127
        %5921 = vmatprep.subr.bf16.mxu0 %v4124
        %5922 = vmatpush1.bf16.msra.mxu0 %v4123
        %5923 = vmatprep.subr.bf16.mxu0 %v4120
        %5924 = vmatpush1.bf16.msra.mxu0 %v4119
        %5925 = vmatprep.subr.bf16.mxu0 %v4116
        %5926 = vmatpush1.bf16.msra.mxu0 %v4115
        %5927 = vmatprep.subr.bf16.mxu0 %v4176
        %5928 = vmatpush2.bf16.msra.mxu0 %v4175
        %5929 = vmatprep.subr.bf16.mxu0 %v4172
        %5930 = vmatpush2.bf16.msra.mxu0 %v4171
        %5931 = vmatprep.subr.bf16.mxu0 %v4168
        %5932 = vmatpush2.bf16.msra.mxu0 %v4167
        %5933 = vmatprep.subr.bf16.mxu0 %v4164
        %5934 = vmatpush2.bf16.msra.mxu0 %v4163
        %5935 = vmatprep.subr.bf16.mxu0 %v4160
        %5936 = vmatpush2.bf16.msra.mxu0 %v4159
        %5937 = vmatprep.subr.bf16.mxu0 %v4156
        %5938 = vmatpush2.bf16.msra.mxu0 %v4155
        %5939 = vmatprep.subr.bf16.mxu0 %v4152
        %5940 = vmatpush2.bf16.msra.mxu0 %v4151
        %5941 = vmatprep.subr.bf16.mxu0 %v4148
        %5942 = vmatpush2.bf16.msra.mxu0 %v4147
        %5943 = vmatprep.mubr.bf16.mxu0 %v1142
        %5944 = vmatmul.mubr.bf16.gmra.mxu0 %v1141
        %v5945 = vpop.f32.mrf.mxu0
        %v5946 = vadd.f32 %v5905, %v5945
        %v5947 = vpop.f32.mrf.mxu0
        %v5948 = vadd.f32 %v5907, %v5947
        %v5949 = vpop.f32.mrf.mxu0
        %v5950 = vpop.f32.mrf.mxu0
        %5951 = vdwg.mxu0
        %5952 = vmatprep.subr.bf16.mxu0 %v4208
        %5953 = vmatpush1.bf16.msra.mxu0 %v4207
        %5954 = vmatprep.subr.bf16.mxu0 %v4204
        %5955 = vmatpush1.bf16.msra.mxu0 %v4203
        %5956 = vmatprep.subr.bf16.mxu0 %v4200
        %5957 = vmatpush1.bf16.msra.mxu0 %v4199
        %5958 = vmatprep.subr.bf16.mxu0 %v4196
        %5959 = vmatpush1.bf16.msra.mxu0 %v4195
        %5960 = vmatprep.subr.bf16.mxu0 %v4192
        %5961 = vmatpush1.bf16.msra.mxu0 %v4191
        %5962 = vmatprep.subr.bf16.mxu0 %v4188
        %5963 = vmatpush1.bf16.msra.mxu0 %v4187
        %5964 = vmatprep.subr.bf16.mxu0 %v4184
        %5965 = vmatpush1.bf16.msra.mxu0 %v4183
        %5966 = vmatprep.subr.bf16.mxu0 %v4180
        %5967 = vmatpush1.bf16.msra.mxu0 %v4179
        %5968 = vmatprep.subr.bf16.mxu0 %v4240
        %5969 = vmatpush2.bf16.msra.mxu0 %v4239
        %5970 = vmatprep.subr.bf16.mxu0 %v4236
        %5971 = vmatpush2.bf16.msra.mxu0 %v4235
        %5972 = vmatprep.subr.bf16.mxu0 %v4232
        %5973 = vmatpush2.bf16.msra.mxu0 %v4231
        %5974 = vmatprep.subr.bf16.mxu0 %v4228
        %5975 = vmatpush2.bf16.msra.mxu0 %v4227
        %5976 = vmatprep.subr.bf16.mxu0 %v4224
        %5977 = vmatpush2.bf16.msra.mxu0 %v4223
        %5978 = vmatprep.subr.bf16.mxu0 %v4220
        %5979 = vmatpush2.bf16.msra.mxu0 %v4219
        %5980 = vmatprep.subr.bf16.mxu0 %v4216
        %5981 = vmatpush2.bf16.msra.mxu0 %v4215
        %5982 = vmatprep.subr.bf16.mxu0 %v4212
        %5983 = vmatpush2.bf16.msra.mxu0 %v4211
        %5984 = vmatprep.mubr.bf16.mxu0 %v1144
        %5985 = vmatmul.mubr.bf16.gmra.mxu0 %v1143
        %v5986 = vpop.f32.mrf.mxu0
        %v5987 = vadd.f32 %v5946, %v5986
        %v5988 = vpop.f32.mrf.mxu0
        %v5989 = vadd.f32 %v5948, %v5988
        %v5990 = vpop.f32.mrf.mxu0
        %v5991 = vpop.f32.mrf.mxu0
        %5992 = vdwg.mxu0
        %v5993 = vadd.f32 %v301, %v5495
        %v5994 = vadd.f32 %v302, %v5497
        %v5995 = vadd.f32 %v303, %v5987
        %v5996 = vadd.f32 %v304, %v5989
        %5997 = vst [vmem:[#allocation2] sm:$0xff] %v5993
        %5998 = vst [vmem:[#allocation2 + $0x8] sm:$0xff] %v5994
        %5999 = vst [vmem:[#allocation2 + $0x10] sm:$0xff] %v5995
        %6000 = vst [vmem:[#allocation2 + $0x18] sm:$0xff] %v5996
        %p6001 = scmp.eq.s32.totalorder %s28, 1
        // Predicated region
        $region57: #{tpu_custom_call.1} parent=35 // pred_check
          %p6002 = pneg %p6001
        $region58: #{tpu_custom_call.1} parent=35 // pred_check_branch
          %6004 = sbr.rel (%p6002) target = $region60
        $region59: #{tpu_custom_call.1} parent=35 // pred_region
          %v6005 = vld [vmem:[#allocation2] sm:$0xff]
          %v6006 = vld [vmem:[#allocation2 + $0x8] sm:$0xff]
          %v6007 = vld [vmem:[#allocation2 + $0x10] sm:$0xff]
          %v6008 = vld [vmem:[#allocation2 + $0x18] sm:$0xff]
          %v6009 = vld [vmem:[#allocation8] sm:$0xff]
          %v6010 = vld [vmem:[#allocation8 + $0x8] sm:$0xff]
          %v6011 = vld [vmem:[#allocation8 + $0x10] sm:$0xff]
          %v6012 = vld [vmem:[#allocation8 + $0x18] sm:$0xff]
          %v6013 = vld [vmem:[#allocation8 + $0x20] sm:$0xff]
          %v6014 = vld [vmem:[#allocation8 + $0x28] sm:$0xff]
          %v6015 = vld [vmem:[#allocation8 + $0x30] sm:$0xff]
          %v6016 = vld [vmem:[#allocation8 + $0x38] sm:$0xff]
          %v6017 = vld [vmem:[#allocation8 + $0x40] sm:$0xff]
          %v6018 = vld [vmem:[#allocation8 + $0x48] sm:$0xff]
          %v6019 = vld [vmem:[#allocation8 + $0x50] sm:$0xff]
          %v6020 = vld [vmem:[#allocation8 + $0x58] sm:$0xff]
          %v6021 = vld [vmem:[#allocation8 + $0x60] sm:$0xff]
          %v6022 = vld [vmem:[#allocation8 + $0x68] sm:$0xff]
          %v6023 = vld [vmem:[#allocation8 + $0x70] sm:$0xff]
          %v6024 = vld [vmem:[#allocation8 + $0x78] sm:$0xff]
          %v6025 = vld [vmem:[#allocation8 + $0x80] sm:$0xff]
          %v6026 = vld [vmem:[#allocation8 + $0x88] sm:$0xff]
          %v6027 = vld [vmem:[#allocation8 + $0x90] sm:$0xff]
          %v6028 = vld [vmem:[#allocation8 + $0x98] sm:$0xff]
          %v6029 = vld [vmem:[#allocation8 + $0xa0] sm:$0xff]
          %v6030 = vld [vmem:[#allocation8 + $0xa8] sm:$0xff]
          %v6031 = vld [vmem:[#allocation8 + $0xb0] sm:$0xff]
          %v6032 = vld [vmem:[#allocation8 + $0xb8] sm:$0xff]
          %v6033 = vld [vmem:[#allocation8 + $0xc0] sm:$0xff]
          %v6034 = vld [vmem:[#allocation8 + $0xc8] sm:$0xff]
          %v6035 = vld [vmem:[#allocation8 + $0xd0] sm:$0xff]
          %v6036 = vld [vmem:[#allocation8 + $0xd8] sm:$0xff]
          %v6037 = vld [vmem:[#allocation8 + $0xe0] sm:$0xff]
          %v6038 = vld [vmem:[#allocation8 + $0xe8] sm:$0xff]
          %v6039 = vld [vmem:[#allocation8 + $0xf0] sm:$0xff]
          %v6040 = vld [vmem:[#allocation8 + $0xf8] sm:$0xff]
          %v6041 = vld [vmem:[#allocation8 + $0x100] sm:$0xff]
          %v6042 = vld [vmem:[#allocation8 + $0x108] sm:$0xff]
          %v6043 = vld [vmem:[#allocation8 + $0x110] sm:$0xff]
          %v6044 = vld [vmem:[#allocation8 + $0x118] sm:$0xff]
          %v6045 = vld [vmem:[#allocation8 + $0x120] sm:$0xff]
          %v6046 = vld [vmem:[#allocation8 + $0x128] sm:$0xff]
          %v6047 = vld [vmem:[#allocation8 + $0x130] sm:$0xff]
          %v6048 = vld [vmem:[#allocation8 + $0x138] sm:$0xff]
          %v6049 = vld [vmem:[#allocation8 + $0x140] sm:$0xff]
          %v6050 = vld [vmem:[#allocation8 + $0x148] sm:$0xff]
          %v6051 = vld [vmem:[#allocation8 + $0x150] sm:$0xff]
          %v6052 = vld [vmem:[#allocation8 + $0x158] sm:$0xff]
          %v6053 = vld [vmem:[#allocation8 + $0x160] sm:$0xff]
          %v6054 = vld [vmem:[#allocation8 + $0x168] sm:$0xff]
          %v6055 = vld [vmem:[#allocation8 + $0x170] sm:$0xff]
          %v6056 = vld [vmem:[#allocation8 + $0x178] sm:$0xff]
          %v6057 = vld [vmem:[#allocation8 + $0x180] sm:$0xff]
          %v6058 = vld [vmem:[#allocation8 + $0x188] sm:$0xff]
          %v6059 = vld [vmem:[#allocation8 + $0x190] sm:$0xff]
          %v6060 = vld [vmem:[#allocation8 + $0x198] sm:$0xff]
          %v6061 = vld [vmem:[#allocation8 + $0x1a0] sm:$0xff]
          %v6062 = vld [vmem:[#allocation8 + $0x1a8] sm:$0xff]
          %v6063 = vld [vmem:[#allocation8 + $0x1b0] sm:$0xff]
          %v6064 = vld [vmem:[#allocation8 + $0x1b8] sm:$0xff]
          %v6065 = vld [vmem:[#allocation8 + $0x1c0] sm:$0xff]
          %v6066 = vld [vmem:[#allocation8 + $0x1c8] sm:$0xff]
          %v6067 = vld [vmem:[#allocation8 + $0x1d0] sm:$0xff]
          %v6068 = vld [vmem:[#allocation8 + $0x1d8] sm:$0xff]
          %v6069 = vld [vmem:[#allocation8 + $0x1e0] sm:$0xff]
          %v6070 = vld [vmem:[#allocation8 + $0x1e8] sm:$0xff]
          %v6071 = vld [vmem:[#allocation8 + $0x1f0] sm:$0xff]
          %v6072 = vld [vmem:[#allocation8 + $0x1f8] sm:$0xff]
          %v6073 = vld [vmem:[#allocation9] sm:$0x1]
          %v6075 = vlaneseq
          %v6076 = vshrl.u32 %v6075, 7
          %v6077 = vsub.s32 0, %v6076
          %v6078 = vrot.slane %v6073, %v6077
          %6080 = vmatprep.subr.mxu0 0.0
          %6081 = vmatpush1.msra.mxu0 %v6024
          %6082 = vmatprep.subr.mxu0 0.0
          %6083 = vmatpush1.msra.mxu0 %v6023
          %6084 = vmatprep.subr.mxu0 0.0
          %6085 = vmatpush1.msra.mxu0 %v6022
          %6086 = vmatprep.subr.mxu0 0.0
          %6087 = vmatpush1.msra.mxu0 %v6021
          %6088 = vmatprep.subr.mxu0 0.0
          %6089 = vmatpush1.msra.mxu0 %v6020
          %6090 = vmatprep.subr.mxu0 0.0
          %6091 = vmatpush1.msra.mxu0 %v6019
          %6092 = vmatprep.subr.mxu0 0.0
          %6093 = vmatpush1.msra.mxu0 %v6018
          %6094 = vmatprep.subr.mxu0 0.0
          %6095 = vmatpush1.msra.mxu0 %v6017
          %6096 = vmatprep.subr.mxu0 0.0
          %6097 = vmatpush1.msra.mxu0 %v6016
          %6098 = vmatprep.subr.mxu0 0.0
          %6099 = vmatpush1.msra.mxu0 %v6015
          %6100 = vmatprep.subr.mxu0 0.0
          %6101 = vmatpush1.msra.mxu0 %v6014
          %6102 = vmatprep.subr.mxu0 0.0
          %6103 = vmatpush1.msra.mxu0 %v6013
          %6104 = vmatprep.subr.mxu0 0.0
          %6105 = vmatpush1.msra.mxu0 %v6012
          %6106 = vmatprep.subr.mxu0 0.0
          %6107 = vmatpush1.msra.mxu0 %v6011
          %6108 = vmatprep.subr.mxu0 0.0
          %6109 = vmatpush1.msra.mxu0 %v6010
          %6110 = vmatprep.subr.mxu0 0.0
          %6111 = vmatpush1.msra.mxu0 %v6009
          %6112 = vmatprep.subr.mxu0 0.0
          %6113 = vmatpush2.msra.mxu0 %v6040
          %6114 = vmatprep.subr.mxu0 0.0
          %6115 = vmatpush2.msra.mxu0 %v6039
          %6116 = vmatprep.subr.mxu0 0.0
          %6117 = vmatpush2.msra.mxu0 %v6038
          %6118 = vmatprep.subr.mxu0 0.0
          %6119 = vmatpush2.msra.mxu0 %v6037
          %6120 = vmatprep.subr.mxu0 0.0
          %6121 = vmatpush2.msra.mxu0 %v6036
          %6122 = vmatprep.subr.mxu0 0.0
          %6123 = vmatpush2.msra.mxu0 %v6035
          %6124 = vmatprep.subr.mxu0 0.0
          %6125 = vmatpush2.msra.mxu0 %v6034
          %6126 = vmatprep.subr.mxu0 0.0
          %6127 = vmatpush2.msra.mxu0 %v6033
          %6128 = vmatprep.subr.mxu0 0.0
          %6129 = vmatpush2.msra.mxu0 %v6032
          %6130 = vmatprep.subr.mxu0 0.0
          %6131 = vmatpush2.msra.mxu0 %v6031
          %6132 = vmatprep.subr.mxu0 0.0
          %6133 = vmatpush2.msra.mxu0 %v6030
          %6134 = vmatprep.subr.mxu0 0.0
          %6135 = vmatpush2.msra.mxu0 %v6029
          %6136 = vmatprep.subr.mxu0 0.0
          %6137 = vmatpush2.msra.mxu0 %v6028
          %6138 = vmatprep.subr.mxu0 0.0
          %6139 = vmatpush2.msra.mxu0 %v6027
          %6140 = vmatprep.subr.mxu0 0.0
          %6141 = vmatpush2.msra.mxu0 %v6026
          %6142 = vmatprep.subr.mxu0 0.0
          %6143 = vmatpush2.msra.mxu0 %v6025
          %6144 = vmatprep.mubr.f32.mxu0 %v6006
          %6145 = vmatmul.mubr.f32.gmra.mxu0 %v6005
          %v6146 = vpop.f32.mrf.mxu0
          %v6147 = vadd.f32 %v6078, %v6146
          %v6148 = vpop.f32.mrf.mxu0
          %6149 = vdwg.mxu0
          %6150 = vmatprep.subr.mxu0 0.0
          %6151 = vmatpush1.msra.mxu0 %v6056
          %6152 = vmatprep.subr.mxu0 0.0
          %6153 = vmatpush1.msra.mxu0 %v6055
          %6154 = vmatprep.subr.mxu0 0.0
          %6155 = vmatpush1.msra.mxu0 %v6054
          %6156 = vmatprep.subr.mxu0 0.0
          %6157 = vmatpush1.msra.mxu0 %v6053
          %6158 = vmatprep.subr.mxu0 0.0
          %6159 = vmatpush1.msra.mxu0 %v6052
          %6160 = vmatprep.subr.mxu0 0.0
          %6161 = vmatpush1.msra.mxu0 %v6051
          %6162 = vmatprep.subr.mxu0 0.0
          %6163 = vmatpush1.msra.mxu0 %v6050
          %6164 = vmatprep.subr.mxu0 0.0
          %6165 = vmatpush1.msra.mxu0 %v6049
          %6166 = vmatprep.subr.mxu0 0.0
          %6167 = vmatpush1.msra.mxu0 %v6048
          %6168 = vmatprep.subr.mxu0 0.0
          %6169 = vmatpush1.msra.mxu0 %v6047
          %6170 = vmatprep.subr.mxu0 0.0
          %6171 = vmatpush1.msra.mxu0 %v6046
          %6172 = vmatprep.subr.mxu0 0.0
          %6173 = vmatpush1.msra.mxu0 %v6045
          %6174 = vmatprep.subr.mxu0 0.0
          %6175 = vmatpush1.msra.mxu0 %v6044
          %6176 = vmatprep.subr.mxu0 0.0
          %6177 = vmatpush1.msra.mxu0 %v6043
          %6178 = vmatprep.subr.mxu0 0.0
          %6179 = vmatpush1.msra.mxu0 %v6042
          %6180 = vmatprep.subr.mxu0 0.0
          %6181 = vmatpush1.msra.mxu0 %v6041
          %6182 = vmatprep.subr.mxu0 0.0
          %6183 = vmatpush2.msra.mxu0 %v6072
          %6184 = vmatprep.subr.mxu0 0.0
          %6185 = vmatpush2.msra.mxu0 %v6071
          %6186 = vmatprep.subr.mxu0 0.0
          %6187 = vmatpush2.msra.mxu0 %v6070
          %6188 = vmatprep.subr.mxu0 0.0
          %6189 = vmatpush2.msra.mxu0 %v6069
          %6190 = vmatprep.subr.mxu0 0.0
          %6191 = vmatpush2.msra.mxu0 %v6068
          %6192 = vmatprep.subr.mxu0 0.0
          %6193 = vmatpush2.msra.mxu0 %v6067
          %6194 = vmatprep.subr.mxu0 0.0
          %6195 = vmatpush2.msra.mxu0 %v6066
          %6196 = vmatprep.subr.mxu0 0.0
          %6197 = vmatpush2.msra.mxu0 %v6065
          %6198 = vmatprep.subr.mxu0 0.0
          %6199 = vmatpush2.msra.mxu0 %v6064
          %6200 = vmatprep.subr.mxu0 0.0
          %6201 = vmatpush2.msra.mxu0 %v6063
          %6202 = vmatprep.subr.mxu0 0.0
          %6203 = vmatpush2.msra.mxu0 %v6062
          %6204 = vmatprep.subr.mxu0 0.0
          %6205 = vmatpush2.msra.mxu0 %v6061
          %6206 = vmatprep.subr.mxu0 0.0
          %6207 = vmatpush2.msra.mxu0 %v6060
          %6208 = vmatprep.subr.mxu0 0.0
          %6209 = vmatpush2.msra.mxu0 %v6059
          %6210 = vmatprep.subr.mxu0 0.0
          %6211 = vmatpush2.msra.mxu0 %v6058
          %6212 = vmatprep.subr.mxu0 0.0
          %6213 = vmatpush2.msra.mxu0 %v6057
          %6214 = vmatprep.mubr.f32.mxu0 %v6008
          %6215 = vmatmul.mubr.f32.gmra.mxu0 %v6007
          %v6216 = vpop.f32.mrf.mxu0
          %v6217 = vadd.f32 %v6147, %v6216
          %v6218 = vpop.f32.mrf.mxu0
          %6219 = vdwg.mxu0
          %6220 = vst [vmem:[#allocation11] sm:$0xff] %v6217
        $region60: #{tpu_custom_call.1} parent=35 // pred_fallthru
          _
        // Predicated region
        $region61: #{tpu_custom_call.1} parent=35 // pred_check
          %p6221 = pneg %p149
        $region62: #{tpu_custom_call.1} parent=35 // pred_check_branch
          %6223 = sbr.rel (%p6221) target = $region64
        $region63: #{tpu_custom_call.1} parent=35 // pred_region
          %s6225 = ssub.s32 128, 128
          %6226 = vsyncadd [#allocation5], %s6225
          %s6227 = smul.addr %s27, 128
          %s6228 = scalar_lea.hbm %s4, %s6227
          %s6230 = sshll.u32 [#allocation11], 4
          %s6231 = int_to_ptr.vmem [resolvable:$true] %s6230
          %6233 = dma.vmem_to_hbm [thread:$0]  %s6231, 128, %s6228, [#allocation5]
        $region64: #{tpu_custom_call.1} parent=35 // pred_fallthru
          _
        // Predicated region
        $region65: #{tpu_custom_call.1} parent=35 // pred_check
          %p6234 = pneg %p149
        $region66: #{tpu_custom_call.1} parent=35 // pred_check_branch
          %6236 = sbr.rel (%p6234) target = $region68
        $region67: #{tpu_custom_call.1} parent=35 // pred_region
          %6237 = dma.done [#allocation5], 128
        $region68: #{tpu_custom_call.1} parent=35 // pred_fallthru
          _
      $region36: #{tpu_custom_call.1} parent=5 // pred_fallthru
        _
      %p6238 = scmp.le.s32.totalorder 2, %s18
      // Predicated region
      $region69: #{tpu_custom_call.1} parent=5 // pred_check
        %p6239 = pneg %p6238
      $region70: #{tpu_custom_call.1} parent=5 // pred_check_branch
        %6241 = sbr.rel (%p6239) target = $region72
      $region71: #{tpu_custom_call.1} parent=5 // pred_region
        %s6242 = ssub.s32 %s18, 2
      $region72: #{tpu_custom_call.1} parent=5 // pred_fallthru
        _
    $region6: #{tpu_custom_call.1} parent=1 // loop_footer
      %s22 = sadd.s32 1, %s18
    $region7: #{tpu_custom_call.1} parent=1 // loop_footer_branch
      %17 = sbr.rel target = $region3
    $region8: #{tpu_custom_call.1} parent=1 // loop_exit
      _
    %6243 = vsyncpa [#allocation4], 1
    %s6244 = scalar_lea.sflag [#allocation4], 1
    %6245 = vsyncpa %s6244, 1
    %6246 = vsyncpa [#allocation7], 1
    %s6247 = scalar_lea.sflag [#allocation7], 1
    %6248 = vsyncpa %s6247, 1
    %6249 = vsyncpa [#allocation10], 1
    %6250 = vsyncpa [#allocation5], 1
    %s6251 = scalar_lea.sflag [#allocation5], 1
    %6252 = vsyncpa %s6251, 1

</llo_original>
